<compile_context>
chip_gen: v7x
topology: tpu7x:2x2x1
jax: 0.10.0
libtpu: 0.0.40
codegen_flags: <defaults>
</compile_context>

<pallas_src>
import functools
import numpy as np
import jax
import jax.numpy as jnp
from jax.experimental import pallas as pl
from jax.experimental.pallas import tpu as pltpu


def _round_up(n, m):
    return ((n + m - 1) // m) * m


# ----------------------------- Pallas kernel A (ASPP) -------------------------

def _aspp_kernel(w_ref, b_ref, cols_ref, out_ref):
    """Fused SimpleASPP (branch convs + 1x1 projection folded offline).

    w_ref:    [4, KP]       folded weights, bf16
    b_ref:    [4, 1]        1x1 conv bias, f32
    cols_ref: [KP, BLKN]    im2col patches (voxels on lanes), bf16
    out_ref:  [m, 4, CK]    bf16, chunked channel-major layout consumed by kernel B
    """
    m, _, ck = out_ref.shape
    for mi in range(m):                                           # static unroll
        z = jnp.dot(w_ref[...], cols_ref[:, mi * ck:(mi + 1) * ck],
                    preferred_element_type=jnp.float32) + b_ref[...]
        out_ref[mi] = jnp.where(z >= 0.0, z, 0.01 * z).astype(out_ref.dtype)


# ------------------- Pallas kernel B (grid_sample + FOV blend) ----------------

def _grid_sample_blend_kernel(kmin_ref, kmax_ref, grid_ref, feat_ref, emb_ref,
                              out_ref, *, D2, H2, W2):
    """Trilinear grid_sample (align_corners=True, zero padding) fused with the
    out-of-FOV embedding blend:  out = emb*(1-in_fov) + in_fov*sampled.

    kmin_ref/kmax_ref: [B, nblk] i32 SMEM — per-block touched chunk range (prefetched)
    grid_ref:          [3, BLK]   f32  — normalized (x, y, z) sample coordinates
    feat_ref:          [nk, C, CK] bf16 — chunked channel-major ASPP features
    emb_ref:           [C, 1]     f32  — out_fov_embedding weight
    out_ref:           [C, BLK]   f32
    """
    nk, C, CK = feat_ref.shape
    BLK = out_ref.shape[1]
    b = pl.program_id(0)
    j = pl.program_id(1)

    g = grid_ref[...]                                            # [3, BLK]
    # Unnormalize (align_corners=True): ix = (g + 1) * (n - 1) / 2
    ix = (g[0:1, :] + 1.0) * ((W2 - 1) * 0.5)
    iy = (g[1:2, :] + 1.0) * ((H2 - 1) * 0.5)
    iz = (g[2:3, :] + 1.0) * ((D2 - 1) * 0.5)
    x0 = jnp.floor(ix); y0 = jnp.floor(iy); z0 = jnp.floor(iz)
    fx = ix - x0; fy = iy - y0; fz = iz - z0
    x0i = x0.astype(jnp.int32)
    y0i = y0.astype(jnp.int32)
    z0i = z0.astype(jnp.int32)

    flats, wgts = [], []
    for dz in (0, 1):
        for dy in (0, 1):
            for dx in (0, 1):
                cx = x0i + dx
                cy = y0i + dy
                cz = z0i + dz
                w = ((fx if dx else 1.0 - fx)
                     * (fy if dy else 1.0 - fy)
                     * (fz if dz else 1.0 - fz))                          # [1, BLK]
                inb = ((cx >= 0) & (cx < W2) & (cy >= 0) & (cy < H2)
                       & (cz >= 0) & (cz < D2))                           # [1, BLK]
                flats.append(cz * (H2 * W2) + cy * W2 + cx)               # [1, BLK]
                # Mask applied to the WEIGHT: out-of-bounds corners contribute zero
                # even if their flat index aliases a valid voxel.
                wgts.append(jnp.where(inb, w, 0.0))
    flat_all = jnp.concatenate(flats, axis=0)                             # [8, BLK] i32
    wgt_all = jnp.concatenate(wgts, axis=0)                               # [8, BLK] f32
    in_fov = jnp.sum(wgt_all, axis=0, keepdims=True)                      # [1, BLK]

    # Loop-invariant row iota (hoisted out of the chunk loop on purpose).
    row = jax.lax.broadcasted_iota(jnp.int32, (CK, BLK), 0)

    kmin = kmin_ref[b, j]                                                 # SMEM scalars
    kmax = kmax_ref[b, j]

    def chunk_body(kk, acc):
        base = kk * CK
        # Merge all 8 weighted corner one-hots into a single [CK, BLK] matrix (f32),
        # then cast once to bf16 and issue one MXU contraction per chunk.
        oh = jnp.where(row == (flat_all[0:1, :] - base), wgt_all[0:1, :], 0.0)
        for c in range(1, 8):
            oh = oh + jnp.where(row == (flat_all[c:c + 1, :] - base),
                                wgt_all[c:c + 1, :], 0.0)
        return acc + jnp.dot(feat_ref[kk], oh.astype(jnp.bfloat16),
                             preferred_element_type=jnp.float32)          # [C, BLK]

    sampled = jax.lax.fori_loop(kmin, kmax + 1, chunk_body,
                                jnp.zeros((C, BLK), jnp.float32))
    out_ref[...] = emb_ref[...] * (1.0 - in_fov) + in_fov * sampled


# ----------------------------- wrappers (glue) --------------------------------

def aspp_forward(x, params, *, blkn=2048, ck=128):
    """SimpleASPP(3, in_channels=2, conv_out_channels=1) on x: [B, 2, D, H, W].
    Returns chunked channel-major output [B, nk, 4, ck] (bf16)."""
    B, C, D, H, W = x.shape
    N = D * H * W

    # --- im2col glue (XLA, bf16): K rows are (branch, tap, channel); voxels on lanes.
    # TODO(synk): generate the dilated taps in-kernel for production volumes.
    rows = [x.reshape(B, C, N)]                                       # k=1 branch
    for d in (2, 4, 6):
        xp = jnp.pad(x, ((0, 0), (0, 0), (d, d), (d, d), (d, d)))
        taps = []
        for kd in range(3):
            for kh in range(3):
                for kw in range(3):
                    taps.append(xp[:, :, kd * d:kd * d + D,
                                   kh * d:kh * d + H,
                                   kw * d:kw * d + W].reshape(B, C, N))
        rows.append(jnp.stack(taps, axis=1).reshape(B, 27 * C, N))    # tap-major, chan-minor
    cols = jnp.concatenate(rows, axis=1)                              # [B, K, N]
    K = cols.shape[1]
    KP = _round_up(K, 16)                                             # bf16 sublane packing

    blkn = _round_up(min(blkn, _round_up(N, ck)), ck)
    N_pad = _round_up(N, blkn)
    nblk = N_pad // blkn
    m = blkn // ck
    nk = N_pad // ck
    cols = jnp.pad(cols, ((0, 0), (0, KP - K), (0, N_pad - N))).astype(jnp.bfloat16)

    # --- fold branch convs + 1x1x1 projection into one [4, KP] matrix (host) ---
    wb = np.zeros((KP, 4), np.float32)
    off = 0
    w0 = np.asarray(params["aspp_w0"])                                # [1, C, 1, 1, 1]
    wb[off:off + C, 0] = w0[0, :, 0, 0, 0]
    off += C
    for bi in range(3):
        w = np.asarray(params[f"aspp_w{bi + 1}"])                     # [1, C, 3, 3, 3]
        wb[off:off + 27 * C, bi + 1] = w[0].transpose(1, 2, 3, 0).reshape(-1)
        off += 27 * C
    k1w = np.asarray(params["aspp_k1_w"])[:, :, 0, 0, 0]              # [4 out, 4 in]
    wmat = jnp.asarray((wb @ k1w.T).T, jnp.bfloat16)                  # [4, KP]
    bias = jnp.asarray(params["aspp_k1_b"], jnp.float32).reshape(4, 1)

    out = pl.pallas_call(
        _aspp_kernel,
        out_shape=jax.ShapeDtypeStruct((B, nk, 4, ck), jnp.bfloat16),
        grid_spec=pltpu.PrefetchScalarGridSpec(
            num_scalar_prefetch=0,
            grid=(B, nblk),
            in_specs=[
                pl.BlockSpec((4, KP), lambda b, i: (0, 0)),
                pl.BlockSpec((4, 1), lambda b, i: (0, 0)),
                pl.BlockSpec((None, KP, blkn), lambda b, i: (b, 0, i)),
            ],
            out_specs=pl.BlockSpec((None, m, 4, ck), lambda b, i: (b, i, 0, 0)),
        ),
        compiler_params=pltpu.CompilerParams(
            dimension_semantics=("parallel", "parallel")),
    )(wmat, bias, cols)
    return out                                                        # [B, nk, 4, ck] bf16


def _chunk_bbox(grid_cm, dims_in, blk, ck, nk):
    """Per output block, conservative [kmin, kmax] range of feature chunks touched by
    any in-bounds trilinear corner (clamped corner coords -> monotone flat bounds)."""
    D2, H2, W2 = dims_in
    B, _, N = grid_cm.shape
    nblk = N // blk
    ix = (grid_cm[:, 0, :] + 1.0) * ((W2 - 1) * 0.5)
    iy = (grid_cm[:, 1, :] + 1.0) * ((H2 - 1) * 0.5)
    iz = (grid_cm[:, 2, :] + 1.0) * ((D2 - 1) * 0.5)
    x0 = jnp.floor(ix).astype(jnp.int32)
    y0 = jnp.floor(iy).astype(jnp.int32)
    z0 = jnp.floor(iz).astype(jnp.int32)
    fmin = (jnp.clip(z0, 0, D2 - 1) * (H2 * W2)
            + jnp.clip(y0, 0, H2 - 1) * W2
            + jnp.clip(x0, 0, W2 - 1))
    fmax = (jnp.clip(z0 + 1, 0, D2 - 1) * (H2 * W2)
            + jnp.clip(y0 + 1, 0, H2 - 1) * W2
            + jnp.clip(x0 + 1, 0, W2 - 1))
    kmin = jnp.min(fmin.reshape(B, nblk, blk), axis=-1) // ck
    kmax = jnp.max(fmax.reshape(B, nblk, blk), axis=-1) // ck
    kmax = jnp.minimum(kmax, nk - 1)
    return kmin.astype(jnp.int32), kmax.astype(jnp.int32)


def grid_sample_blend(feat_chunks, grid_cm, emb, dims_in, *, blk=256):
    """feat_chunks: [B, nk, C, ck] bf16; grid_cm: [B, 3, N_out] f32; emb: [C, 1] f32.
    Returns [B, C, N_out] f32."""
    B, nk, C, ck = feat_chunks.shape
    N_out = grid_cm.shape[2]
    D2, H2, W2 = dims_in

    blk = min(blk, _round_up(N_out, 128))
    N_out_pad = _round_up(N_out, blk)
    nblk = N_out_pad // blk
    grid_cm = jnp.pad(grid_cm.astype(jnp.float32),
                      ((0, 0), (0, 0), (0, N_out_pad - N_out)))

    kmin, kmax = _chunk_bbox(grid_cm, dims_in, blk, ck, nk)          # [B, nblk] i32

    kern = functools.partial(_grid_sample_blend_kernel, D2=D2, H2=H2, W2=W2)
    out = pl.pallas_call(
        kern,
        out_shape=jax.ShapeDtypeStruct((B, C, N_out_pad), jnp.float32),
        grid_spec=pltpu.PrefetchScalarGridSpec(
            num_scalar_prefetch=2,                                   # kmin, kmax in SMEM
            grid=(B, nblk),
            in_specs=[
                pl.BlockSpec((None, 3, blk), lambda b, j, kmin, kmax: (b, 0, j)),
                pl.BlockSpec((None, nk, C, ck), lambda b, j, kmin, kmax: (b, 0, 0, 0)),
                pl.BlockSpec((C, 1), lambda b, j, kmin, kmax: (0, 0)),
            ],
            out_specs=pl.BlockSpec((None, C, blk), lambda b, j, kmin, kmax: (b, 0, j)),
        ),
        compiler_params=pltpu.CompilerParams(
            dimension_semantics=("parallel", "parallel")),
    )(kmin, kmax, grid_cm, feat_chunks, emb.astype(jnp.float32))
    return out[:, :, :N_out]


# ------------------------- small affine helpers (glue) ------------------------

def _transform_affine_to_feature(feat_spatial, affine, spatial_dim):
    scale = [float(c) / float(r) for c, r in zip(spatial_dim, feat_spatial)]
    T = jnp.diag(jnp.asarray(scale[::-1] + [1.0], dtype=jnp.float32))
    return affine.astype(jnp.float32) @ T


def _t_natural_to_torch(shape):
    T = np.eye(4, dtype=np.float32)
    for i, dim in enumerate(shape[::-1]):
        if dim == 1:
            T[i, :] = 0.0
        else:
            T[i, i] = 2.0 / (dim - 1)
            T[i, -1] = -1.0
    return jnp.asarray(T)


def _t_torch_to_natural(shape):
    T = np.eye(4, dtype=np.float32)
    for i, dim in enumerate(shape[::-1]):
        T[i, i] = (dim - 1) / 2.0
        T[i, -1] = (dim - 1) / 2.0
    return jnp.asarray(T)


def _affine_grid_cm(theta, out_spatial, align_corners=True):
    """F.affine_grid for 3D volumes, channel-major. theta: [B,3,4] -> [B, 3, D*H*W]."""
    D, H, W = out_spatial

    def lin(n):
        v = jnp.linspace(-1.0, 1.0, n, dtype=jnp.float32)
        if not align_corners:
            v = v * (n - 1) / n
        return v

    xs, ys, zs = lin(W), lin(H), lin(D)
    gx = jnp.broadcast_to(xs[None, None, :], (D, H, W)).reshape(-1)
    gy = jnp.broadcast_to(ys[None, :, None], (D, H, W)).reshape(-1)
    gz = jnp.broadcast_to(zs[:, None, None], (D, H, W)).reshape(-1)
    base = jnp.stack([gx, gy, gz, jnp.ones_like(gx)], axis=0)        # [4, N]
    return jnp.einsum('bij,jn->bin', theta, base)                    # [B, 3, N]


# ------------------------------ module forward --------------------------------

def feature_registration_forward(params, feats1, affine1, feats2, affine2,
                                 spatial_dim1, spatial_dim2, T1, T2):
    """Equivalent of FeatureRegistration.forward(feats1, affine1, feats2, affine2,
    aspp=True) for 2-channel feats (feat_dim=4, use_out_embedding=True)."""
    B = feats1.shape[0]
    sp1 = tuple(feats1.shape[-3:])
    sp2 = tuple(feats2.shape[-3:])

    affine1 = _transform_affine_to_feature(sp1, affine1, (T1,) + tuple(spatial_dim1))
    affine2 = _transform_affine_to_feature(sp2, affine2, (T2,) + tuple(spatial_dim2))

    inv_affine2 = jnp.linalg.inv(affine2)
    theta = (_t_natural_to_torch(sp2) @ inv_affine2 @ affine1
             @ _t_torch_to_natural(sp1))[:, :3]                      # [B, 3, 4]

    # forward() calls _regist_feats2_to_feats1 with align_corners=True
    grid_cm = _affine_grid_cm(theta, sp1, align_corners=True)        # [B, 3, N1]

    feat_chunks = aspp_forward(feats2, params)                       # [B, nk, 4, ck] bf16
    out_cm = grid_sample_blend(feat_chunks, grid_cm,
                               jnp.asarray(params["emb"], jnp.float32).T, sp2)

    D1, H1, W1 = sp1
    feats2_to_1 = out_cm.reshape(B, 4, D1, H1, W1)                   # already channel-major
    return feats2_to_1, None, affine1, affine2                       # mask is None (aspp path)


def init_params(key, feat_dim=4, in_ch=2):
    ks = jax.random.split(key, 7)
    p = {
        "aspp_w0": 0.1 * jax.random.normal(ks[0], (1, in_ch, 1, 1, 1), jnp.float32),
        "aspp_w1": 0.1 * jax.random.normal(ks[1], (1, in_ch, 3, 3, 3), jnp.float32),
        "aspp_w2": 0.1 * jax.random.normal(ks[2], (1, in_ch, 3, 3, 3), jnp.float32),
        "aspp_w3": 0.1 * jax.random.normal(ks[3], (1, in_ch, 3, 3, 3), jnp.float32),
        "aspp_k1_w": 0.1 * jax.random.normal(ks[4], (4, 4, 1, 1, 1), jnp.float32),
        "aspp_k1_b": 0.1 * jax.random.normal(ks[5], (4,), jnp.float32),
        "emb": jax.random.normal(ks[6], (1, feat_dim), jnp.float32),
    }
    return p


if __name__ == "__main__":
    key = jax.random.PRNGKey(0)
    kp, kf1, kf2, ka1, ka2 = jax.random.split(key, 5)

    B, C = 2, 2
    D1, H1, W1 = 8, 16, 16
    D2, H2, W2 = 8, 16, 16
    T1, T2 = 32, 32
    spatial_dim1 = (64, 64)
    spatial_dim2 = (64, 64)

    params = init_params(kp, feat_dim=4, in_ch=C)
    feats1 = jax.random.normal(kf1, (B, C, D1, H1, W1), jnp.float32)
    feats2 = jax.random.normal(kf2, (B, C, D2, H2, W2), jnp.float32)

    def rand_affine(k):
        eye = jnp.eye(4, dtype=jnp.float32)
        a = eye[None] + 0.05 * jax.random.normal(k, (B, 4, 4), jnp.float32)
        a = a.at[:, 3, :].set(jnp.array([0.0, 0.0, 0.0, 1.0], jnp.float32))
        return a

    affine1 = rand_affine(ka1)
    affine2 = rand_affine(ka2)

    feats2_to_1, mask, a1, a2 = feature_registration_forward(
        params, feats1, affine1, feats2, affine2,
        spatial_dim1, spatial_dim2, T1, T2)
    jax.block_until_ready((feats2_to_1, a1, a2))

    assert feats2_to_1.shape == (B, 4, D1, H1, W1)
    assert feats2_to_1.dtype == jnp.float32
    assert mask is None
    assert a1.shape == (B, 4, 4) and a2.shape == (B, 4, 4)
    assert bool(jnp.all(jnp.isfinite(feats2_to_1)))
    print("KERNEL_OK")
</pallas_src>

<mosaic_0001>
module attributes {stable_mosaic.version = 11 : i64} {
  func.func @_aspp_kernel(%arg0: i32, %arg1: i32, %arg2: memref<4x176xbf16, #tpu.memory_space<vmem>>, %arg3: memref<4x1xf32, #tpu.memory_space<vmem>>, %arg4: memref<1x176x2048xbf16, #tpu.memory_space<vmem>>, %arg5: memref<1x16x4x128xbf16, #tpu.memory_space<vmem>>) attributes {dimension_semantics = [#tpu.dimension_semantics<parallel>, #tpu.dimension_semantics<parallel>], iteration_bounds = array<i64: 2, 1>, scalar_prefetch = 0 : i64, scratch_operands = 0 : i64, tpu.core_type = #tpu.core_type<tc>, window_params = [{pipeline_mode = #tpu.pipeline_mode<synchronous>, transform_indices = @transform_0, window_bounds = array<i64: 4, 176>}, {pipeline_mode = #tpu.pipeline_mode<synchronous>, transform_indices = @transform_1, window_bounds = array<i64: 4, 1>}, {transform_indices = @transform_2, window_bounds = array<i64: 1, 176, 2048>}, {transform_indices = @transform_3, window_bounds = array<i64: 1, 16, 4, 128>}]} {
    %c0 = arith.constant 0 : index
    %c0_0 = arith.constant 0 : index
    %0 = vector.load %arg2[%c0, %c0_0] : memref<4x176xbf16, #tpu.memory_space<vmem>>, vector<4x176xbf16>
    %c0_1 = arith.constant 0 : index
    %c0_2 = arith.constant 0 : index
    %c0_3 = arith.constant 0 : index
    %1 = vector.load %arg4[%c0_1, %c0_2, %c0_3] : memref<1x176x2048xbf16, #tpu.memory_space<vmem>>, vector<1x176x128xbf16>
    %2 = vector.shape_cast %1 : vector<1x176x128xbf16> to vector<176x128xbf16>
    %cst = arith.constant dense<0.000000e+00> : vector<4x128xf32>
    %3 = tpu.matmul %0, %2, %cst {dimension_numbers = #tpu.dot_dimension_numbers<[1], [0], [0], [1], [0, 0, 1, 1], [], []>} : vector<4x176xbf16>, vector<176x128xbf16>, vector<4x128xf32> -> vector<4x128xf32>
    %c0_4 = arith.constant 0 : index
    %c0_5 = arith.constant 0 : index
    %4 = vector.load %arg3[%c0_4, %c0_5] : memref<4x1xf32, #tpu.memory_space<vmem>>, vector<4x1xf32>
    %5 = vector.broadcast %4 : vector<4x1xf32> to vector<4x128xf32>
    %6 = arith.addf %3, %5 : vector<4x128xf32>
    %cst_6 = arith.constant 0.000000e+00 : f32
    %7 = vector.broadcast %cst_6 : f32 to vector<4x128xf32>
    %8 = arith.cmpf oge, %6, %7 : vector<4x128xf32>
    %cst_7 = arith.constant 0.00999999977 : f32
    %9 = vector.broadcast %cst_7 : f32 to vector<4x128xf32>
    %10 = arith.mulf %9, %6 : vector<4x128xf32>
    %11 = arith.select %8, %6, %10 : vector<4x128xi1>, vector<4x128xf32>
    %12 = arith.truncf %11 : vector<4x128xf32> to vector<4x128xbf16>
    %c0_8 = arith.constant 0 : index
    %c0_9 = arith.constant 0 : index
    %c0_10 = arith.constant 0 : index
    %c0_11 = arith.constant 0 : index
    %13 = vector.load %arg5[%c0_8, %c0_9, %c0_10, %c0_11] : memref<1x16x4x128xbf16, #tpu.memory_space<vmem>>, vector<1x1x4x128xbf16>
    %14 = vector.shape_cast %13 : vector<1x1x4x128xbf16> to vector<4x128xbf16>
    %15 = vector.shape_cast %12 : vector<4x128xbf16> to vector<1x1x4x128xbf16>
    tpu.vector_store %arg5[%c0_8, %c0_9, %c0_10, %c0_11], %15 {strides = array<i32>} : memref<1x16x4x128xbf16, #tpu.memory_space<vmem>>, vector<1x1x4x128xbf16>,
    %c0_12 = arith.constant 0 : index
    %c0_13 = arith.constant 0 : index
    %16 = vector.load %arg2[%c0_12, %c0_13] : memref<4x176xbf16, #tpu.memory_space<vmem>>, vector<4x176xbf16>
    %c0_14 = arith.constant 0 : index
    %c0_15 = arith.constant 0 : index
    %c128 = arith.constant 128 : index
    %17 = vector.load %arg4[%c0_14, %c0_15, %c128] : memref<1x176x2048xbf16, #tpu.memory_space<vmem>>, vector<1x176x128xbf16>
    %18 = vector.shape_cast %17 : vector<1x176x128xbf16> to vector<176x128xbf16>
    %cst_16 = arith.constant dense<0.000000e+00> : vector<4x128xf32>
    %19 = tpu.matmul %16, %18, %cst_16 {dimension_numbers = #tpu.dot_dimension_numbers<[1], [0], [0], [1], [0, 0, 1, 1], [], []>} : vector<4x176xbf16>, vector<176x128xbf16>, vector<4x128xf32> -> vector<4x128xf32>
    %c0_17 = arith.constant 0 : index
    %c0_18 = arith.constant 0 : index
    %20 = vector.load %arg3[%c0_17, %c0_18] : memref<4x1xf32, #tpu.memory_space<vmem>>, vector<4x1xf32>
    %21 = vector.broadcast %20 : vector<4x1xf32> to vector<4x128xf32>
    %22 = arith.addf %19, %21 : vector<4x128xf32>
    %cst_19 = arith.constant 0.000000e+00 : f32
    %23 = vector.broadcast %cst_19 : f32 to vector<4x128xf32>
    %24 = arith.cmpf oge, %22, %23 : vector<4x128xf32>
    %cst_20 = arith.constant 0.00999999977 : f32
    %25 = vector.broadcast %cst_20 : f32 to vector<4x128xf32>
    %26 = arith.mulf %25, %22 : vector<4x128xf32>
    %27 = arith.select %24, %22, %26 : vector<4x128xi1>, vector<4x128xf32>
    %28 = arith.truncf %27 : vector<4x128xf32> to vector<4x128xbf16>
    %c0_21 = arith.constant 0 : index
    %c1 = arith.constant 1 : index
    %c0_22 = arith.constant 0 : index
    %c0_23 = arith.constant 0 : index
    %29 = vector.load %arg5[%c0_21, %c1, %c0_22, %c0_23] : memref<1x16x4x128xbf16, #tpu.memory_space<vmem>>, vector<1x1x4x128xbf16>
    %30 = vector.shape_cast %29 : vector<1x1x4x128xbf16> to vector<4x128xbf16>
    %31 = vector.shape_cast %28 : vector<4x128xbf16> to vector<1x1x4x128xbf16>
    tpu.vector_store %arg5[%c0_21, %c1, %c0_22, %c0_23], %31 {strides = array<i32>} : memref<1x16x4x128xbf16, #tpu.memory_space<vmem>>, vector<1x1x4x128xbf16>,
    %c0_24 = arith.constant 0 : index
    %c0_25 = arith.constant 0 : index
    %32 = vector.load %arg2[%c0_24, %c0_25] : memref<4x176xbf16, #tpu.memory_space<vmem>>, vector<4x176xbf16>
    %c0_26 = arith.constant 0 : index
    %c0_27 = arith.constant 0 : index
    %c256 = arith.constant 256 : index
    %33 = vector.load %arg4[%c0_26, %c0_27, %c256] : memref<1x176x2048xbf16, #tpu.memory_space<vmem>>, vector<1x176x128xbf16>
    %34 = vector.shape_cast %33 : vector<1x176x128xbf16> to vector<176x128xbf16>
    %cst_28 = arith.constant dense<0.000000e+00> : vector<4x128xf32>
    %35 = tpu.matmul %32, %34, %cst_28 {dimension_numbers = #tpu.dot_dimension_numbers<[1], [0], [0], [1], [0, 0, 1, 1], [], []>} : vector<4x176xbf16>, vector<176x128xbf16>, vector<4x128xf32> -> vector<4x128xf32>
    %c0_29 = arith.constant 0 : index
    %c0_30 = arith.constant 0 : index
    %36 = vector.load %arg3[%c0_29, %c0_30] : memref<4x1xf32, #tpu.memory_space<vmem>>, vector<4x1xf32>
    %37 = vector.broadcast %36 : vector<4x1xf32> to vector<4x128xf32>
    %38 = arith.addf %35, %37 : vector<4x128xf32>
    %cst_31 = arith.constant 0.000000e+00 : f32
    %39 = vector.broadcast %cst_31 : f32 to vector<4x128xf32>
    %40 = arith.cmpf oge, %38, %39 : vector<4x128xf32>
    %cst_32 = arith.constant 0.00999999977 : f32
    %41 = vector.broadcast %cst_32 : f32 to vector<4x128xf32>
    %42 = arith.mulf %41, %38 : vector<4x128xf32>
    %43 = arith.select %40, %38, %42 : vector<4x128xi1>, vector<4x128xf32>
    %44 = arith.truncf %43 : vector<4x128xf32> to vector<4x128xbf16>
    %c0_33 = arith.constant 0 : index
    %c2 = arith.constant 2 : index
    %c0_34 = arith.constant 0 : index
    %c0_35 = arith.constant 0 : index
    %45 = vector.load %arg5[%c0_33, %c2, %c0_34, %c0_35] : memref<1x16x4x128xbf16, #tpu.memory_space<vmem>>, vector<1x1x4x128xbf16>
    %46 = vector.shape_cast %45 : vector<1x1x4x128xbf16> to vector<4x128xbf16>
    %47 = vector.shape_cast %44 : vector<4x128xbf16> to vector<1x1x4x128xbf16>
    tpu.vector_store %arg5[%c0_33, %c2, %c0_34, %c0_35], %47 {strides = array<i32>} : memref<1x16x4x128xbf16, #tpu.memory_space<vmem>>, vector<1x1x4x128xbf16>,
    %c0_36 = arith.constant 0 : index
    %c0_37 = arith.constant 0 : index
    %48 = vector.load %arg2[%c0_36, %c0_37] : memref<4x176xbf16, #tpu.memory_space<vmem>>, vector<4x176xbf16>
    %c0_38 = arith.constant 0 : index
    %c0_39 = arith.constant 0 : index
    %c384 = arith.constant 384 : index
    %49 = vector.load %arg4[%c0_38, %c0_39, %c384] : memref<1x176x2048xbf16, #tpu.memory_space<vmem>>, vector<1x176x128xbf16>
    %50 = vector.shape_cast %49 : vector<1x176x128xbf16> to vector<176x128xbf16>
    %cst_40 = arith.constant dense<0.000000e+00> : vector<4x128xf32>
    %51 = tpu.matmul %48, %50, %cst_40 {dimension_numbers = #tpu.dot_dimension_numbers<[1], [0], [0], [1], [0, 0, 1, 1], [], []>} : vector<4x176xbf16>, vector<176x128xbf16>, vector<4x128xf32> -> vector<4x128xf32>
    %c0_41 = arith.constant 0 : index
    %c0_42 = arith.constant 0 : index
    %52 = vector.load %arg3[%c0_41, %c0_42] : memref<4x1xf32, #tpu.memory_space<vmem>>, vector<4x1xf32>
    %53 = vector.broadcast %52 : vector<4x1xf32> to vector<4x128xf32>
    %54 = arith.addf %51, %53 : vector<4x128xf32>
    %cst_43 = arith.constant 0.000000e+00 : f32
    %55 = vector.broadcast %cst_43 : f32 to vector<4x128xf32>
    %56 = arith.cmpf oge, %54, %55 : vector<4x128xf32>
    %cst_44 = arith.constant 0.00999999977 : f32
    %57 = vector.broadcast %cst_44 : f32 to vector<4x128xf32>
    %58 = arith.mulf %57, %54 : vector<4x128xf32>
    %59 = arith.select %56, %54, %58 : vector<4x128xi1>, vector<4x128xf32>
    %60 = arith.truncf %59 : vector<4x128xf32> to vector<4x128xbf16>
    %c0_45 = arith.constant 0 : index
    %c3 = arith.constant 3 : index
    %c0_46 = arith.constant 0 : index
    %c0_47 = arith.constant 0 : index
    %61 = vector.load %arg5[%c0_45, %c3, %c0_46, %c0_47] : memref<1x16x4x128xbf16, #tpu.memory_space<vmem>>, vector<1x1x4x128xbf16>
    %62 = vector.shape_cast %61 : vector<1x1x4x128xbf16> to vector<4x128xbf16>
    %63 = vector.shape_cast %60 : vector<4x128xbf16> to vector<1x1x4x128xbf16>
    tpu.vector_store %arg5[%c0_45, %c3, %c0_46, %c0_47], %63 {strides = array<i32>} : memref<1x16x4x128xbf16, #tpu.memory_space<vmem>>, vector<1x1x4x128xbf16>,
    %c0_48 = arith.constant 0 : index
    %c0_49 = arith.constant 0 : index
    %64 = vector.load %arg2[%c0_48, %c0_49] : memref<4x176xbf16, #tpu.memory_space<vmem>>, vector<4x176xbf16>
    %c0_50 = arith.constant 0 : index
    %c0_51 = arith.constant 0 : index
    %c512 = arith.constant 512 : index
    %65 = vector.load %arg4[%c0_50, %c0_51, %c512] : memref<1x176x2048xbf16, #tpu.memory_space<vmem>>, vector<1x176x128xbf16>
    %66 = vector.shape_cast %65 : vector<1x176x128xbf16> to vector<176x128xbf16>
    %cst_52 = arith.constant dense<0.000000e+00> : vector<4x128xf32>
    %67 = tpu.matmul %64, %66, %cst_52 {dimension_numbers = #tpu.dot_dimension_numbers<[1], [0], [0], [1], [0, 0, 1, 1], [], []>} : vector<4x176xbf16>, vector<176x128xbf16>, vector<4x128xf32> -> vector<4x128xf32>
    %c0_53 = arith.constant 0 : index
    %c0_54 = arith.constant 0 : index
    %68 = vector.load %arg3[%c0_53, %c0_54] : memref<4x1xf32, #tpu.memory_space<vmem>>, vector<4x1xf32>
    %69 = vector.broadcast %68 : vector<4x1xf32> to vector<4x128xf32>
    %70 = arith.addf %67, %69 : vector<4x128xf32>
    %cst_55 = arith.constant 0.000000e+00 : f32
    %71 = vector.broadcast %cst_55 : f32 to vector<4x128xf32>
    %72 = arith.cmpf oge, %70, %71 : vector<4x128xf32>
    %cst_56 = arith.constant 0.00999999977 : f32
    %73 = vector.broadcast %cst_56 : f32 to vector<4x128xf32>
    %74 = arith.mulf %73, %70 : vector<4x128xf32>
    %75 = arith.select %72, %70, %74 : vector<4x128xi1>, vector<4x128xf32>
    %76 = arith.truncf %75 : vector<4x128xf32> to vector<4x128xbf16>
    %c0_57 = arith.constant 0 : index
    %c4 = arith.constant 4 : index
    %c0_58 = arith.constant 0 : index
    %c0_59 = arith.constant 0 : index
    %77 = vector.load %arg5[%c0_57, %c4, %c0_58, %c0_59] : memref<1x16x4x128xbf16, #tpu.memory_space<vmem>>, vector<1x1x4x128xbf16>
    %78 = vector.shape_cast %77 : vector<1x1x4x128xbf16> to vector<4x128xbf16>
    %79 = vector.shape_cast %76 : vector<4x128xbf16> to vector<1x1x4x128xbf16>
    tpu.vector_store %arg5[%c0_57, %c4, %c0_58, %c0_59], %79 {strides = array<i32>} : memref<1x16x4x128xbf16, #tpu.memory_space<vmem>>, vector<1x1x4x128xbf16>,
    %c0_60 = arith.constant 0 : index
    %c0_61 = arith.constant 0 : index
    %80 = vector.load %arg2[%c0_60, %c0_61] : memref<4x176xbf16, #tpu.memory_space<vmem>>, vector<4x176xbf16>
    %c0_62 = arith.constant 0 : index
    %c0_63 = arith.constant 0 : index
    %c640 = arith.constant 640 : index
    %81 = vector.load %arg4[%c0_62, %c0_63, %c640] : memref<1x176x2048xbf16, #tpu.memory_space<vmem>>, vector<1x176x128xbf16>
    %82 = vector.shape_cast %81 : vector<1x176x128xbf16> to vector<176x128xbf16>
    %cst_64 = arith.constant dense<0.000000e+00> : vector<4x128xf32>
    %83 = tpu.matmul %80, %82, %cst_64 {dimension_numbers = #tpu.dot_dimension_numbers<[1], [0], [0], [1], [0, 0, 1, 1], [], []>} : vector<4x176xbf16>, vector<176x128xbf16>, vector<4x128xf32> -> vector<4x128xf32>
    %c0_65 = arith.constant 0 : index
    %c0_66 = arith.constant 0 : index
    %84 = vector.load %arg3[%c0_65, %c0_66] : memref<4x1xf32, #tpu.memory_space<vmem>>, vector<4x1xf32>
    %85 = vector.broadcast %84 : vector<4x1xf32> to vector<4x128xf32>
    %86 = arith.addf %83, %85 : vector<4x128xf32>
    %cst_67 = arith.constant 0.000000e+00 : f32
    %87 = vector.broadcast %cst_67 : f32 to vector<4x128xf32>
    %88 = arith.cmpf oge, %86, %87 : vector<4x128xf32>
    %cst_68 = arith.constant 0.00999999977 : f32
    %89 = vector.broadcast %cst_68 : f32 to vector<4x128xf32>
    %90 = arith.mulf %89, %86 : vector<4x128xf32>
    %91 = arith.select %88, %86, %90 : vector<4x128xi1>, vector<4x128xf32>
    %92 = arith.truncf %91 : vector<4x128xf32> to vector<4x128xbf16>
    %c0_69 = arith.constant 0 : index
    %c5 = arith.constant 5 : index
    %c0_70 = arith.constant 0 : index
    %c0_71 = arith.constant 0 : index
    %93 = vector.load %arg5[%c0_69, %c5, %c0_70, %c0_71] : memref<1x16x4x128xbf16, #tpu.memory_space<vmem>>, vector<1x1x4x128xbf16>
    %94 = vector.shape_cast %93 : vector<1x1x4x128xbf16> to vector<4x128xbf16>
    %95 = vector.shape_cast %92 : vector<4x128xbf16> to vector<1x1x4x128xbf16>
    tpu.vector_store %arg5[%c0_69, %c5, %c0_70, %c0_71], %95 {strides = array<i32>} : memref<1x16x4x128xbf16, #tpu.memory_space<vmem>>, vector<1x1x4x128xbf16>,
    %c0_72 = arith.constant 0 : index
    %c0_73 = arith.constant 0 : index
    %96 = vector.load %arg2[%c0_72, %c0_73] : memref<4x176xbf16, #tpu.memory_space<vmem>>, vector<4x176xbf16>
    %c0_74 = arith.constant 0 : index
    %c0_75 = arith.constant 0 : index
    %c768 = arith.constant 768 : index
    %97 = vector.load %arg4[%c0_74, %c0_75, %c768] : memref<1x176x2048xbf16, #tpu.memory_space<vmem>>, vector<1x176x128xbf16>
    %98 = vector.shape_cast %97 : vector<1x176x128xbf16> to vector<176x128xbf16>
    %cst_76 = arith.constant dense<0.000000e+00> : vector<4x128xf32>
    %99 = tpu.matmul %96, %98, %cst_76 {dimension_numbers = #tpu.dot_dimension_numbers<[1], [0], [0], [1], [0, 0, 1, 1], [], []>} : vector<4x176xbf16>, vector<176x128xbf16>, vector<4x128xf32> -> vector<4x128xf32>
    %c0_77 = arith.constant 0 : index
    %c0_78 = arith.constant 0 : index
    %100 = vector.load %arg3[%c0_77, %c0_78] : memref<4x1xf32, #tpu.memory_space<vmem>>, vector<4x1xf32>
    %101 = vector.broadcast %100 : vector<4x1xf32> to vector<4x128xf32>
    %102 = arith.addf %99, %101 : vector<4x128xf32>
    %cst_79 = arith.constant 0.000000e+00 : f32
    %103 = vector.broadcast %cst_79 : f32 to vector<4x128xf32>
    %104 = arith.cmpf oge, %102, %103 : vector<4x128xf32>
    %cst_80 = arith.constant 0.00999999977 : f32
    %105 = vector.broadcast %cst_80 : f32 to vector<4x128xf32>
    %106 = arith.mulf %105, %102 : vector<4x128xf32>
    %107 = arith.select %104, %102, %106 : vector<4x128xi1>, vector<4x128xf32>
    %108 = arith.truncf %107 : vector<4x128xf32> to vector<4x128xbf16>
    %c0_81 = arith.constant 0 : index
    %c6 = arith.constant 6 : index
    %c0_82 = arith.constant 0 : index
    %c0_83 = arith.constant 0 : index
    %109 = vector.load %arg5[%c0_81, %c6, %c0_82, %c0_83] : memref<1x16x4x128xbf16, #tpu.memory_space<vmem>>, vector<1x1x4x128xbf16>
    %110 = vector.shape_cast %109 : vector<1x1x4x128xbf16> to vector<4x128xbf16>
    %111 = vector.shape_cast %108 : vector<4x128xbf16> to vector<1x1x4x128xbf16>
    tpu.vector_store %arg5[%c0_81, %c6, %c0_82, %c0_83], %111 {strides = array<i32>} : memref<1x16x4x128xbf16, #tpu.memory_space<vmem>>, vector<1x1x4x128xbf16>,
    %c0_84 = arith.constant 0 : index
    %c0_85 = arith.constant 0 : index
    %112 = vector.load %arg2[%c0_84, %c0_85] : memref<4x176xbf16, #tpu.memory_space<vmem>>, vector<4x176xbf16>
    %c0_86 = arith.constant 0 : index
    %c0_87 = arith.constant 0 : index
    %c896 = arith.constant 896 : index
    %113 = vector.load %arg4[%c0_86, %c0_87, %c896] : memref<1x176x2048xbf16, #tpu.memory_space<vmem>>, vector<1x176x128xbf16>
    %114 = vector.shape_cast %113 : vector<1x176x128xbf16> to vector<176x128xbf16>
    %cst_88 = arith.constant dense<0.000000e+00> : vector<4x128xf32>
    %115 = tpu.matmul %112, %114, %cst_88 {dimension_numbers = #tpu.dot_dimension_numbers<[1], [0], [0], [1], [0, 0, 1, 1], [], []>} : vector<4x176xbf16>, vector<176x128xbf16>, vector<4x128xf32> -> vector<4x128xf32>
    %c0_89 = arith.constant 0 : index
    %c0_90 = arith.constant 0 : index
    %116 = vector.load %arg3[%c0_89, %c0_90] : memref<4x1xf32, #tpu.memory_space<vmem>>, vector<4x1xf32>
    %117 = vector.broadcast %116 : vector<4x1xf32> to vector<4x128xf32>
    %118 = arith.addf %115, %117 : vector<4x128xf32>
    %cst_91 = arith.constant 0.000000e+00 : f32
    %119 = vector.broadcast %cst_91 : f32 to vector<4x128xf32>
    %120 = arith.cmpf oge, %118, %119 : vector<4x128xf32>
    %cst_92 = arith.constant 0.00999999977 : f32
    %121 = vector.broadcast %cst_92 : f32 to vector<4x128xf32>
    %122 = arith.mulf %121, %118 : vector<4x128xf32>
    %123 = arith.select %120, %118, %122 : vector<4x128xi1>, vector<4x128xf32>
    %124 = arith.truncf %123 : vector<4x128xf32> to vector<4x128xbf16>
    %c0_93 = arith.constant 0 : index
    %c7 = arith.constant 7 : index
    %c0_94 = arith.constant 0 : index
    %c0_95 = arith.constant 0 : index
    %125 = vector.load %arg5[%c0_93, %c7, %c0_94, %c0_95] : memref<1x16x4x128xbf16, #tpu.memory_space<vmem>>, vector<1x1x4x128xbf16>
    %126 = vector.shape_cast %125 : vector<1x1x4x128xbf16> to vector<4x128xbf16>
    %127 = vector.shape_cast %124 : vector<4x128xbf16> to vector<1x1x4x128xbf16>
    tpu.vector_store %arg5[%c0_93, %c7, %c0_94, %c0_95], %127 {strides = array<i32>} : memref<1x16x4x128xbf16, #tpu.memory_space<vmem>>, vector<1x1x4x128xbf16>,
    %c0_96 = arith.constant 0 : index
    %c0_97 = arith.constant 0 : index
    %128 = vector.load %arg2[%c0_96, %c0_97] : memref<4x176xbf16, #tpu.memory_space<vmem>>, vector<4x176xbf16>
    %c0_98 = arith.constant 0 : index
    %c0_99 = arith.constant 0 : index
    %c1024 = arith.constant 1024 : index
    %129 = vector.load %arg4[%c0_98, %c0_99, %c1024] : memref<1x176x2048xbf16, #tpu.memory_space<vmem>>, vector<1x176x128xbf16>
    %130 = vector.shape_cast %129 : vector<1x176x128xbf16> to vector<176x128xbf16>
    %cst_100 = arith.constant dense<0.000000e+00> : vector<4x128xf32>
    %131 = tpu.matmul %128, %130, %cst_100 {dimension_numbers = #tpu.dot_dimension_numbers<[1], [0], [0], [1], [0, 0, 1, 1], [], []>} : vector<4x176xbf16>, vector<176x128xbf16>, vector<4x128xf32> -> vector<4x128xf32>
    %c0_101 = arith.constant 0 : index
    %c0_102 = arith.constant 0 : index
    %132 = vector.load %arg3[%c0_101, %c0_102] : memref<4x1xf32, #tpu.memory_space<vmem>>, vector<4x1xf32>
    %133 = vector.broadcast %132 : vector<4x1xf32> to vector<4x128xf32>
    %134 = arith.addf %131, %133 : vector<4x128xf32>
    %cst_103 = arith.constant 0.000000e+00 : f32
    %135 = vector.broadcast %cst_103 : f32 to vector<4x128xf32>
    %136 = arith.cmpf oge, %134, %135 : vector<4x128xf32>
    %cst_104 = arith.constant 0.00999999977 : f32
    %137 = vector.broadcast %cst_104 : f32 to vector<4x128xf32>
    %138 = arith.mulf %137, %134 : vector<4x128xf32>
    %139 = arith.select %136, %134, %138 : vector<4x128xi1>, vector<4x128xf32>
    %140 = arith.truncf %139 : vector<4x128xf32> to vector<4x128xbf16>
    %c0_105 = arith.constant 0 : index
    %c8 = arith.constant 8 : index
    %c0_106 = arith.constant 0 : index
    %c0_107 = arith.constant 0 : index
    %141 = vector.load %arg5[%c0_105, %c8, %c0_106, %c0_107] : memref<1x16x4x128xbf16, #tpu.memory_space<vmem>>, vector<1x1x4x128xbf16>
    %142 = vector.shape_cast %141 : vector<1x1x4x128xbf16> to vector<4x128xbf16>
    %143 = vector.shape_cast %140 : vector<4x128xbf16> to vector<1x1x4x128xbf16>
    tpu.vector_store %arg5[%c0_105, %c8, %c0_106, %c0_107], %143 {strides = array<i32>} : memref<1x16x4x128xbf16, #tpu.memory_space<vmem>>, vector<1x1x4x128xbf16>,
    %c0_108 = arith.constant 0 : index
    %c0_109 = arith.constant 0 : index
    %144 = vector.load %arg2[%c0_108, %c0_109] : memref<4x176xbf16, #tpu.memory_space<vmem>>, vector<4x176xbf16>
    %c0_110 = arith.constant 0 : index
    %c0_111 = arith.constant 0 : index
    %c1152 = arith.constant 1152 : index
    %145 = vector.load %arg4[%c0_110, %c0_111, %c1152] : memref<1x176x2048xbf16, #tpu.memory_space<vmem>>, vector<1x176x128xbf16>
    %146 = vector.shape_cast %145 : vector<1x176x128xbf16> to vector<176x128xbf16>
    %cst_112 = arith.constant dense<0.000000e+00> : vector<4x128xf32>
    %147 = tpu.matmul %144, %146, %cst_112 {dimension_numbers = #tpu.dot_dimension_numbers<[1], [0], [0], [1], [0, 0, 1, 1], [], []>} : vector<4x176xbf16>, vector<176x128xbf16>, vector<4x128xf32> -> vector<4x128xf32>
    %c0_113 = arith.constant 0 : index
    %c0_114 = arith.constant 0 : index
    %148 = vector.load %arg3[%c0_113, %c0_114] : memref<4x1xf32, #tpu.memory_space<vmem>>, vector<4x1xf32>
    %149 = vector.broadcast %148 : vector<4x1xf32> to vector<4x128xf32>
    %150 = arith.addf %147, %149 : vector<4x128xf32>
    %cst_115 = arith.constant 0.000000e+00 : f32
    %151 = vector.broadcast %cst_115 : f32 to vector<4x128xf32>
    %152 = arith.cmpf oge, %150, %151 : vector<4x128xf32>
    %cst_116 = arith.constant 0.00999999977 : f32
    %153 = vector.broadcast %cst_116 : f32 to vector<4x128xf32>
    %154 = arith.mulf %153, %150 : vector<4x128xf32>
    %155 = arith.select %152, %150, %154 : vector<4x128xi1>, vector<4x128xf32>
    %156 = arith.truncf %155 : vector<4x128xf32> to vector<4x128xbf16>
    %c0_117 = arith.constant 0 : index
    %c9 = arith.constant 9 : index
    %c0_118 = arith.constant 0 : index
    %c0_119 = arith.constant 0 : index
    %157 = vector.load %arg5[%c0_117, %c9, %c0_118, %c0_119] : memref<1x16x4x128xbf16, #tpu.memory_space<vmem>>, vector<1x1x4x128xbf16>
    %158 = vector.shape_cast %157 : vector<1x1x4x128xbf16> to vector<4x128xbf16>
    %159 = vector.shape_cast %156 : vector<4x128xbf16> to vector<1x1x4x128xbf16>
    tpu.vector_store %arg5[%c0_117, %c9, %c0_118, %c0_119], %159 {strides = array<i32>} : memref<1x16x4x128xbf16, #tpu.memory_space<vmem>>, vector<1x1x4x128xbf16>,
    %c0_120 = arith.constant 0 : index
    %c0_121 = arith.constant 0 : index
    %160 = vector.load %arg2[%c0_120, %c0_121] : memref<4x176xbf16, #tpu.memory_space<vmem>>, vector<4x176xbf16>
    %c0_122 = arith.constant 0 : index
    %c0_123 = arith.constant 0 : index
    %c1280 = arith.constant 1280 : index
    %161 = vector.load %arg4[%c0_122, %c0_123, %c1280] : memref<1x176x2048xbf16, #tpu.memory_space<vmem>>, vector<1x176x128xbf16>
    %162 = vector.shape_cast %161 : vector<1x176x128xbf16> to vector<176x128xbf16>
    %cst_124 = arith.constant dense<0.000000e+00> : vector<4x128xf32>
    %163 = tpu.matmul %160, %162, %cst_124 {dimension_numbers = #tpu.dot_dimension_numbers<[1], [0], [0], [1], [0, 0, 1, 1], [], []>} : vector<4x176xbf16>, vector<176x128xbf16>, vector<4x128xf32> -> vector<4x128xf32>
    %c0_125 = arith.constant 0 : index
    %c0_126 = arith.constant 0 : index
    %164 = vector.load %arg3[%c0_125, %c0_126] : memref<4x1xf32, #tpu.memory_space<vmem>>, vector<4x1xf32>
    %165 = vector.broadcast %164 : vector<4x1xf32> to vector<4x128xf32>
    %166 = arith.addf %163, %165 : vector<4x128xf32>
    %cst_127 = arith.constant 0.000000e+00 : f32
    %167 = vector.broadcast %cst_127 : f32 to vector<4x128xf32>
    %168 = arith.cmpf oge, %166, %167 : vector<4x128xf32>
    %cst_128 = arith.constant 0.00999999977 : f32
    %169 = vector.broadcast %cst_128 : f32 to vector<4x128xf32>
    %170 = arith.mulf %169, %166 : vector<4x128xf32>
    %171 = arith.select %168, %166, %170 : vector<4x128xi1>, vector<4x128xf32>
    %172 = arith.truncf %171 : vector<4x128xf32> to vector<4x128xbf16>
    %c0_129 = arith.constant 0 : index
    %c10 = arith.constant 10 : index
    %c0_130 = arith.constant 0 : index
    %c0_131 = arith.constant 0 : index
    %173 = vector.load %arg5[%c0_129, %c10, %c0_130, %c0_131] : memref<1x16x4x128xbf16, #tpu.memory_space<vmem>>, vector<1x1x4x128xbf16>
    %174 = vector.shape_cast %173 : vector<1x1x4x128xbf16> to vector<4x128xbf16>
    %175 = vector.shape_cast %172 : vector<4x128xbf16> to vector<1x1x4x128xbf16>
    tpu.vector_store %arg5[%c0_129, %c10, %c0_130, %c0_131], %175 {strides = array<i32>} : memref<1x16x4x128xbf16, #tpu.memory_space<vmem>>, vector<1x1x4x128xbf16>,
    %c0_132 = arith.constant 0 : index
    %c0_133 = arith.constant 0 : index
    %176 = vector.load %arg2[%c0_132, %c0_133] : memref<4x176xbf16, #tpu.memory_space<vmem>>, vector<4x176xbf16>
    %c0_134 = arith.constant 0 : index
    %c0_135 = arith.constant 0 : index
    %c1408 = arith.constant 1408 : index
    %177 = vector.load %arg4[%c0_134, %c0_135, %c1408] : memref<1x176x2048xbf16, #tpu.memory_space<vmem>>, vector<1x176x128xbf16>
    %178 = vector.shape_cast %177 : vector<1x176x128xbf16> to vector<176x128xbf16>
    %cst_136 = arith.constant dense<0.000000e+00> : vector<4x128xf32>
    %179 = tpu.matmul %176, %178, %cst_136 {dimension_numbers = #tpu.dot_dimension_numbers<[1], [0], [0], [1], [0, 0, 1, 1], [], []>} : vector<4x176xbf16>, vector<176x128xbf16>, vector<4x128xf32> -> vector<4x128xf32>
    %c0_137 = arith.constant 0 : index
    %c0_138 = arith.constant 0 : index
    %180 = vector.load %arg3[%c0_137, %c0_138] : memref<4x1xf32, #tpu.memory_space<vmem>>, vector<4x1xf32>
    %181 = vector.broadcast %180 : vector<4x1xf32> to vector<4x128xf32>
    %182 = arith.addf %179, %181 : vector<4x128xf32>
    %cst_139 = arith.constant 0.000000e+00 : f32
    %183 = vector.broadcast %cst_139 : f32 to vector<4x128xf32>
    %184 = arith.cmpf oge, %182, %183 : vector<4x128xf32>
    %cst_140 = arith.constant 0.00999999977 : f32
    %185 = vector.broadcast %cst_140 : f32 to vector<4x128xf32>
    %186 = arith.mulf %185, %182 : vector<4x128xf32>
    %187 = arith.select %184, %182, %186 : vector<4x128xi1>, vector<4x128xf32>
    %188 = arith.truncf %187 : vector<4x128xf32> to vector<4x128xbf16>
    %c0_141 = arith.constant 0 : index
    %c11 = arith.constant 11 : index
    %c0_142 = arith.constant 0 : index
    %c0_143 = arith.constant 0 : index
    %189 = vector.load %arg5[%c0_141, %c11, %c0_142, %c0_143] : memref<1x16x4x128xbf16, #tpu.memory_space<vmem>>, vector<1x1x4x128xbf16>
    %190 = vector.shape_cast %189 : vector<1x1x4x128xbf16> to vector<4x128xbf16>
    %191 = vector.shape_cast %188 : vector<4x128xbf16> to vector<1x1x4x128xbf16>
    tpu.vector_store %arg5[%c0_141, %c11, %c0_142, %c0_143], %191 {strides = array<i32>} : memref<1x16x4x128xbf16, #tpu.memory_space<vmem>>, vector<1x1x4x128xbf16>,
    %c0_144 = arith.constant 0 : index
    %c0_145 = arith.constant 0 : index
    %192 = vector.load %arg2[%c0_144, %c0_145] : memref<4x176xbf16, #tpu.memory_space<vmem>>, vector<4x176xbf16>
    %c0_146 = arith.constant 0 : index
    %c0_147 = arith.constant 0 : index
    %c1536 = arith.constant 1536 : index
    %193 = vector.load %arg4[%c0_146, %c0_147, %c1536] : memref<1x176x2048xbf16, #tpu.memory_space<vmem>>, vector<1x176x128xbf16>
    %194 = vector.shape_cast %193 : vector<1x176x128xbf16> to vector<176x128xbf16>
    %cst_148 = arith.constant dense<0.000000e+00> : vector<4x128xf32>
    %195 = tpu.matmul %192, %194, %cst_148 {dimension_numbers = #tpu.dot_dimension_numbers<[1], [0], [0], [1], [0, 0, 1, 1], [], []>} : vector<4x176xbf16>, vector<176x128xbf16>, vector<4x128xf32> -> vector<4x128xf32>
    %c0_149 = arith.constant 0 : index
    %c0_150 = arith.constant 0 : index
    %196 = vector.load %arg3[%c0_149, %c0_150] : memref<4x1xf32, #tpu.memory_space<vmem>>, vector<4x1xf32>
    %197 = vector.broadcast %196 : vector<4x1xf32> to vector<4x128xf32>
    %198 = arith.addf %195, %197 : vector<4x128xf32>
    %cst_151 = arith.constant 0.000000e+00 : f32
    %199 = vector.broadcast %cst_151 : f32 to vector<4x128xf32>
    %200 = arith.cmpf oge, %198, %199 : vector<4x128xf32>
    %cst_152 = arith.constant 0.00999999977 : f32
    %201 = vector.broadcast %cst_152 : f32 to vector<4x128xf32>
    %202 = arith.mulf %201, %198 : vector<4x128xf32>
    %203 = arith.select %200, %198, %202 : vector<4x128xi1>, vector<4x128xf32>
    %204 = arith.truncf %203 : vector<4x128xf32> to vector<4x128xbf16>
    %c0_153 = arith.constant 0 : index
    %c12 = arith.constant 12 : index
    %c0_154 = arith.constant 0 : index
    %c0_155 = arith.constant 0 : index
    %205 = vector.load %arg5[%c0_153, %c12, %c0_154, %c0_155] : memref<1x16x4x128xbf16, #tpu.memory_space<vmem>>, vector<1x1x4x128xbf16>
    %206 = vector.shape_cast %205 : vector<1x1x4x128xbf16> to vector<4x128xbf16>
    %207 = vector.shape_cast %204 : vector<4x128xbf16> to vector<1x1x4x128xbf16>
    tpu.vector_store %arg5[%c0_153, %c12, %c0_154, %c0_155], %207 {strides = array<i32>} : memref<1x16x4x128xbf16, #tpu.memory_space<vmem>>, vector<1x1x4x128xbf16>,
    %c0_156 = arith.constant 0 : index
    %c0_157 = arith.constant 0 : index
    %208 = vector.load %arg2[%c0_156, %c0_157] : memref<4x176xbf16, #tpu.memory_space<vmem>>, vector<4x176xbf16>
    %c0_158 = arith.constant 0 : index
    %c0_159 = arith.constant 0 : index
    %c1664 = arith.constant 1664 : index
    %209 = vector.load %arg4[%c0_158, %c0_159, %c1664] : memref<1x176x2048xbf16, #tpu.memory_space<vmem>>, vector<1x176x128xbf16>
    %210 = vector.shape_cast %209 : vector<1x176x128xbf16> to vector<176x128xbf16>
    %cst_160 = arith.constant dense<0.000000e+00> : vector<4x128xf32>
    %211 = tpu.matmul %208, %210, %cst_160 {dimension_numbers = #tpu.dot_dimension_numbers<[1], [0], [0], [1], [0, 0, 1, 1], [], []>} : vector<4x176xbf16>, vector<176x128xbf16>, vector<4x128xf32> -> vector<4x128xf32>
    %c0_161 = arith.constant 0 : index
    %c0_162 = arith.constant 0 : index
    %212 = vector.load %arg3[%c0_161, %c0_162] : memref<4x1xf32, #tpu.memory_space<vmem>>, vector<4x1xf32>
    %213 = vector.broadcast %212 : vector<4x1xf32> to vector<4x128xf32>
    %214 = arith.addf %211, %213 : vector<4x128xf32>
    %cst_163 = arith.constant 0.000000e+00 : f32
    %215 = vector.broadcast %cst_163 : f32 to vector<4x128xf32>
    %216 = arith.cmpf oge, %214, %215 : vector<4x128xf32>
    %cst_164 = arith.constant 0.00999999977 : f32
    %217 = vector.broadcast %cst_164 : f32 to vector<4x128xf32>
    %218 = arith.mulf %217, %214 : vector<4x128xf32>
    %219 = arith.select %216, %214, %218 : vector<4x128xi1>, vector<4x128xf32>
    %220 = arith.truncf %219 : vector<4x128xf32> to vector<4x128xbf16>
    %c0_165 = arith.constant 0 : index
    %c13 = arith.constant 13 : index
    %c0_166 = arith.constant 0 : index
    %c0_167 = arith.constant 0 : index
    %221 = vector.load %arg5[%c0_165, %c13, %c0_166, %c0_167] : memref<1x16x4x128xbf16, #tpu.memory_space<vmem>>, vector<1x1x4x128xbf16>
    %222 = vector.shape_cast %221 : vector<1x1x4x128xbf16> to vector<4x128xbf16>
    %223 = vector.shape_cast %220 : vector<4x128xbf16> to vector<1x1x4x128xbf16>
    tpu.vector_store %arg5[%c0_165, %c13, %c0_166, %c0_167], %223 {strides = array<i32>} : memref<1x16x4x128xbf16, #tpu.memory_space<vmem>>, vector<1x1x4x128xbf16>,
    %c0_168 = arith.constant 0 : index
    %c0_169 = arith.constant 0 : index
    %224 = vector.load %arg2[%c0_168, %c0_169] : memref<4x176xbf16, #tpu.memory_space<vmem>>, vector<4x176xbf16>
    %c0_170 = arith.constant 0 : index
    %c0_171 = arith.constant 0 : index
    %c1792 = arith.constant 1792 : index
    %225 = vector.load %arg4[%c0_170, %c0_171, %c1792] : memref<1x176x2048xbf16, #tpu.memory_space<vmem>>, vector<1x176x128xbf16>
    %226 = vector.shape_cast %225 : vector<1x176x128xbf16> to vector<176x128xbf16>
    %cst_172 = arith.constant dense<0.000000e+00> : vector<4x128xf32>
    %227 = tpu.matmul %224, %226, %cst_172 {dimension_numbers = #tpu.dot_dimension_numbers<[1], [0], [0], [1], [0, 0, 1, 1], [], []>} : vector<4x176xbf16>, vector<176x128xbf16>, vector<4x128xf32> -> vector<4x128xf32>
    %c0_173 = arith.constant 0 : index
    %c0_174 = arith.constant 0 : index
    %228 = vector.load %arg3[%c0_173, %c0_174] : memref<4x1xf32, #tpu.memory_space<vmem>>, vector<4x1xf32>
    %229 = vector.broadcast %228 : vector<4x1xf32> to vector<4x128xf32>
    %230 = arith.addf %227, %229 : vector<4x128xf32>
    %cst_175 = arith.constant 0.000000e+00 : f32
    %231 = vector.broadcast %cst_175 : f32 to vector<4x128xf32>
    %232 = arith.cmpf oge, %230, %231 : vector<4x128xf32>
    %cst_176 = arith.constant 0.00999999977 : f32
    %233 = vector.broadcast %cst_176 : f32 to vector<4x128xf32>
    %234 = arith.mulf %233, %230 : vector<4x128xf32>
    %235 = arith.select %232, %230, %234 : vector<4x128xi1>, vector<4x128xf32>
    %236 = arith.truncf %235 : vector<4x128xf32> to vector<4x128xbf16>
    %c0_177 = arith.constant 0 : index
    %c14 = arith.constant 14 : index
    %c0_178 = arith.constant 0 : index
    %c0_179 = arith.constant 0 : index
    %237 = vector.load %arg5[%c0_177, %c14, %c0_178, %c0_179] : memref<1x16x4x128xbf16, #tpu.memory_space<vmem>>, vector<1x1x4x128xbf16>
    %238 = vector.shape_cast %237 : vector<1x1x4x128xbf16> to vector<4x128xbf16>
    %239 = vector.shape_cast %236 : vector<4x128xbf16> to vector<1x1x4x128xbf16>
    tpu.vector_store %arg5[%c0_177, %c14, %c0_178, %c0_179], %239 {strides = array<i32>} : memref<1x16x4x128xbf16, #tpu.memory_space<vmem>>, vector<1x1x4x128xbf16>,
    %c0_180 = arith.constant 0 : index
    %c0_181 = arith.constant 0 : index
    %240 = vector.load %arg2[%c0_180, %c0_181] : memref<4x176xbf16, #tpu.memory_space<vmem>>, vector<4x176xbf16>
    %c0_182 = arith.constant 0 : index
    %c0_183 = arith.constant 0 : index
    %c1920 = arith.constant 1920 : index
    %241 = vector.load %arg4[%c0_182, %c0_183, %c1920] : memref<1x176x2048xbf16, #tpu.memory_space<vmem>>, vector<1x176x128xbf16>
    %242 = vector.shape_cast %241 : vector<1x176x128xbf16> to vector<176x128xbf16>
    %cst_184 = arith.constant dense<0.000000e+00> : vector<4x128xf32>
    %243 = tpu.matmul %240, %242, %cst_184 {dimension_numbers = #tpu.dot_dimension_numbers<[1], [0], [0], [1], [0, 0, 1, 1], [], []>} : vector<4x176xbf16>, vector<176x128xbf16>, vector<4x128xf32> -> vector<4x128xf32>
    %c0_185 = arith.constant 0 : index
    %c0_186 = arith.constant 0 : index
    %244 = vector.load %arg3[%c0_185, %c0_186] : memref<4x1xf32, #tpu.memory_space<vmem>>, vector<4x1xf32>
    %245 = vector.broadcast %244 : vector<4x1xf32> to vector<4x128xf32>
    %246 = arith.addf %243, %245 : vector<4x128xf32>
    %cst_187 = arith.constant 0.000000e+00 : f32
    %247 = vector.broadcast %cst_187 : f32 to vector<4x128xf32>
    %248 = arith.cmpf oge, %246, %247 : vector<4x128xf32>
    %cst_188 = arith.constant 0.00999999977 : f32
    %249 = vector.broadcast %cst_188 : f32 to vector<4x128xf32>
    %250 = arith.mulf %249, %246 : vector<4x128xf32>
    %251 = arith.select %248, %246, %250 : vector<4x128xi1>, vector<4x128xf32>
    %252 = arith.truncf %251 : vector<4x128xf32> to vector<4x128xbf16>
    %c0_189 = arith.constant 0 : index
    %c15 = arith.constant 15 : index
    %c0_190 = arith.constant 0 : index
    %c0_191 = arith.constant 0 : index
    %253 = vector.load %arg5[%c0_189, %c15, %c0_190, %c0_191] : memref<1x16x4x128xbf16, #tpu.memory_space<vmem>>, vector<1x1x4x128xbf16>
    %254 = vector.shape_cast %253 : vector<1x1x4x128xbf16> to vector<4x128xbf16>
    %255 = vector.shape_cast %252 : vector<4x128xbf16> to vector<1x1x4x128xbf16>
    tpu.vector_store %arg5[%c0_189, %c15, %c0_190, %c0_191], %255 {strides = array<i32>} : memref<1x16x4x128xbf16, #tpu.memory_space<vmem>>, vector<1x1x4x128xbf16>,
    return
  }
  func.func @transform_0(%arg0: i32, %arg1: i32) -> (i32, i32) {
    %c0_i32 = arith.constant 0 : i32
    %c0_i32_0 = arith.constant 0 : i32
    %c0_i32_1 = arith.constant 0 : i32
    return %c0_i32, %c0_i32_0 : i32, i32
  }
  func.func @transform_1(%arg0: i32, %arg1: i32) -> (i32, i32) {
    %c0_i32 = arith.constant 0 : i32
    %c0_i32_0 = arith.constant 0 : i32
    %c0_i32_1 = arith.constant 0 : i32
    return %c0_i32, %c0_i32_0 : i32, i32
  }
  func.func @transform_2(%arg0: i32, %arg1: i32) -> (i32, i32, i32) {
    %c0_i32 = arith.constant 0 : i32
    %c0_i32_0 = arith.constant 0 : i32
    return %arg0, %c0_i32, %arg1 : i32, i32, i32
  }
  func.func @transform_3(%arg0: i32, %arg1: i32) -> (i32, i32, i32, i32) {
    %c0_i32 = arith.constant 0 : i32
    %c0_i32_0 = arith.constant 0 : i32
    %c0_i32_1 = arith.constant 0 : i32
    return %arg0, %arg1, %c0_i32, %c0_i32_0 : i32, i32, i32, i32
  }
}

</mosaic_0001>

<llo_original>
// kernel: tpu_custom_call.1
$region0: #{tpu_custom_call.1}
  #allocation0 [shape = 'u32[]', space=smem, size = 0x4, offset = 0x4, fixed_abs, tag = 'smem constant byte address 0x4 - core index']
  #allocation1 [shape = 'u32[144,128]{1,0:T(1,128)}', space=vmem, size = 0x12000, scoped, tag = 'internal scratch']
  %s0 = inlined_call_operand.hbm [shape: bf16[4,176], index: 0, kind: input, shape index: {}]
  %s1 = inlined_call_operand.vmem [shape: f32[4,1], index: 1, kind: input, shape index: {}]
  %s2 = inlined_call_operand.hbm [shape: bf16[2,176,2048], index: 2, kind: input, shape index: {}]
  %s3 = inlined_call_operand.hbm [shape: bf16[2,16,4,128], index: 3, kind: output, shape index: {}]
  %s4 = sld [smem:[#allocation0]]
  $region53: #{tpu_custom_call.1} parent=0
    _
  %s6 = ssub.s32 1, %s4
  %s7 = scalar_select 0, %s6, %s4
  $region1: #{tpu_custom_call.1} parent=0
    #allocation2 [shape = 'u8[2048]{0}', space=vmem, size = 0x800, scoped, tag = 'input window, operand 0, single buffered']
    #allocation3 [shape = 's32[2]{0}', space=sflag, size = 0x8, scoped, tag = 'scoped memory for tpu_custom_call.1']
    #allocation4 [shape = 's32[2]{0}', space=sflag, size = 0x8, scoped, tag = 'scoped memory for tpu_custom_call.1']
    #allocation5 [shape = 'u8[1441792]{0}', space=vmem, size = 0x160000, scoped, tag = 'input window, operand 2']
    #allocation6 [shape = 's32[2]{0}', space=sflag, size = 0x8, scoped, tag = 'scoped memory for tpu_custom_call.1']
    #allocation7 [shape = 'u8[32768]{0}', space=vmem, size = 0x8000, scoped, tag = 'output window, operand 0']
    %8 = vsyncpa [#allocation3], 0
    %9 = vsyncpa [#allocation6], 0
    %s10 = scalar_lea.sflag [#allocation6], 1
    %11 = vsyncpa %s10, 0
    %12 = vsyncpa [#allocation4], 0
    %s13 = scalar_lea.sflag [#allocation4], 1
    %14 = vsyncpa %s13, 0
    loop: start=0, step=1, limit=4
    $region2: #{tpu_custom_call.1} parent=1 // loop_pre_header
      _
    $region3: #{tpu_custom_call.1} parent=1 // loop_header
      %s16 = sphi 0, %s20
      %p17 = scmp.ge.s32.totalorder %s16, 4
      %s23 = sphi 0, %s35
      %s24 = sphi 0, %s31
      %s25 = sphi 0, %s23
      %s26 = sphi 0, %s24
      %s27 = sphi 0, %s25
      %s28 = sphi 0, %s26
      %s36 = sphi 0, %s36
      %s38 = sphi 0, %s36
      %s39 = sphi 0, %s38
      %s53 = sphi 0, %s39
      %s57 = sphi 0, %s57
      %s59 = sphi 0, %s57
      %s60 = sphi 0, %s59
      %s74 = sphi 0, %s60
      %s82 = sphi 0, %s84
      %s85 = sphi 0, %s82
      %s86 = sphi 0, %s85
      %s102 = sphi 0, %s86
      %s110 = sphi 0, %s112
      %s113 = sphi 0, %s110
      %s114 = sphi 0, %s113
      %s130 = sphi 0, %s114
    $region4: #{tpu_custom_call.1} parent=1 // loop_header_branch
      %19 = sbr.rel (%p17) target = $region8
    $region5: #{tpu_custom_call.1} parent=1 // loop_body
      %s21 = ssub.s32 %s16, 1
      %s22 = ssub.s32 %s16, 2
      %s29 = sadd.s32 1, %s24
      %p30 = scmp.ge.s32.totalorder %s29, 1
      %s31 = scalar_select %p30, 0, %s29
      %s32 = sadd.s32 1, %s23
      %s33 = scalar_select %p30, %s32, %s23
      %p34 = scmp.ge.s32.totalorder %s33, 2
      %s35 = scalar_select %p34, 0, %s33
      %s37 = sadd.s32 %s36, 1
      %p40 = scmp.eq.s32.totalorder %s16, 1
      %p41 = scmp.ne.s32.totalorder %s36, %s38
      %p42 = scmp.eq.s32.totalorder %s16, 0
      %p43 = por %p41, %p42
      %p44 = scmp.ne.s32.totalorder %s36, %s38
      %p45 = scmp.eq.s32.totalorder %s21, 1
      %p46 = por %p44, %p45
      %p47 = scmp.ne.s32.totalorder %s38, %s39
      %p48 = scmp.eq.s32.totalorder %s21, 0
      %p49 = por %p47, %p48
      %p50 = scmp.ne.s32.totalorder %s38, %s39
      %p51 = scmp.eq.s32.totalorder %s22, 1
      %p52 = por %p50, %p51
      %p54 = scmp.ne.s32.totalorder %s39, %s53
      %p55 = scmp.eq.s32.totalorder %s22, 0
      %p56 = por %p54, %p55
      %s58 = sadd.s32 %s57, 1
      %p61 = scmp.eq.s32.totalorder %s16, 1
      %p62 = scmp.ne.s32.totalorder %s57, %s59
      %p63 = scmp.eq.s32.totalorder %s16, 0
      %p64 = por %p62, %p63
      %p65 = scmp.ne.s32.totalorder %s57, %s59
      %p66 = scmp.eq.s32.totalorder %s21, 1
      %p67 = por %p65, %p66
      %p68 = scmp.ne.s32.totalorder %s59, %s60
      %p69 = scmp.eq.s32.totalorder %s21, 0
      %p70 = por %p68, %p69
      %p71 = scmp.ne.s32.totalorder %s59, %s60
      %p72 = scmp.eq.s32.totalorder %s22, 1
      %p73 = por %p71, %p72
      %p75 = scmp.ne.s32.totalorder %s60, %s74
      %p76 = scmp.eq.s32.totalorder %s22, 0
      %p77 = por %p75, %p76
      %s78 = ssub.s32 %s23, %s35
      %s79 = ssub.s32 %s24, %s31
      %s80 = sor.u32 %s78, %s79
      %p81 = scmp.eq.s32.totalorder %s80, 0
      %s83 = sadd.s32 %s82, 1
      %s84 = scalar_select %p81, %s82, %s83
      %p87 = pneg %p81
      %p88 = scmp.eq.s32.totalorder %s16, 1
      %p89 = por %p87, %p88
      %p90 = scmp.ne.s32.totalorder %s82, %s85
      %p91 = scmp.eq.s32.totalorder %s16, 0
      %p92 = por %p90, %p91
      %p93 = scmp.ne.s32.totalorder %s82, %s85
      %p94 = scmp.eq.s32.totalorder %s21, 1
      %p95 = por %p93, %p94
      %p96 = scmp.ne.s32.totalorder %s85, %s86
      %p97 = scmp.eq.s32.totalorder %s21, 0
      %p98 = por %p96, %p97
      %p99 = scmp.ne.s32.totalorder %s85, %s86
      %p100 = scmp.eq.s32.totalorder %s22, 1
      %p101 = por %p99, %p100
      %p103 = scmp.ne.s32.totalorder %s86, %s102
      %p104 = scmp.eq.s32.totalorder %s22, 0
      %p105 = por %p103, %p104
      %s106 = ssub.s32 %s23, %s35
      %s107 = ssub.s32 %s24, %s31
      %s108 = sor.u32 %s106, %s107
      %p109 = scmp.eq.s32.totalorder %s108, 0
      %s111 = sadd.s32 %s110, 1
      %s112 = scalar_select %p109, %s110, %s111
      %p115 = pneg %p109
      %p116 = scmp.eq.s32.totalorder %s16, 1
      %p117 = por %p115, %p116
      %p118 = scmp.ne.s32.totalorder %s110, %s113
      %p119 = scmp.eq.s32.totalorder %s16, 0
      %p120 = por %p118, %p119
      %p121 = scmp.ne.s32.totalorder %s110, %s113
      %p122 = scmp.eq.s32.totalorder %s21, 1
      %p123 = por %p121, %p122
      %p124 = scmp.ne.s32.totalorder %s113, %s114
      %p125 = scmp.eq.s32.totalorder %s21, 0
      %p126 = por %p124, %p125
      %p127 = scmp.ne.s32.totalorder %s113, %s114
      %p128 = scmp.eq.s32.totalorder %s22, 1
      %p129 = por %p127, %p128
      %p131 = scmp.ne.s32.totalorder %s114, %s130
      %p132 = scmp.eq.s32.totalorder %s22, 0
      %p133 = por %p131, %p132
      %p134 = scmp.le.s32.totalorder 1, %s16
      %p135 = scmp.lt.s32.totalorder %s16, 3
      %p136 = pnand %p134, %p135
      %p137 = pneg %p136
      // Predicated region
      $region9: #{tpu_custom_call.1} parent=5 // pred_check
        _
      $region10: #{tpu_custom_call.1} parent=5 // pred_check_branch
        %139 = sbr.rel (%p136) target = $region12
      $region11: #{tpu_custom_call.1} parent=5 // pred_region
        %s140 = ssub.s32 %s16, 1
        // Predicated region
        $region13: #{tpu_custom_call.1} parent=11 // pred_check
          %p141 = pneg %p49
        $region14: #{tpu_custom_call.1} parent=11 // pred_check_branch
          %143 = sbr.rel (%p141) target = $region16
        $region15: #{tpu_custom_call.1} parent=11 // pred_region
          %s145 = ssub.s32 64, 64
          %146 = vsyncadd [#allocation3], %s145
          %s148 = sshll.u32 [#allocation2], 4
          %s149 = int_to_ptr.vmem [resolvable:$true] %s148
          %151 = dma.hbm_to_vmem [thread:$0]  %s0, 64, %s149, [#allocation3]
        $region16: #{tpu_custom_call.1} parent=11 // pred_fallthru
          _
        // Predicated region
        $region17: #{tpu_custom_call.1} parent=11 // pred_check
          %p152 = pneg %p70
        $region18: #{tpu_custom_call.1} parent=11 // pred_check_branch
          %154 = sbr.rel (%p152) target = $region20
        $region19: #{tpu_custom_call.1} parent=11 // pred_region
          _
        $region20: #{tpu_custom_call.1} parent=11 // pred_fallthru
          _
      $region12: #{tpu_custom_call.1} parent=5 // pred_fallthru
        _
      %p155 = scmp.lt.s32.totalorder %s16, 2
      // Predicated region
      $region21: #{tpu_custom_call.1} parent=5 // pred_check
        %p156 = pneg %p155
      $region22: #{tpu_custom_call.1} parent=5 // pred_check_branch
        %158 = sbr.rel (%p156) target = $region24
      $region23: #{tpu_custom_call.1} parent=5 // pred_region
        // Predicated region
        $region25: #{tpu_custom_call.1} parent=23 // pred_check
          %p159 = pneg %p92
        $region26: #{tpu_custom_call.1} parent=23 // pred_check_branch
          %161 = sbr.rel (%p159) target = $region28
        $region27: #{tpu_custom_call.1} parent=23 // pred_region
          %s162 = sand.u32 %s82, 1
          %s163 = scalar_lea.sflag [#allocation6], %s162
          %s164 = sand.u32 %s82, 1
          %s165 = smul.addr %s164, 1408
          %s166 = scalar_lea.vmem [#allocation5], %s165
          %s167 = smul.u32 16, %s24
          %s169 = ssub.s32 22528, 22528
          %170 = vsyncadd %s163, %s169
          %s171 = smul.addr %s23, 352
          %s172 = sadd.s32 %s167, %s171
          %s173 = smul.addr %s172, 64
          %s174 = scalar_lea.hbm %s2, %s173
          %s175 = sshll.u32 %s166, 4
          %s176 = int_to_ptr.vmem [resolvable:$true] %s175
          %181 = dma.hbm_to_vmem [thread:$0]  %s174, 22528, %s176, %s163, 1024, 1024, 64
        $region28: #{tpu_custom_call.1} parent=23 // pred_fallthru
          _
      $region24: #{tpu_custom_call.1} parent=5 // pred_fallthru
        _
      %p182 = scmp.le.s32.totalorder 1, %s16
      %p183 = scmp.lt.s32.totalorder %s16, 3
      %p184 = pnand %p182, %p183
      %p185 = pneg %p184
      // Predicated region
      $region29: #{tpu_custom_call.1} parent=5 // pred_check
        _
      $region30: #{tpu_custom_call.1} parent=5 // pred_check_branch
        %187 = sbr.rel (%p184) target = $region32
      $region31: #{tpu_custom_call.1} parent=5 // pred_region
        %s188 = ssub.s32 %s16, 1
        // Predicated region
        $region33: #{tpu_custom_call.1} parent=31 // pred_check
          %p189 = pneg %p49
        $region34: #{tpu_custom_call.1} parent=31 // pred_check_branch
          %191 = sbr.rel (%p189) target = $region36
        $region35: #{tpu_custom_call.1} parent=31 // pred_region
          %192 = dma.done [#allocation3], 64
        $region36: #{tpu_custom_call.1} parent=31 // pred_fallthru
          _
        %s193 = sand.u32 %s85, 1
        %s194 = scalar_lea.sflag [#allocation6], %s193
        %s195 = sand.u32 %s85, 1
        %s196 = smul.addr %s195, 1408
        %s197 = scalar_lea.vmem [#allocation5], %s196
        // Predicated region
        $region37: #{tpu_custom_call.1} parent=31 // pred_check
          %p198 = pneg %p98
        $region38: #{tpu_custom_call.1} parent=31 // pred_check_branch
          %200 = sbr.rel (%p198) target = $region40
        $region39: #{tpu_custom_call.1} parent=31 // pred_region
          %201 = dma.done %s194, 22528
        $region40: #{tpu_custom_call.1} parent=31 // pred_fallthru
          _
        %p202 = pneg %p49
        %p203 = pneg %p46
        %p204 = pneg %p70
        %p205 = pneg %p67
        %s206 = sand.u32 %s85, 1
        %s207 = scalar_lea.sflag [#allocation6], %s206
        %s208 = sand.u32 %s85, 1
        %s209 = smul.addr %s208, 1408
        %s210 = scalar_lea.vmem [#allocation5], %s209
        %p211 = pneg %p98
        %p212 = pneg %p95
        %p213 = pneg %p126
        %p214 = pneg %p123
        %s215 = sand.u32 %s113, 1
        %s216 = scalar_lea.sflag [#allocation4], %s215
        %s217 = sand.u32 %s113, 1
        %s218 = smul.addr %s217, 32
        %s219 = scalar_lea.vmem [#allocation7], %s218
        %s220 = smul.u32 16, %s26
        %s221 = smul.u32 16, %s26
        %v223 = vld [vmem:[#allocation2] sm:$0xf]
        %v224 = vld [vmem:[%s197] sm:$0xf]
        %v225 = vld [vmem:[%s197 + $0x40] sm:$0xf]
        %v226 = vld [vmem:[%s197 + $0x80] sm:$0xf]
        %v227 = vld [vmem:[%s197 + $0xc0] sm:$0xf]
        %v228 = vld [vmem:[%s197 + $0x100] sm:$0xf]
        %v229 = vld [vmem:[%s197 + $0x140] sm:$0xf]
        %v230 = vld [vmem:[%s197 + $0x180] sm:$0xf]
        %v231 = vld [vmem:[%s197 + $0x1c0] sm:$0xf]
        %v232 = vld [vmem:[%s197 + $0x200] sm:$0xf]
        %v233 = vld [vmem:[%s197 + $0x240] sm:$0xf]
        %v234 = vld [vmem:[%s197 + $0x280] sm:$0xf]
        %v235 = vld [vmem:[%s197 + $0x2c0] sm:$0xf]
        %v236 = vld [vmem:[%s197 + $0x300] sm:$0xf]
        %v237 = vld [vmem:[%s197 + $0x340] sm:$0xf]
        %v238 = vld [vmem:[%s197 + $0x380] sm:$0xf]
        %v239 = vld [vmem:[%s197 + $0x3c0] sm:$0xf]
        %v240 = vld [vmem:[%s197 + $0x400] sm:$0xf]
        %v241 = vld [vmem:[%s197 + $0x440] sm:$0xf]
        %v242 = vld [vmem:[%s197 + $0x480] sm:$0xf]
        %v243 = vld [vmem:[%s197 + $0x4c0] sm:$0xf]
        %v244 = vld [vmem:[%s197 + $0x500] sm:$0xf]
        %v245 = vld [vmem:[%s197 + $0x540] sm:$0xf]
        %v246 = vld [vmem:[%s1] sm:$0xf]
        %248 = vset.pattern.permute.xlu0 0
        %249 = vperm.xlu0 %248, %v246
        %v250 = vpop.permute.xlu0 %249
        %v254 = vunpack.c.l.s4 1983009808
        %v255 = vunpack.c.0.s8 %v254
        %v256 = vlaneseq
        %v257 = vshrl.u32 %v256, 7
        %v258 = vsub.s32 %v255, %v257
        %v259 = vrot.slane %v223, %v258
        %v260 = vcombine.high %v259, %v259
        %v284 = vunpack.c.l.b16 %v224
        %v285 = vunpack.c.l.b16 %v225
        %v286 = vunpack.c.l.b16 %v226
        %v287 = vunpack.c.l.b16 %v227
        %v288 = vunpack.c.l.b16 %v228
        %v289 = vunpack.c.l.b16 %v229
        %v290 = vunpack.c.l.b16 %v230
        %v291 = vunpack.c.l.b16 %v231
        %v292 = vunpack.c.l.b16 %v232
        %v293 = vunpack.c.l.b16 %v233
        %v294 = vunpack.c.l.b16 %v234
        %v295 = vunpack.c.l.b16 %v235
        %v296 = vunpack.c.l.b16 %v236
        %v297 = vunpack.c.l.b16 %v237
        %v298 = vunpack.c.l.b16 %v238
        %v299 = vunpack.c.l.b16 %v239
        %v300 = vunpack.c.l.b16 %v240
        %v301 = vunpack.c.l.b16 %v241
        %v302 = vunpack.c.l.b16 %v242
        %v303 = vunpack.c.l.b16 %v243
        %v304 = vunpack.c.l.b16 %v244
        %v305 = vunpack.c.l.b16 %v245
        %v306 = vpack.c.b16 %v285, %v284
        %v307 = vpack.c.b16 %v287, %v286
        %v308 = vpack.c.b16 %v289, %v288
        %v309 = vpack.c.b16 %v291, %v290
        %v310 = vpack.c.b16 %v293, %v292
        %v311 = vpack.c.b16 %v295, %v294
        %v312 = vpack.c.b16 %v297, %v296
        %v313 = vpack.c.b16 %v299, %v298
        %v314 = vpack.c.b16 %v301, %v300
        %v315 = vpack.c.b16 %v303, %v302
        %v316 = vpack.c.b16 %v305, %v304
        %vm328 = vcmask 392192
        %v330 = vsel %vm328, %v260, 0
        %332 = vmatprep.subr.bf16.mxu0 0
        %333 = vmatpush1.bf16.msra.mxu0 %v306
        %334 = vmatprep.subr.bf16.mxu0 0
        %335 = vmatpush1.bf16.msra.mxu0 %v307
        %336 = vmatprep.subr.bf16.mxu0 0
        %337 = vmatpush1.bf16.msra.mxu0 %v308
        %338 = vmatprep.subr.bf16.mxu0 0
        %339 = vmatpush1.bf16.msra.mxu0 %v309
        %340 = vmatprep.subr.bf16.mxu0 0
        %341 = vmatpush1.bf16.msra.mxu0 %v310
        %342 = vmatprep.subr.bf16.mxu0 0
        %343 = vmatpush1.bf16.msra.mxu0 %v311
        %344 = vmatprep.subr.bf16.mxu0 0
        %345 = vmatpush1.bf16.msra.mxu0 %v312
        %346 = vmatprep.subr.bf16.mxu0 0
        %347 = vmatpush1.bf16.msra.mxu0 %v313
        %348 = vmatprep.subr.bf16.mxu0 0
        %349 = vmatpush1.bf16.msra.mxu0 %v314
        %350 = vmatprep.subr.bf16.mxu0 0
        %351 = vmatpush1.bf16.msra.mxu0 %v315
        %352 = vmatprep.subr.bf16.mxu0 0
        %353 = vmatpush1.bf16.msra.mxu0 %v316
        %354 = vmatprep.subr.bf16.mxu0 0
        %355 = vmatpush1.bf16.msra.mxu0 0
        %356 = vmatprep.subr.bf16.mxu0 0
        %357 = vmatpush1.bf16.msra.mxu0 0
        %358 = vmatprep.subr.bf16.mxu0 0
        %359 = vmatpush1.bf16.msra.mxu0 0
        %360 = vmatprep.subr.bf16.mxu0 0
        %361 = vmatpush1.bf16.msra.mxu0 0
        %362 = vmatprep.subr.bf16.mxu0 0
        %363 = vmatpush1.bf16.msra.mxu0 0
        %364 = vmatprep.mubr.bf16.mxu0 %v330
        %365 = vmatmul.mubr.bf16.gmra.mrb[0].mxu0 %v259
        %v366 = vpop.f32.mrb[0].mxu0
        %v367 = vadd.f32 %v250, %v366
        %v368 = vpop.f32.mrb[0].mxu0
        %v369 = vpop.f32.mrb[0].mxu0
        %v370 = vpop.f32.mrb[0].mxu0
        %371 = vdwg.mxu0
        %vm372 = vcmp.ge.f32.partialorder %v367, 0.0
        %v373 = vmul.f32 %v367, 0.01
        %v374 = vsel %vm372, %v367, %v373
        %v375 = vpack.c.bf16 %v374, %v374
        %376 = vst [vmem:[%s219] sm:$0x3] %v375
        %v377 = vld [vmem:[#allocation2] sm:$0xf]
        %v378 = vld [vmem:[%s197 + $0x4] sm:$0xf]
        %v379 = vld [vmem:[%s197 + $0x44] sm:$0xf]
        %v380 = vld [vmem:[%s197 + $0x84] sm:$0xf]
        %v381 = vld [vmem:[%s197 + $0xc4] sm:$0xf]
        %v382 = vld [vmem:[%s197 + $0x104] sm:$0xf]
        %v383 = vld [vmem:[%s197 + $0x144] sm:$0xf]
        %v384 = vld [vmem:[%s197 + $0x184] sm:$0xf]
        %v385 = vld [vmem:[%s197 + $0x1c4] sm:$0xf]
        %v386 = vld [vmem:[%s197 + $0x204] sm:$0xf]
        %v387 = vld [vmem:[%s197 + $0x244] sm:$0xf]
        %v388 = vld [vmem:[%s197 + $0x284] sm:$0xf]
        %v389 = vld [vmem:[%s197 + $0x2c4] sm:$0xf]
        %v390 = vld [vmem:[%s197 + $0x304] sm:$0xf]
        %v391 = vld [vmem:[%s197 + $0x344] sm:$0xf]
        %v392 = vld [vmem:[%s197 + $0x384] sm:$0xf]
        %v393 = vld [vmem:[%s197 + $0x3c4] sm:$0xf]
        %v394 = vld [vmem:[%s197 + $0x404] sm:$0xf]
        %v395 = vld [vmem:[%s197 + $0x444] sm:$0xf]
        %v396 = vld [vmem:[%s197 + $0x484] sm:$0xf]
        %v397 = vld [vmem:[%s197 + $0x4c4] sm:$0xf]
        %v398 = vld [vmem:[%s197 + $0x504] sm:$0xf]
        %v399 = vld [vmem:[%s197 + $0x544] sm:$0xf]
        %v400 = vld [vmem:[%s1] sm:$0xf]
        %402 = vset.pattern.permute.xlu0 0
        %403 = vperm.xlu0 %402, %v400
        %v404 = vpop.permute.xlu0 %403
        %v408 = vunpack.c.l.s4 1983009808
        %v409 = vunpack.c.0.s8 %v408
        %v410 = vlaneseq
        %v411 = vshrl.u32 %v410, 7
        %v412 = vsub.s32 %v409, %v411
        %v413 = vrot.slane %v377, %v412
        %v414 = vcombine.high %v413, %v413
        %v438 = vunpack.c.l.b16 %v378
        %v439 = vunpack.c.l.b16 %v379
        %v440 = vunpack.c.l.b16 %v380
        %v441 = vunpack.c.l.b16 %v381
        %v442 = vunpack.c.l.b16 %v382
        %v443 = vunpack.c.l.b16 %v383
        %v444 = vunpack.c.l.b16 %v384
        %v445 = vunpack.c.l.b16 %v385
        %v446 = vunpack.c.l.b16 %v386
        %v447 = vunpack.c.l.b16 %v387
        %v448 = vunpack.c.l.b16 %v388
        %v449 = vunpack.c.l.b16 %v389
        %v450 = vunpack.c.l.b16 %v390
        %v451 = vunpack.c.l.b16 %v391
        %v452 = vunpack.c.l.b16 %v392
        %v453 = vunpack.c.l.b16 %v393
        %v454 = vunpack.c.l.b16 %v394
        %v455 = vunpack.c.l.b16 %v395
        %v456 = vunpack.c.l.b16 %v396
        %v457 = vunpack.c.l.b16 %v397
        %v458 = vunpack.c.l.b16 %v398
        %v459 = vunpack.c.l.b16 %v399
        %v460 = vpack.c.b16 %v439, %v438
        %v461 = vpack.c.b16 %v441, %v440
        %v462 = vpack.c.b16 %v443, %v442
        %v463 = vpack.c.b16 %v445, %v444
        %v464 = vpack.c.b16 %v447, %v446
        %v465 = vpack.c.b16 %v449, %v448
        %v466 = vpack.c.b16 %v451, %v450
        %v467 = vpack.c.b16 %v453, %v452
        %v468 = vpack.c.b16 %v455, %v454
        %v469 = vpack.c.b16 %v457, %v456
        %v470 = vpack.c.b16 %v459, %v458
        %v483 = vsel %vm328, %v414, 0
        %485 = vmatprep.subr.bf16.mxu0 0
        %486 = vmatpush1.bf16.msra.mxu0 %v460
        %487 = vmatprep.subr.bf16.mxu0 0
        %488 = vmatpush1.bf16.msra.mxu0 %v461
        %489 = vmatprep.subr.bf16.mxu0 0
        %490 = vmatpush1.bf16.msra.mxu0 %v462
        %491 = vmatprep.subr.bf16.mxu0 0
        %492 = vmatpush1.bf16.msra.mxu0 %v463
        %493 = vmatprep.subr.bf16.mxu0 0
        %494 = vmatpush1.bf16.msra.mxu0 %v464
        %495 = vmatprep.subr.bf16.mxu0 0
        %496 = vmatpush1.bf16.msra.mxu0 %v465
        %497 = vmatprep.subr.bf16.mxu0 0
        %498 = vmatpush1.bf16.msra.mxu0 %v466
        %499 = vmatprep.subr.bf16.mxu0 0
        %500 = vmatpush1.bf16.msra.mxu0 %v467
        %501 = vmatprep.subr.bf16.mxu0 0
        %502 = vmatpush1.bf16.msra.mxu0 %v468
        %503 = vmatprep.subr.bf16.mxu0 0
        %504 = vmatpush1.bf16.msra.mxu0 %v469
        %505 = vmatprep.subr.bf16.mxu0 0
        %506 = vmatpush1.bf16.msra.mxu0 %v470
        %507 = vmatprep.subr.bf16.mxu0 0
        %508 = vmatpush1.bf16.msra.mxu0 0
        %509 = vmatprep.subr.bf16.mxu0 0
        %510 = vmatpush1.bf16.msra.mxu0 0
        %511 = vmatprep.subr.bf16.mxu0 0
        %512 = vmatpush1.bf16.msra.mxu0 0
        %513 = vmatprep.subr.bf16.mxu0 0
        %514 = vmatpush1.bf16.msra.mxu0 0
        %515 = vmatprep.subr.bf16.mxu0 0
        %516 = vmatpush1.bf16.msra.mxu0 0
        %517 = vmatprep.mubr.bf16.mxu0 %v483
        %518 = vmatmul.mubr.bf16.gmra.mrb[0].mxu0 %v413
        %v519 = vpop.f32.mrb[0].mxu0
        %v520 = vadd.f32 %v404, %v519
        %v521 = vpop.f32.mrb[0].mxu0
        %v522 = vpop.f32.mrb[0].mxu0
        %v523 = vpop.f32.mrb[0].mxu0
        %524 = vdwg.mxu0
        %vm525 = vcmp.ge.f32.partialorder %v520, 0.0
        %v526 = vmul.f32 %v520, 0.01
        %v527 = vsel %vm525, %v520, %v526
        %v528 = vpack.c.bf16 %v527, %v527
        %s529 = scalar_lea.vmem %s219, 2 [#allocation7]
        %530 = vst [vmem:[%s529] sm:$0x3] %v528
        %v531 = vld [vmem:[#allocation2] sm:$0xf]
        %v532 = vld [vmem:[%s197 + $0x8] sm:$0xf]
        %v533 = vld [vmem:[%s197 + $0x48] sm:$0xf]
        %v534 = vld [vmem:[%s197 + $0x88] sm:$0xf]
        %v535 = vld [vmem:[%s197 + $0xc8] sm:$0xf]
        %v536 = vld [vmem:[%s197 + $0x108] sm:$0xf]
        %v537 = vld [vmem:[%s197 + $0x148] sm:$0xf]
        %v538 = vld [vmem:[%s197 + $0x188] sm:$0xf]
        %v539 = vld [vmem:[%s197 + $0x1c8] sm:$0xf]
        %v540 = vld [vmem:[%s197 + $0x208] sm:$0xf]
        %v541 = vld [vmem:[%s197 + $0x248] sm:$0xf]
        %v542 = vld [vmem:[%s197 + $0x288] sm:$0xf]
        %v543 = vld [vmem:[%s197 + $0x2c8] sm:$0xf]
        %v544 = vld [vmem:[%s197 + $0x308] sm:$0xf]
        %v545 = vld [vmem:[%s197 + $0x348] sm:$0xf]
        %v546 = vld [vmem:[%s197 + $0x388] sm:$0xf]
        %v547 = vld [vmem:[%s197 + $0x3c8] sm:$0xf]
        %v548 = vld [vmem:[%s197 + $0x408] sm:$0xf]
        %v549 = vld [vmem:[%s197 + $0x448] sm:$0xf]
        %v550 = vld [vmem:[%s197 + $0x488] sm:$0xf]
        %v551 = vld [vmem:[%s197 + $0x4c8] sm:$0xf]
        %v552 = vld [vmem:[%s197 + $0x508] sm:$0xf]
        %v553 = vld [vmem:[%s197 + $0x548] sm:$0xf]
        %v554 = vld [vmem:[%s1] sm:$0xf]
        %556 = vset.pattern.permute.xlu0 0
        %557 = vperm.xlu0 %556, %v554
        %v558 = vpop.permute.xlu0 %557
        %v562 = vunpack.c.l.s4 1983009808
        %v563 = vunpack.c.0.s8 %v562
        %v564 = vlaneseq
        %v565 = vshrl.u32 %v564, 7
        %v566 = vsub.s32 %v563, %v565
        %v567 = vrot.slane %v531, %v566
        %v568 = vcombine.high %v567, %v567
        %v592 = vunpack.c.l.b16 %v532
        %v593 = vunpack.c.l.b16 %v533
        %v594 = vunpack.c.l.b16 %v534
        %v595 = vunpack.c.l.b16 %v535
        %v596 = vunpack.c.l.b16 %v536
        %v597 = vunpack.c.l.b16 %v537
        %v598 = vunpack.c.l.b16 %v538
        %v599 = vunpack.c.l.b16 %v539
        %v600 = vunpack.c.l.b16 %v540
        %v601 = vunpack.c.l.b16 %v541
        %v602 = vunpack.c.l.b16 %v542
        %v603 = vunpack.c.l.b16 %v543
        %v604 = vunpack.c.l.b16 %v544
        %v605 = vunpack.c.l.b16 %v545
        %v606 = vunpack.c.l.b16 %v546
        %v607 = vunpack.c.l.b16 %v547
        %v608 = vunpack.c.l.b16 %v548
        %v609 = vunpack.c.l.b16 %v549
        %v610 = vunpack.c.l.b16 %v550
        %v611 = vunpack.c.l.b16 %v551
        %v612 = vunpack.c.l.b16 %v552
        %v613 = vunpack.c.l.b16 %v553
        %v614 = vpack.c.b16 %v593, %v592
        %v615 = vpack.c.b16 %v595, %v594
        %v616 = vpack.c.b16 %v597, %v596
        %v617 = vpack.c.b16 %v599, %v598
        %v618 = vpack.c.b16 %v601, %v600
        %v619 = vpack.c.b16 %v603, %v602
        %v620 = vpack.c.b16 %v605, %v604
        %v621 = vpack.c.b16 %v607, %v606
        %v622 = vpack.c.b16 %v609, %v608
        %v623 = vpack.c.b16 %v611, %v610
        %v624 = vpack.c.b16 %v613, %v612
        %v637 = vsel %vm328, %v568, 0
        %639 = vmatprep.subr.bf16.mxu0 0
        %640 = vmatpush1.bf16.msra.mxu0 %v614
        %641 = vmatprep.subr.bf16.mxu0 0
        %642 = vmatpush1.bf16.msra.mxu0 %v615
        %643 = vmatprep.subr.bf16.mxu0 0
        %644 = vmatpush1.bf16.msra.mxu0 %v616
        %645 = vmatprep.subr.bf16.mxu0 0
        %646 = vmatpush1.bf16.msra.mxu0 %v617
        %647 = vmatprep.subr.bf16.mxu0 0
        %648 = vmatpush1.bf16.msra.mxu0 %v618
        %649 = vmatprep.subr.bf16.mxu0 0
        %650 = vmatpush1.bf16.msra.mxu0 %v619
        %651 = vmatprep.subr.bf16.mxu0 0
        %652 = vmatpush1.bf16.msra.mxu0 %v620
        %653 = vmatprep.subr.bf16.mxu0 0
        %654 = vmatpush1.bf16.msra.mxu0 %v621
        %655 = vmatprep.subr.bf16.mxu0 0
        %656 = vmatpush1.bf16.msra.mxu0 %v622
        %657 = vmatprep.subr.bf16.mxu0 0
        %658 = vmatpush1.bf16.msra.mxu0 %v623
        %659 = vmatprep.subr.bf16.mxu0 0
        %660 = vmatpush1.bf16.msra.mxu0 %v624
        %661 = vmatprep.subr.bf16.mxu0 0
        %662 = vmatpush1.bf16.msra.mxu0 0
        %663 = vmatprep.subr.bf16.mxu0 0
        %664 = vmatpush1.bf16.msra.mxu0 0
        %665 = vmatprep.subr.bf16.mxu0 0
        %666 = vmatpush1.bf16.msra.mxu0 0
        %667 = vmatprep.subr.bf16.mxu0 0
        %668 = vmatpush1.bf16.msra.mxu0 0
        %669 = vmatprep.subr.bf16.mxu0 0
        %670 = vmatpush1.bf16.msra.mxu0 0
        %671 = vmatprep.mubr.bf16.mxu0 %v637
        %672 = vmatmul.mubr.bf16.gmra.mrb[0].mxu0 %v567
        %v673 = vpop.f32.mrb[0].mxu0
        %v674 = vadd.f32 %v558, %v673
        %v675 = vpop.f32.mrb[0].mxu0
        %v676 = vpop.f32.mrb[0].mxu0
        %v677 = vpop.f32.mrb[0].mxu0
        %678 = vdwg.mxu0
        %vm679 = vcmp.ge.f32.partialorder %v674, 0.0
        %v680 = vmul.f32 %v674, 0.01
        %v681 = vsel %vm679, %v674, %v680
        %v682 = vpack.c.bf16 %v681, %v681
        %s683 = scalar_lea.vmem %s219, 4 [#allocation7]
        %684 = vst [vmem:[%s683] sm:$0x3] %v682
        %v685 = vld [vmem:[#allocation2] sm:$0xf]
        %v686 = vld [vmem:[%s197 + $0xc] sm:$0xf]
        %v687 = vld [vmem:[%s197 + $0x4c] sm:$0xf]
        %v688 = vld [vmem:[%s197 + $0x8c] sm:$0xf]
        %v689 = vld [vmem:[%s197 + $0xcc] sm:$0xf]
        %v690 = vld [vmem:[%s197 + $0x10c] sm:$0xf]
        %v691 = vld [vmem:[%s197 + $0x14c] sm:$0xf]
        %v692 = vld [vmem:[%s197 + $0x18c] sm:$0xf]
        %v693 = vld [vmem:[%s197 + $0x1cc] sm:$0xf]
        %v694 = vld [vmem:[%s197 + $0x20c] sm:$0xf]
        %v695 = vld [vmem:[%s197 + $0x24c] sm:$0xf]
        %v696 = vld [vmem:[%s197 + $0x28c] sm:$0xf]
        %v697 = vld [vmem:[%s197 + $0x2cc] sm:$0xf]
        %v698 = vld [vmem:[%s197 + $0x30c] sm:$0xf]
        %v699 = vld [vmem:[%s197 + $0x34c] sm:$0xf]
        %v700 = vld [vmem:[%s197 + $0x38c] sm:$0xf]
        %v701 = vld [vmem:[%s197 + $0x3cc] sm:$0xf]
        %v702 = vld [vmem:[%s197 + $0x40c] sm:$0xf]
        %v703 = vld [vmem:[%s197 + $0x44c] sm:$0xf]
        %v704 = vld [vmem:[%s197 + $0x48c] sm:$0xf]
        %v705 = vld [vmem:[%s197 + $0x4cc] sm:$0xf]
        %v706 = vld [vmem:[%s197 + $0x50c] sm:$0xf]
        %v707 = vld [vmem:[%s197 + $0x54c] sm:$0xf]
        %v708 = vld [vmem:[%s1] sm:$0xf]
        %710 = vset.pattern.permute.xlu0 0
        %711 = vperm.xlu0 %710, %v708
        %v712 = vpop.permute.xlu0 %711
        %v716 = vunpack.c.l.s4 1983009808
        %v717 = vunpack.c.0.s8 %v716
        %v718 = vlaneseq
        %v719 = vshrl.u32 %v718, 7
        %v720 = vsub.s32 %v717, %v719
        %v721 = vrot.slane %v685, %v720
        %v722 = vcombine.high %v721, %v721
        %v746 = vunpack.c.l.b16 %v686
        %v747 = vunpack.c.l.b16 %v687
        %v748 = vunpack.c.l.b16 %v688
        %v749 = vunpack.c.l.b16 %v689
        %v750 = vunpack.c.l.b16 %v690
        %v751 = vunpack.c.l.b16 %v691
        %v752 = vunpack.c.l.b16 %v692
        %v753 = vunpack.c.l.b16 %v693
        %v754 = vunpack.c.l.b16 %v694
        %v755 = vunpack.c.l.b16 %v695
        %v756 = vunpack.c.l.b16 %v696
        %v757 = vunpack.c.l.b16 %v697
        %v758 = vunpack.c.l.b16 %v698
        %v759 = vunpack.c.l.b16 %v699
        %v760 = vunpack.c.l.b16 %v700
        %v761 = vunpack.c.l.b16 %v701
        %v762 = vunpack.c.l.b16 %v702
        %v763 = vunpack.c.l.b16 %v703
        %v764 = vunpack.c.l.b16 %v704
        %v765 = vunpack.c.l.b16 %v705
        %v766 = vunpack.c.l.b16 %v706
        %v767 = vunpack.c.l.b16 %v707
        %v768 = vpack.c.b16 %v747, %v746
        %v769 = vpack.c.b16 %v749, %v748
        %v770 = vpack.c.b16 %v751, %v750
        %v771 = vpack.c.b16 %v753, %v752
        %v772 = vpack.c.b16 %v755, %v754
        %v773 = vpack.c.b16 %v757, %v756
        %v774 = vpack.c.b16 %v759, %v758
        %v775 = vpack.c.b16 %v761, %v760
        %v776 = vpack.c.b16 %v763, %v762
        %v777 = vpack.c.b16 %v765, %v764
        %v778 = vpack.c.b16 %v767, %v766
        %v791 = vsel %vm328, %v722, 0
        %793 = vmatprep.subr.bf16.mxu0 0
        %794 = vmatpush1.bf16.msra.mxu0 %v768
        %795 = vmatprep.subr.bf16.mxu0 0
        %796 = vmatpush1.bf16.msra.mxu0 %v769
        %797 = vmatprep.subr.bf16.mxu0 0
        %798 = vmatpush1.bf16.msra.mxu0 %v770
        %799 = vmatprep.subr.bf16.mxu0 0
        %800 = vmatpush1.bf16.msra.mxu0 %v771
        %801 = vmatprep.subr.bf16.mxu0 0
        %802 = vmatpush1.bf16.msra.mxu0 %v772
        %803 = vmatprep.subr.bf16.mxu0 0
        %804 = vmatpush1.bf16.msra.mxu0 %v773
        %805 = vmatprep.subr.bf16.mxu0 0
        %806 = vmatpush1.bf16.msra.mxu0 %v774
        %807 = vmatprep.subr.bf16.mxu0 0
        %808 = vmatpush1.bf16.msra.mxu0 %v775
        %809 = vmatprep.subr.bf16.mxu0 0
        %810 = vmatpush1.bf16.msra.mxu0 %v776
        %811 = vmatprep.subr.bf16.mxu0 0
        %812 = vmatpush1.bf16.msra.mxu0 %v777
        %813 = vmatprep.subr.bf16.mxu0 0
        %814 = vmatpush1.bf16.msra.mxu0 %v778
        %815 = vmatprep.subr.bf16.mxu0 0
        %816 = vmatpush1.bf16.msra.mxu0 0
        %817 = vmatprep.subr.bf16.mxu0 0
        %818 = vmatpush1.bf16.msra.mxu0 0
        %819 = vmatprep.subr.bf16.mxu0 0
        %820 = vmatpush1.bf16.msra.mxu0 0
        %821 = vmatprep.subr.bf16.mxu0 0
        %822 = vmatpush1.bf16.msra.mxu0 0
        %823 = vmatprep.subr.bf16.mxu0 0
        %824 = vmatpush1.bf16.msra.mxu0 0
        %825 = vmatprep.mubr.bf16.mxu0 %v791
        %826 = vmatmul.mubr.bf16.gmra.mrb[0].mxu0 %v721
        %v827 = vpop.f32.mrb[0].mxu0
        %v828 = vadd.f32 %v712, %v827
        %v829 = vpop.f32.mrb[0].mxu0
        %v830 = vpop.f32.mrb[0].mxu0
        %v831 = vpop.f32.mrb[0].mxu0
        %832 = vdwg.mxu0
        %vm833 = vcmp.ge.f32.partialorder %v828, 0.0
        %v834 = vmul.f32 %v828, 0.01
        %v835 = vsel %vm833, %v828, %v834
        %v836 = vpack.c.bf16 %v835, %v835
        %s837 = scalar_lea.vmem %s219, 6 [#allocation7]
        %838 = vst [vmem:[%s837] sm:$0x3] %v836
        %v839 = vld [vmem:[#allocation2] sm:$0xf]
        %v840 = vld [vmem:[%s197 + $0x10] sm:$0xf]
        %v841 = vld [vmem:[%s197 + $0x50] sm:$0xf]
        %v842 = vld [vmem:[%s197 + $0x90] sm:$0xf]
        %v843 = vld [vmem:[%s197 + $0xd0] sm:$0xf]
        %v844 = vld [vmem:[%s197 + $0x110] sm:$0xf]
        %v845 = vld [vmem:[%s197 + $0x150] sm:$0xf]
        %v846 = vld [vmem:[%s197 + $0x190] sm:$0xf]
        %v847 = vld [vmem:[%s197 + $0x1d0] sm:$0xf]
        %v848 = vld [vmem:[%s197 + $0x210] sm:$0xf]
        %v849 = vld [vmem:[%s197 + $0x250] sm:$0xf]
        %v850 = vld [vmem:[%s197 + $0x290] sm:$0xf]
        %v851 = vld [vmem:[%s197 + $0x2d0] sm:$0xf]
        %v852 = vld [vmem:[%s197 + $0x310] sm:$0xf]
        %v853 = vld [vmem:[%s197 + $0x350] sm:$0xf]
        %v854 = vld [vmem:[%s197 + $0x390] sm:$0xf]
        %v855 = vld [vmem:[%s197 + $0x3d0] sm:$0xf]
        %v856 = vld [vmem:[%s197 + $0x410] sm:$0xf]
        %v857 = vld [vmem:[%s197 + $0x450] sm:$0xf]
        %v858 = vld [vmem:[%s197 + $0x490] sm:$0xf]
        %v859 = vld [vmem:[%s197 + $0x4d0] sm:$0xf]
        %v860 = vld [vmem:[%s197 + $0x510] sm:$0xf]
        %v861 = vld [vmem:[%s197 + $0x550] sm:$0xf]
        %v862 = vld [vmem:[%s1] sm:$0xf]
        %864 = vset.pattern.permute.xlu0 0
        %865 = vperm.xlu0 %864, %v862
        %v866 = vpop.permute.xlu0 %865
        %v870 = vunpack.c.l.s4 1983009808
        %v871 = vunpack.c.0.s8 %v870
        %v872 = vlaneseq
        %v873 = vshrl.u32 %v872, 7
        %v874 = vsub.s32 %v871, %v873
        %v875 = vrot.slane %v839, %v874
        %v876 = vcombine.high %v875, %v875
        %v900 = vunpack.c.l.b16 %v840
        %v901 = vunpack.c.l.b16 %v841
        %v902 = vunpack.c.l.b16 %v842
        %v903 = vunpack.c.l.b16 %v843
        %v904 = vunpack.c.l.b16 %v844
        %v905 = vunpack.c.l.b16 %v845
        %v906 = vunpack.c.l.b16 %v846
        %v907 = vunpack.c.l.b16 %v847
        %v908 = vunpack.c.l.b16 %v848
        %v909 = vunpack.c.l.b16 %v849
        %v910 = vunpack.c.l.b16 %v850
        %v911 = vunpack.c.l.b16 %v851
        %v912 = vunpack.c.l.b16 %v852
        %v913 = vunpack.c.l.b16 %v853
        %v914 = vunpack.c.l.b16 %v854
        %v915 = vunpack.c.l.b16 %v855
        %v916 = vunpack.c.l.b16 %v856
        %v917 = vunpack.c.l.b16 %v857
        %v918 = vunpack.c.l.b16 %v858
        %v919 = vunpack.c.l.b16 %v859
        %v920 = vunpack.c.l.b16 %v860
        %v921 = vunpack.c.l.b16 %v861
        %v922 = vpack.c.b16 %v901, %v900
        %v923 = vpack.c.b16 %v903, %v902
        %v924 = vpack.c.b16 %v905, %v904
        %v925 = vpack.c.b16 %v907, %v906
        %v926 = vpack.c.b16 %v909, %v908
        %v927 = vpack.c.b16 %v911, %v910
        %v928 = vpack.c.b16 %v913, %v912
        %v929 = vpack.c.b16 %v915, %v914
        %v930 = vpack.c.b16 %v917, %v916
        %v931 = vpack.c.b16 %v919, %v918
        %v932 = vpack.c.b16 %v921, %v920
        %v945 = vsel %vm328, %v876, 0
        %947 = vmatprep.subr.bf16.mxu0 0
        %948 = vmatpush1.bf16.msra.mxu0 %v922
        %949 = vmatprep.subr.bf16.mxu0 0
        %950 = vmatpush1.bf16.msra.mxu0 %v923
        %951 = vmatprep.subr.bf16.mxu0 0
        %952 = vmatpush1.bf16.msra.mxu0 %v924
        %953 = vmatprep.subr.bf16.mxu0 0
        %954 = vmatpush1.bf16.msra.mxu0 %v925
        %955 = vmatprep.subr.bf16.mxu0 0
        %956 = vmatpush1.bf16.msra.mxu0 %v926
        %957 = vmatprep.subr.bf16.mxu0 0
        %958 = vmatpush1.bf16.msra.mxu0 %v927
        %959 = vmatprep.subr.bf16.mxu0 0
        %960 = vmatpush1.bf16.msra.mxu0 %v928
        %961 = vmatprep.subr.bf16.mxu0 0
        %962 = vmatpush1.bf16.msra.mxu0 %v929
        %963 = vmatprep.subr.bf16.mxu0 0
        %964 = vmatpush1.bf16.msra.mxu0 %v930
        %965 = vmatprep.subr.bf16.mxu0 0
        %966 = vmatpush1.bf16.msra.mxu0 %v931
        %967 = vmatprep.subr.bf16.mxu0 0
        %968 = vmatpush1.bf16.msra.mxu0 %v932
        %969 = vmatprep.subr.bf16.mxu0 0
        %970 = vmatpush1.bf16.msra.mxu0 0
        %971 = vmatprep.subr.bf16.mxu0 0
        %972 = vmatpush1.bf16.msra.mxu0 0
        %973 = vmatprep.subr.bf16.mxu0 0
        %974 = vmatpush1.bf16.msra.mxu0 0
        %975 = vmatprep.subr.bf16.mxu0 0
        %976 = vmatpush1.bf16.msra.mxu0 0
        %977 = vmatprep.subr.bf16.mxu0 0
        %978 = vmatpush1.bf16.msra.mxu0 0
        %979 = vmatprep.mubr.bf16.mxu0 %v945
        %980 = vmatmul.mubr.bf16.gmra.mrb[0].mxu0 %v875
        %v981 = vpop.f32.mrb[0].mxu0
        %v982 = vadd.f32 %v866, %v981
        %v983 = vpop.f32.mrb[0].mxu0
        %v984 = vpop.f32.mrb[0].mxu0
        %v985 = vpop.f32.mrb[0].mxu0
        %986 = vdwg.mxu0
        %vm987 = vcmp.ge.f32.partialorder %v982, 0.0
        %v988 = vmul.f32 %v982, 0.01
        %v989 = vsel %vm987, %v982, %v988
        %v990 = vpack.c.bf16 %v989, %v989
        %s991 = scalar_lea.vmem %s219, 8 [#allocation7]
        %992 = vst [vmem:[%s991] sm:$0x3] %v990
        %v993 = vld [vmem:[#allocation2] sm:$0xf]
        %v994 = vld [vmem:[%s197 + $0x14] sm:$0xf]
        %v995 = vld [vmem:[%s197 + $0x54] sm:$0xf]
        %v996 = vld [vmem:[%s197 + $0x94] sm:$0xf]
        %v997 = vld [vmem:[%s197 + $0xd4] sm:$0xf]
        %v998 = vld [vmem:[%s197 + $0x114] sm:$0xf]
        %v999 = vld [vmem:[%s197 + $0x154] sm:$0xf]
        %v1000 = vld [vmem:[%s197 + $0x194] sm:$0xf]
        %v1001 = vld [vmem:[%s197 + $0x1d4] sm:$0xf]
        %v1002 = vld [vmem:[%s197 + $0x214] sm:$0xf]
        %v1003 = vld [vmem:[%s197 + $0x254] sm:$0xf]
        %v1004 = vld [vmem:[%s197 + $0x294] sm:$0xf]
        %v1005 = vld [vmem:[%s197 + $0x2d4] sm:$0xf]
        %v1006 = vld [vmem:[%s197 + $0x314] sm:$0xf]
        %v1007 = vld [vmem:[%s197 + $0x354] sm:$0xf]
        %v1008 = vld [vmem:[%s197 + $0x394] sm:$0xf]
        %v1009 = vld [vmem:[%s197 + $0x3d4] sm:$0xf]
        %v1010 = vld [vmem:[%s197 + $0x414] sm:$0xf]
        %v1011 = vld [vmem:[%s197 + $0x454] sm:$0xf]
        %v1012 = vld [vmem:[%s197 + $0x494] sm:$0xf]
        %v1013 = vld [vmem:[%s197 + $0x4d4] sm:$0xf]
        %v1014 = vld [vmem:[%s197 + $0x514] sm:$0xf]
        %v1015 = vld [vmem:[%s197 + $0x554] sm:$0xf]
        %v1016 = vld [vmem:[%s1] sm:$0xf]
        %1018 = vset.pattern.permute.xlu0 0
        %1019 = vperm.xlu0 %1018, %v1016
        %v1020 = vpop.permute.xlu0 %1019
        %v1024 = vunpack.c.l.s4 1983009808
        %v1025 = vunpack.c.0.s8 %v1024
        %v1026 = vlaneseq
        %v1027 = vshrl.u32 %v1026, 7
        %v1028 = vsub.s32 %v1025, %v1027
        %v1029 = vrot.slane %v993, %v1028
        %v1030 = vcombine.high %v1029, %v1029
        %v1054 = vunpack.c.l.b16 %v994
        %v1055 = vunpack.c.l.b16 %v995
        %v1056 = vunpack.c.l.b16 %v996
        %v1057 = vunpack.c.l.b16 %v997
        %v1058 = vunpack.c.l.b16 %v998
        %v1059 = vunpack.c.l.b16 %v999
        %v1060 = vunpack.c.l.b16 %v1000
        %v1061 = vunpack.c.l.b16 %v1001
        %v1062 = vunpack.c.l.b16 %v1002
        %v1063 = vunpack.c.l.b16 %v1003
        %v1064 = vunpack.c.l.b16 %v1004
        %v1065 = vunpack.c.l.b16 %v1005
        %v1066 = vunpack.c.l.b16 %v1006
        %v1067 = vunpack.c.l.b16 %v1007
        %v1068 = vunpack.c.l.b16 %v1008
        %v1069 = vunpack.c.l.b16 %v1009
        %v1070 = vunpack.c.l.b16 %v1010
        %v1071 = vunpack.c.l.b16 %v1011
        %v1072 = vunpack.c.l.b16 %v1012
        %v1073 = vunpack.c.l.b16 %v1013
        %v1074 = vunpack.c.l.b16 %v1014
        %v1075 = vunpack.c.l.b16 %v1015
        %v1076 = vpack.c.b16 %v1055, %v1054
        %v1077 = vpack.c.b16 %v1057, %v1056
        %v1078 = vpack.c.b16 %v1059, %v1058
        %v1079 = vpack.c.b16 %v1061, %v1060
        %v1080 = vpack.c.b16 %v1063, %v1062
        %v1081 = vpack.c.b16 %v1065, %v1064
        %v1082 = vpack.c.b16 %v1067, %v1066
        %v1083 = vpack.c.b16 %v1069, %v1068
        %v1084 = vpack.c.b16 %v1071, %v1070
        %v1085 = vpack.c.b16 %v1073, %v1072
        %v1086 = vpack.c.b16 %v1075, %v1074
        %v1099 = vsel %vm328, %v1030, 0
        %1101 = vmatprep.subr.bf16.mxu0 0
        %1102 = vmatpush1.bf16.msra.mxu0 %v1076
        %1103 = vmatprep.subr.bf16.mxu0 0
        %1104 = vmatpush1.bf16.msra.mxu0 %v1077
        %1105 = vmatprep.subr.bf16.mxu0 0
        %1106 = vmatpush1.bf16.msra.mxu0 %v1078
        %1107 = vmatprep.subr.bf16.mxu0 0
        %1108 = vmatpush1.bf16.msra.mxu0 %v1079
        %1109 = vmatprep.subr.bf16.mxu0 0
        %1110 = vmatpush1.bf16.msra.mxu0 %v1080
        %1111 = vmatprep.subr.bf16.mxu0 0
        %1112 = vmatpush1.bf16.msra.mxu0 %v1081
        %1113 = vmatprep.subr.bf16.mxu0 0
        %1114 = vmatpush1.bf16.msra.mxu0 %v1082
        %1115 = vmatprep.subr.bf16.mxu0 0
        %1116 = vmatpush1.bf16.msra.mxu0 %v1083
        %1117 = vmatprep.subr.bf16.mxu0 0
        %1118 = vmatpush1.bf16.msra.mxu0 %v1084
        %1119 = vmatprep.subr.bf16.mxu0 0
        %1120 = vmatpush1.bf16.msra.mxu0 %v1085
        %1121 = vmatprep.subr.bf16.mxu0 0
        %1122 = vmatpush1.bf16.msra.mxu0 %v1086
        %1123 = vmatprep.subr.bf16.mxu0 0
        %1124 = vmatpush1.bf16.msra.mxu0 0
        %1125 = vmatprep.subr.bf16.mxu0 0
        %1126 = vmatpush1.bf16.msra.mxu0 0
        %1127 = vmatprep.subr.bf16.mxu0 0
        %1128 = vmatpush1.bf16.msra.mxu0 0
        %1129 = vmatprep.subr.bf16.mxu0 0
        %1130 = vmatpush1.bf16.msra.mxu0 0
        %1131 = vmatprep.subr.bf16.mxu0 0
        %1132 = vmatpush1.bf16.msra.mxu0 0
        %1133 = vmatprep.mubr.bf16.mxu0 %v1099
        %1134 = vmatmul.mubr.bf16.gmra.mrb[0].mxu0 %v1029
        %v1135 = vpop.f32.mrb[0].mxu0
        %v1136 = vadd.f32 %v1020, %v1135
        %v1137 = vpop.f32.mrb[0].mxu0
        %v1138 = vpop.f32.mrb[0].mxu0
        %v1139 = vpop.f32.mrb[0].mxu0
        %1140 = vdwg.mxu0
        %vm1141 = vcmp.ge.f32.partialorder %v1136, 0.0
        %v1142 = vmul.f32 %v1136, 0.01
        %v1143 = vsel %vm1141, %v1136, %v1142
        %v1144 = vpack.c.bf16 %v1143, %v1143
        %s1145 = scalar_lea.vmem %s219, 10 [#allocation7]
        %1146 = vst [vmem:[%s1145] sm:$0x3] %v1144
        %v1147 = vld [vmem:[#allocation2] sm:$0xf]
        %v1148 = vld [vmem:[%s197 + $0x18] sm:$0xf]
        %v1149 = vld [vmem:[%s197 + $0x58] sm:$0xf]
        %v1150 = vld [vmem:[%s197 + $0x98] sm:$0xf]
        %v1151 = vld [vmem:[%s197 + $0xd8] sm:$0xf]
        %v1152 = vld [vmem:[%s197 + $0x118] sm:$0xf]
        %v1153 = vld [vmem:[%s197 + $0x158] sm:$0xf]
        %v1154 = vld [vmem:[%s197 + $0x198] sm:$0xf]
        %v1155 = vld [vmem:[%s197 + $0x1d8] sm:$0xf]
        %v1156 = vld [vmem:[%s197 + $0x218] sm:$0xf]
        %v1157 = vld [vmem:[%s197 + $0x258] sm:$0xf]
        %v1158 = vld [vmem:[%s197 + $0x298] sm:$0xf]
        %v1159 = vld [vmem:[%s197 + $0x2d8] sm:$0xf]
        %v1160 = vld [vmem:[%s197 + $0x318] sm:$0xf]
        %v1161 = vld [vmem:[%s197 + $0x358] sm:$0xf]
        %v1162 = vld [vmem:[%s197 + $0x398] sm:$0xf]
        %v1163 = vld [vmem:[%s197 + $0x3d8] sm:$0xf]
        %v1164 = vld [vmem:[%s197 + $0x418] sm:$0xf]
        %v1165 = vld [vmem:[%s197 + $0x458] sm:$0xf]
        %v1166 = vld [vmem:[%s197 + $0x498] sm:$0xf]
        %v1167 = vld [vmem:[%s197 + $0x4d8] sm:$0xf]
        %v1168 = vld [vmem:[%s197 + $0x518] sm:$0xf]
        %v1169 = vld [vmem:[%s197 + $0x558] sm:$0xf]
        %v1170 = vld [vmem:[%s1] sm:$0xf]
        %1172 = vset.pattern.permute.xlu0 0
        %1173 = vperm.xlu0 %1172, %v1170
        %v1174 = vpop.permute.xlu0 %1173
        %v1178 = vunpack.c.l.s4 1983009808
        %v1179 = vunpack.c.0.s8 %v1178
        %v1180 = vlaneseq
        %v1181 = vshrl.u32 %v1180, 7
        %v1182 = vsub.s32 %v1179, %v1181
        %v1183 = vrot.slane %v1147, %v1182
        %v1184 = vcombine.high %v1183, %v1183
        %v1208 = vunpack.c.l.b16 %v1148
        %v1209 = vunpack.c.l.b16 %v1149
        %v1210 = vunpack.c.l.b16 %v1150
        %v1211 = vunpack.c.l.b16 %v1151
        %v1212 = vunpack.c.l.b16 %v1152
        %v1213 = vunpack.c.l.b16 %v1153
        %v1214 = vunpack.c.l.b16 %v1154
        %v1215 = vunpack.c.l.b16 %v1155
        %v1216 = vunpack.c.l.b16 %v1156
        %v1217 = vunpack.c.l.b16 %v1157
        %v1218 = vunpack.c.l.b16 %v1158
        %v1219 = vunpack.c.l.b16 %v1159
        %v1220 = vunpack.c.l.b16 %v1160
        %v1221 = vunpack.c.l.b16 %v1161
        %v1222 = vunpack.c.l.b16 %v1162
        %v1223 = vunpack.c.l.b16 %v1163
        %v1224 = vunpack.c.l.b16 %v1164
        %v1225 = vunpack.c.l.b16 %v1165
        %v1226 = vunpack.c.l.b16 %v1166
        %v1227 = vunpack.c.l.b16 %v1167
        %v1228 = vunpack.c.l.b16 %v1168
        %v1229 = vunpack.c.l.b16 %v1169
        %v1230 = vpack.c.b16 %v1209, %v1208
        %v1231 = vpack.c.b16 %v1211, %v1210
        %v1232 = vpack.c.b16 %v1213, %v1212
        %v1233 = vpack.c.b16 %v1215, %v1214
        %v1234 = vpack.c.b16 %v1217, %v1216
        %v1235 = vpack.c.b16 %v1219, %v1218
        %v1236 = vpack.c.b16 %v1221, %v1220
        %v1237 = vpack.c.b16 %v1223, %v1222
        %v1238 = vpack.c.b16 %v1225, %v1224
        %v1239 = vpack.c.b16 %v1227, %v1226
        %v1240 = vpack.c.b16 %v1229, %v1228
        %v1253 = vsel %vm328, %v1184, 0
        %1255 = vmatprep.subr.bf16.mxu0 0
        %1256 = vmatpush1.bf16.msra.mxu0 %v1230
        %1257 = vmatprep.subr.bf16.mxu0 0
        %1258 = vmatpush1.bf16.msra.mxu0 %v1231
        %1259 = vmatprep.subr.bf16.mxu0 0
        %1260 = vmatpush1.bf16.msra.mxu0 %v1232
        %1261 = vmatprep.subr.bf16.mxu0 0
        %1262 = vmatpush1.bf16.msra.mxu0 %v1233
        %1263 = vmatprep.subr.bf16.mxu0 0
        %1264 = vmatpush1.bf16.msra.mxu0 %v1234
        %1265 = vmatprep.subr.bf16.mxu0 0
        %1266 = vmatpush1.bf16.msra.mxu0 %v1235
        %1267 = vmatprep.subr.bf16.mxu0 0
        %1268 = vmatpush1.bf16.msra.mxu0 %v1236
        %1269 = vmatprep.subr.bf16.mxu0 0
        %1270 = vmatpush1.bf16.msra.mxu0 %v1237
        %1271 = vmatprep.subr.bf16.mxu0 0
        %1272 = vmatpush1.bf16.msra.mxu0 %v1238
        %1273 = vmatprep.subr.bf16.mxu0 0
        %1274 = vmatpush1.bf16.msra.mxu0 %v1239
        %1275 = vmatprep.subr.bf16.mxu0 0
        %1276 = vmatpush1.bf16.msra.mxu0 %v1240
        %1277 = vmatprep.subr.bf16.mxu0 0
        %1278 = vmatpush1.bf16.msra.mxu0 0
        %1279 = vmatprep.subr.bf16.mxu0 0
        %1280 = vmatpush1.bf16.msra.mxu0 0
        %1281 = vmatprep.subr.bf16.mxu0 0
        %1282 = vmatpush1.bf16.msra.mxu0 0
        %1283 = vmatprep.subr.bf16.mxu0 0
        %1284 = vmatpush1.bf16.msra.mxu0 0
        %1285 = vmatprep.subr.bf16.mxu0 0
        %1286 = vmatpush1.bf16.msra.mxu0 0
        %1287 = vmatprep.mubr.bf16.mxu0 %v1253
        %1288 = vmatmul.mubr.bf16.gmra.mrb[0].mxu0 %v1183
        %v1289 = vpop.f32.mrb[0].mxu0
        %v1290 = vadd.f32 %v1174, %v1289
        %v1291 = vpop.f32.mrb[0].mxu0
        %v1292 = vpop.f32.mrb[0].mxu0
        %v1293 = vpop.f32.mrb[0].mxu0
        %1294 = vdwg.mxu0
        %vm1295 = vcmp.ge.f32.partialorder %v1290, 0.0
        %v1296 = vmul.f32 %v1290, 0.01
        %v1297 = vsel %vm1295, %v1290, %v1296
        %v1298 = vpack.c.bf16 %v1297, %v1297
        %s1299 = scalar_lea.vmem %s219, 12 [#allocation7]
        %1300 = vst [vmem:[%s1299] sm:$0x3] %v1298
        %v1301 = vld [vmem:[#allocation2] sm:$0xf]
        %v1302 = vld [vmem:[%s197 + $0x1c] sm:$0xf]
        %v1303 = vld [vmem:[%s197 + $0x5c] sm:$0xf]
        %v1304 = vld [vmem:[%s197 + $0x9c] sm:$0xf]
        %v1305 = vld [vmem:[%s197 + $0xdc] sm:$0xf]
        %v1306 = vld [vmem:[%s197 + $0x11c] sm:$0xf]
        %v1307 = vld [vmem:[%s197 + $0x15c] sm:$0xf]
        %v1308 = vld [vmem:[%s197 + $0x19c] sm:$0xf]
        %v1309 = vld [vmem:[%s197 + $0x1dc] sm:$0xf]
        %v1310 = vld [vmem:[%s197 + $0x21c] sm:$0xf]
        %v1311 = vld [vmem:[%s197 + $0x25c] sm:$0xf]
        %v1312 = vld [vmem:[%s197 + $0x29c] sm:$0xf]
        %v1313 = vld [vmem:[%s197 + $0x2dc] sm:$0xf]
        %v1314 = vld [vmem:[%s197 + $0x31c] sm:$0xf]
        %v1315 = vld [vmem:[%s197 + $0x35c] sm:$0xf]
        %v1316 = vld [vmem:[%s197 + $0x39c] sm:$0xf]
        %v1317 = vld [vmem:[%s197 + $0x3dc] sm:$0xf]
        %v1318 = vld [vmem:[%s197 + $0x41c] sm:$0xf]
        %v1319 = vld [vmem:[%s197 + $0x45c] sm:$0xf]
        %v1320 = vld [vmem:[%s197 + $0x49c] sm:$0xf]
        %v1321 = vld [vmem:[%s197 + $0x4dc] sm:$0xf]
        %v1322 = vld [vmem:[%s197 + $0x51c] sm:$0xf]
        %v1323 = vld [vmem:[%s197 + $0x55c] sm:$0xf]
        %v1324 = vld [vmem:[%s1] sm:$0xf]
        %1326 = vset.pattern.permute.xlu0 0
        %1327 = vperm.xlu0 %1326, %v1324
        %v1328 = vpop.permute.xlu0 %1327
        %v1332 = vunpack.c.l.s4 1983009808
        %v1333 = vunpack.c.0.s8 %v1332
        %v1334 = vlaneseq
        %v1335 = vshrl.u32 %v1334, 7
        %v1336 = vsub.s32 %v1333, %v1335
        %v1337 = vrot.slane %v1301, %v1336
        %v1338 = vcombine.high %v1337, %v1337
        %v1362 = vunpack.c.l.b16 %v1302
        %v1363 = vunpack.c.l.b16 %v1303
        %v1364 = vunpack.c.l.b16 %v1304
        %v1365 = vunpack.c.l.b16 %v1305
        %v1366 = vunpack.c.l.b16 %v1306
        %v1367 = vunpack.c.l.b16 %v1307
        %v1368 = vunpack.c.l.b16 %v1308
        %v1369 = vunpack.c.l.b16 %v1309
        %v1370 = vunpack.c.l.b16 %v1310
        %v1371 = vunpack.c.l.b16 %v1311
        %v1372 = vunpack.c.l.b16 %v1312
        %v1373 = vunpack.c.l.b16 %v1313
        %v1374 = vunpack.c.l.b16 %v1314
        %v1375 = vunpack.c.l.b16 %v1315
        %v1376 = vunpack.c.l.b16 %v1316
        %v1377 = vunpack.c.l.b16 %v1317
        %v1378 = vunpack.c.l.b16 %v1318
        %v1379 = vunpack.c.l.b16 %v1319
        %v1380 = vunpack.c.l.b16 %v1320
        %v1381 = vunpack.c.l.b16 %v1321
        %v1382 = vunpack.c.l.b16 %v1322
        %v1383 = vunpack.c.l.b16 %v1323
        %v1384 = vpack.c.b16 %v1363, %v1362
        %v1385 = vpack.c.b16 %v1365, %v1364
        %v1386 = vpack.c.b16 %v1367, %v1366
        %v1387 = vpack.c.b16 %v1369, %v1368
        %v1388 = vpack.c.b16 %v1371, %v1370
        %v1389 = vpack.c.b16 %v1373, %v1372
        %v1390 = vpack.c.b16 %v1375, %v1374
        %v1391 = vpack.c.b16 %v1377, %v1376
        %v1392 = vpack.c.b16 %v1379, %v1378
        %v1393 = vpack.c.b16 %v1381, %v1380
        %v1394 = vpack.c.b16 %v1383, %v1382
        %v1407 = vsel %vm328, %v1338, 0
        %1409 = vmatprep.subr.bf16.mxu0 0
        %1410 = vmatpush1.bf16.msra.mxu0 %v1384
        %1411 = vmatprep.subr.bf16.mxu0 0
        %1412 = vmatpush1.bf16.msra.mxu0 %v1385
        %1413 = vmatprep.subr.bf16.mxu0 0
        %1414 = vmatpush1.bf16.msra.mxu0 %v1386
        %1415 = vmatprep.subr.bf16.mxu0 0
        %1416 = vmatpush1.bf16.msra.mxu0 %v1387
        %1417 = vmatprep.subr.bf16.mxu0 0
        %1418 = vmatpush1.bf16.msra.mxu0 %v1388
        %1419 = vmatprep.subr.bf16.mxu0 0
        %1420 = vmatpush1.bf16.msra.mxu0 %v1389
        %1421 = vmatprep.subr.bf16.mxu0 0
        %1422 = vmatpush1.bf16.msra.mxu0 %v1390
        %1423 = vmatprep.subr.bf16.mxu0 0
        %1424 = vmatpush1.bf16.msra.mxu0 %v1391
        %1425 = vmatprep.subr.bf16.mxu0 0
        %1426 = vmatpush1.bf16.msra.mxu0 %v1392
        %1427 = vmatprep.subr.bf16.mxu0 0
        %1428 = vmatpush1.bf16.msra.mxu0 %v1393
        %1429 = vmatprep.subr.bf16.mxu0 0
        %1430 = vmatpush1.bf16.msra.mxu0 %v1394
        %1431 = vmatprep.subr.bf16.mxu0 0
        %1432 = vmatpush1.bf16.msra.mxu0 0
        %1433 = vmatprep.subr.bf16.mxu0 0
        %1434 = vmatpush1.bf16.msra.mxu0 0
        %1435 = vmatprep.subr.bf16.mxu0 0
        %1436 = vmatpush1.bf16.msra.mxu0 0
        %1437 = vmatprep.subr.bf16.mxu0 0
        %1438 = vmatpush1.bf16.msra.mxu0 0
        %1439 = vmatprep.subr.bf16.mxu0 0
        %1440 = vmatpush1.bf16.msra.mxu0 0
        %1441 = vmatprep.mubr.bf16.mxu0 %v1407
        %1442 = vmatmul.mubr.bf16.gmra.mrb[0].mxu0 %v1337
        %v1443 = vpop.f32.mrb[0].mxu0
        %v1444 = vadd.f32 %v1328, %v1443
        %v1445 = vpop.f32.mrb[0].mxu0
        %v1446 = vpop.f32.mrb[0].mxu0
        %v1447 = vpop.f32.mrb[0].mxu0
        %1448 = vdwg.mxu0
        %vm1449 = vcmp.ge.f32.partialorder %v1444, 0.0
        %v1450 = vmul.f32 %v1444, 0.01
        %v1451 = vsel %vm1449, %v1444, %v1450
        %v1452 = vpack.c.bf16 %v1451, %v1451
        %s1453 = scalar_lea.vmem %s219, 14 [#allocation7]
        %1454 = vst [vmem:[%s1453] sm:$0x3] %v1452
        %v1455 = vld [vmem:[#allocation2] sm:$0xf]
        %v1456 = vld [vmem:[%s197 + $0x20] sm:$0xf]
        %v1457 = vld [vmem:[%s197 + $0x60] sm:$0xf]
        %v1458 = vld [vmem:[%s197 + $0xa0] sm:$0xf]
        %v1459 = vld [vmem:[%s197 + $0xe0] sm:$0xf]
        %v1460 = vld [vmem:[%s197 + $0x120] sm:$0xf]
        %v1461 = vld [vmem:[%s197 + $0x160] sm:$0xf]
        %v1462 = vld [vmem:[%s197 + $0x1a0] sm:$0xf]
        %v1463 = vld [vmem:[%s197 + $0x1e0] sm:$0xf]
        %v1464 = vld [vmem:[%s197 + $0x220] sm:$0xf]
        %v1465 = vld [vmem:[%s197 + $0x260] sm:$0xf]
        %v1466 = vld [vmem:[%s197 + $0x2a0] sm:$0xf]
        %v1467 = vld [vmem:[%s197 + $0x2e0] sm:$0xf]
        %v1468 = vld [vmem:[%s197 + $0x320] sm:$0xf]
        %v1469 = vld [vmem:[%s197 + $0x360] sm:$0xf]
        %v1470 = vld [vmem:[%s197 + $0x3a0] sm:$0xf]
        %v1471 = vld [vmem:[%s197 + $0x3e0] sm:$0xf]
        %v1472 = vld [vmem:[%s197 + $0x420] sm:$0xf]
        %v1473 = vld [vmem:[%s197 + $0x460] sm:$0xf]
        %v1474 = vld [vmem:[%s197 + $0x4a0] sm:$0xf]
        %v1475 = vld [vmem:[%s197 + $0x4e0] sm:$0xf]
        %v1476 = vld [vmem:[%s197 + $0x520] sm:$0xf]
        %v1477 = vld [vmem:[%s197 + $0x560] sm:$0xf]
        %v1478 = vld [vmem:[%s1] sm:$0xf]
        %1480 = vset.pattern.permute.xlu0 0
        %1481 = vperm.xlu0 %1480, %v1478
        %v1482 = vpop.permute.xlu0 %1481
        %v1486 = vunpack.c.l.s4 1983009808
        %v1487 = vunpack.c.0.s8 %v1486
        %v1488 = vlaneseq
        %v1489 = vshrl.u32 %v1488, 7
        %v1490 = vsub.s32 %v1487, %v1489
        %v1491 = vrot.slane %v1455, %v1490
        %v1492 = vcombine.high %v1491, %v1491
        %v1516 = vunpack.c.l.b16 %v1456
        %v1517 = vunpack.c.l.b16 %v1457
        %v1518 = vunpack.c.l.b16 %v1458
        %v1519 = vunpack.c.l.b16 %v1459
        %v1520 = vunpack.c.l.b16 %v1460
        %v1521 = vunpack.c.l.b16 %v1461
        %v1522 = vunpack.c.l.b16 %v1462
        %v1523 = vunpack.c.l.b16 %v1463
        %v1524 = vunpack.c.l.b16 %v1464
        %v1525 = vunpack.c.l.b16 %v1465
        %v1526 = vunpack.c.l.b16 %v1466
        %v1527 = vunpack.c.l.b16 %v1467
        %v1528 = vunpack.c.l.b16 %v1468
        %v1529 = vunpack.c.l.b16 %v1469
        %v1530 = vunpack.c.l.b16 %v1470
        %v1531 = vunpack.c.l.b16 %v1471
        %v1532 = vunpack.c.l.b16 %v1472
        %v1533 = vunpack.c.l.b16 %v1473
        %v1534 = vunpack.c.l.b16 %v1474
        %v1535 = vunpack.c.l.b16 %v1475
        %v1536 = vunpack.c.l.b16 %v1476
        %v1537 = vunpack.c.l.b16 %v1477
        %v1538 = vpack.c.b16 %v1517, %v1516
        %v1539 = vpack.c.b16 %v1519, %v1518
        %v1540 = vpack.c.b16 %v1521, %v1520
        %v1541 = vpack.c.b16 %v1523, %v1522
        %v1542 = vpack.c.b16 %v1525, %v1524
        %v1543 = vpack.c.b16 %v1527, %v1526
        %v1544 = vpack.c.b16 %v1529, %v1528
        %v1545 = vpack.c.b16 %v1531, %v1530
        %v1546 = vpack.c.b16 %v1533, %v1532
        %v1547 = vpack.c.b16 %v1535, %v1534
        %v1548 = vpack.c.b16 %v1537, %v1536
        %v1561 = vsel %vm328, %v1492, 0
        %1563 = vmatprep.subr.bf16.mxu0 0
        %1564 = vmatpush1.bf16.msra.mxu0 %v1538
        %1565 = vmatprep.subr.bf16.mxu0 0
        %1566 = vmatpush1.bf16.msra.mxu0 %v1539
        %1567 = vmatprep.subr.bf16.mxu0 0
        %1568 = vmatpush1.bf16.msra.mxu0 %v1540
        %1569 = vmatprep.subr.bf16.mxu0 0
        %1570 = vmatpush1.bf16.msra.mxu0 %v1541
        %1571 = vmatprep.subr.bf16.mxu0 0
        %1572 = vmatpush1.bf16.msra.mxu0 %v1542
        %1573 = vmatprep.subr.bf16.mxu0 0
        %1574 = vmatpush1.bf16.msra.mxu0 %v1543
        %1575 = vmatprep.subr.bf16.mxu0 0
        %1576 = vmatpush1.bf16.msra.mxu0 %v1544
        %1577 = vmatprep.subr.bf16.mxu0 0
        %1578 = vmatpush1.bf16.msra.mxu0 %v1545
        %1579 = vmatprep.subr.bf16.mxu0 0
        %1580 = vmatpush1.bf16.msra.mxu0 %v1546
        %1581 = vmatprep.subr.bf16.mxu0 0
        %1582 = vmatpush1.bf16.msra.mxu0 %v1547
        %1583 = vmatprep.subr.bf16.mxu0 0
        %1584 = vmatpush1.bf16.msra.mxu0 %v1548
        %1585 = vmatprep.subr.bf16.mxu0 0
        %1586 = vmatpush1.bf16.msra.mxu0 0
        %1587 = vmatprep.subr.bf16.mxu0 0
        %1588 = vmatpush1.bf16.msra.mxu0 0
        %1589 = vmatprep.subr.bf16.mxu0 0
        %1590 = vmatpush1.bf16.msra.mxu0 0
        %1591 = vmatprep.subr.bf16.mxu0 0
        %1592 = vmatpush1.bf16.msra.mxu0 0
        %1593 = vmatprep.subr.bf16.mxu0 0
        %1594 = vmatpush1.bf16.msra.mxu0 0
        %1595 = vmatprep.mubr.bf16.mxu0 %v1561
        %1596 = vmatmul.mubr.bf16.gmra.mrb[0].mxu0 %v1491
        %v1597 = vpop.f32.mrb[0].mxu0
        %v1598 = vadd.f32 %v1482, %v1597
        %v1599 = vpop.f32.mrb[0].mxu0
        %v1600 = vpop.f32.mrb[0].mxu0
        %v1601 = vpop.f32.mrb[0].mxu0
        %1602 = vdwg.mxu0
        %vm1603 = vcmp.ge.f32.partialorder %v1598, 0.0
        %v1604 = vmul.f32 %v1598, 0.01
        %v1605 = vsel %vm1603, %v1598, %v1604
        %v1606 = vpack.c.bf16 %v1605, %v1605
        %s1607 = scalar_lea.vmem %s219, 16 [#allocation7]
        %1608 = vst [vmem:[%s1607] sm:$0x3] %v1606
        %v1609 = vld [vmem:[#allocation2] sm:$0xf]
        %v1610 = vld [vmem:[%s197 + $0x24] sm:$0xf]
        %v1611 = vld [vmem:[%s197 + $0x64] sm:$0xf]
        %v1612 = vld [vmem:[%s197 + $0xa4] sm:$0xf]
        %v1613 = vld [vmem:[%s197 + $0xe4] sm:$0xf]
        %v1614 = vld [vmem:[%s197 + $0x124] sm:$0xf]
        %v1615 = vld [vmem:[%s197 + $0x164] sm:$0xf]
        %v1616 = vld [vmem:[%s197 + $0x1a4] sm:$0xf]
        %v1617 = vld [vmem:[%s197 + $0x1e4] sm:$0xf]
        %v1618 = vld [vmem:[%s197 + $0x224] sm:$0xf]
        %v1619 = vld [vmem:[%s197 + $0x264] sm:$0xf]
        %v1620 = vld [vmem:[%s197 + $0x2a4] sm:$0xf]
        %v1621 = vld [vmem:[%s197 + $0x2e4] sm:$0xf]
        %v1622 = vld [vmem:[%s197 + $0x324] sm:$0xf]
        %v1623 = vld [vmem:[%s197 + $0x364] sm:$0xf]
        %v1624 = vld [vmem:[%s197 + $0x3a4] sm:$0xf]
        %v1625 = vld [vmem:[%s197 + $0x3e4] sm:$0xf]
        %v1626 = vld [vmem:[%s197 + $0x424] sm:$0xf]
        %v1627 = vld [vmem:[%s197 + $0x464] sm:$0xf]
        %v1628 = vld [vmem:[%s197 + $0x4a4] sm:$0xf]
        %v1629 = vld [vmem:[%s197 + $0x4e4] sm:$0xf]
        %v1630 = vld [vmem:[%s197 + $0x524] sm:$0xf]
        %v1631 = vld [vmem:[%s197 + $0x564] sm:$0xf]
        %v1632 = vld [vmem:[%s1] sm:$0xf]
        %1634 = vset.pattern.permute.xlu0 0
        %1635 = vperm.xlu0 %1634, %v1632
        %v1636 = vpop.permute.xlu0 %1635
        %v1640 = vunpack.c.l.s4 1983009808
        %v1641 = vunpack.c.0.s8 %v1640
        %v1642 = vlaneseq
        %v1643 = vshrl.u32 %v1642, 7
        %v1644 = vsub.s32 %v1641, %v1643
        %v1645 = vrot.slane %v1609, %v1644
        %v1646 = vcombine.high %v1645, %v1645
        %v1670 = vunpack.c.l.b16 %v1610
        %v1671 = vunpack.c.l.b16 %v1611
        %v1672 = vunpack.c.l.b16 %v1612
        %v1673 = vunpack.c.l.b16 %v1613
        %v1674 = vunpack.c.l.b16 %v1614
        %v1675 = vunpack.c.l.b16 %v1615
        %v1676 = vunpack.c.l.b16 %v1616
        %v1677 = vunpack.c.l.b16 %v1617
        %v1678 = vunpack.c.l.b16 %v1618
        %v1679 = vunpack.c.l.b16 %v1619
        %v1680 = vunpack.c.l.b16 %v1620
        %v1681 = vunpack.c.l.b16 %v1621
        %v1682 = vunpack.c.l.b16 %v1622
        %v1683 = vunpack.c.l.b16 %v1623
        %v1684 = vunpack.c.l.b16 %v1624
        %v1685 = vunpack.c.l.b16 %v1625
        %v1686 = vunpack.c.l.b16 %v1626
        %v1687 = vunpack.c.l.b16 %v1627
        %v1688 = vunpack.c.l.b16 %v1628
        %v1689 = vunpack.c.l.b16 %v1629
        %v1690 = vunpack.c.l.b16 %v1630
        %v1691 = vunpack.c.l.b16 %v1631
        %v1692 = vpack.c.b16 %v1671, %v1670
        %v1693 = vpack.c.b16 %v1673, %v1672
        %v1694 = vpack.c.b16 %v1675, %v1674
        %v1695 = vpack.c.b16 %v1677, %v1676
        %v1696 = vpack.c.b16 %v1679, %v1678
        %v1697 = vpack.c.b16 %v1681, %v1680
        %v1698 = vpack.c.b16 %v1683, %v1682
        %v1699 = vpack.c.b16 %v1685, %v1684
        %v1700 = vpack.c.b16 %v1687, %v1686
        %v1701 = vpack.c.b16 %v1689, %v1688
        %v1702 = vpack.c.b16 %v1691, %v1690
        %v1715 = vsel %vm328, %v1646, 0
        %1717 = vmatprep.subr.bf16.mxu0 0
        %1718 = vmatpush1.bf16.msra.mxu0 %v1692
        %1719 = vmatprep.subr.bf16.mxu0 0
        %1720 = vmatpush1.bf16.msra.mxu0 %v1693
        %1721 = vmatprep.subr.bf16.mxu0 0
        %1722 = vmatpush1.bf16.msra.mxu0 %v1694
        %1723 = vmatprep.subr.bf16.mxu0 0
        %1724 = vmatpush1.bf16.msra.mxu0 %v1695
        %1725 = vmatprep.subr.bf16.mxu0 0
        %1726 = vmatpush1.bf16.msra.mxu0 %v1696
        %1727 = vmatprep.subr.bf16.mxu0 0
        %1728 = vmatpush1.bf16.msra.mxu0 %v1697
        %1729 = vmatprep.subr.bf16.mxu0 0
        %1730 = vmatpush1.bf16.msra.mxu0 %v1698
        %1731 = vmatprep.subr.bf16.mxu0 0
        %1732 = vmatpush1.bf16.msra.mxu0 %v1699
        %1733 = vmatprep.subr.bf16.mxu0 0
        %1734 = vmatpush1.bf16.msra.mxu0 %v1700
        %1735 = vmatprep.subr.bf16.mxu0 0
        %1736 = vmatpush1.bf16.msra.mxu0 %v1701
        %1737 = vmatprep.subr.bf16.mxu0 0
        %1738 = vmatpush1.bf16.msra.mxu0 %v1702
        %1739 = vmatprep.subr.bf16.mxu0 0
        %1740 = vmatpush1.bf16.msra.mxu0 0
        %1741 = vmatprep.subr.bf16.mxu0 0
        %1742 = vmatpush1.bf16.msra.mxu0 0
        %1743 = vmatprep.subr.bf16.mxu0 0
        %1744 = vmatpush1.bf16.msra.mxu0 0
        %1745 = vmatprep.subr.bf16.mxu0 0
        %1746 = vmatpush1.bf16.msra.mxu0 0
        %1747 = vmatprep.subr.bf16.mxu0 0
        %1748 = vmatpush1.bf16.msra.mxu0 0
        %1749 = vmatprep.mubr.bf16.mxu0 %v1715
        %1750 = vmatmul.mubr.bf16.gmra.mrb[0].mxu0 %v1645
        %v1751 = vpop.f32.mrb[0].mxu0
        %v1752 = vadd.f32 %v1636, %v1751
        %v1753 = vpop.f32.mrb[0].mxu0
        %v1754 = vpop.f32.mrb[0].mxu0
        %v1755 = vpop.f32.mrb[0].mxu0
        %1756 = vdwg.mxu0
        %vm1757 = vcmp.ge.f32.partialorder %v1752, 0.0
        %v1758 = vmul.f32 %v1752, 0.01
        %v1759 = vsel %vm1757, %v1752, %v1758
        %v1760 = vpack.c.bf16 %v1759, %v1759
        %s1761 = scalar_lea.vmem %s219, 18 [#allocation7]
        %1762 = vst [vmem:[%s1761] sm:$0x3] %v1760
        %v1763 = vld [vmem:[#allocation2] sm:$0xf]
        %v1764 = vld [vmem:[%s197 + $0x28] sm:$0xf]
        %v1765 = vld [vmem:[%s197 + $0x68] sm:$0xf]
        %v1766 = vld [vmem:[%s197 + $0xa8] sm:$0xf]
        %v1767 = vld [vmem:[%s197 + $0xe8] sm:$0xf]
        %v1768 = vld [vmem:[%s197 + $0x128] sm:$0xf]
        %v1769 = vld [vmem:[%s197 + $0x168] sm:$0xf]
        %v1770 = vld [vmem:[%s197 + $0x1a8] sm:$0xf]
        %v1771 = vld [vmem:[%s197 + $0x1e8] sm:$0xf]
        %v1772 = vld [vmem:[%s197 + $0x228] sm:$0xf]
        %v1773 = vld [vmem:[%s197 + $0x268] sm:$0xf]
        %v1774 = vld [vmem:[%s197 + $0x2a8] sm:$0xf]
        %v1775 = vld [vmem:[%s197 + $0x2e8] sm:$0xf]
        %v1776 = vld [vmem:[%s197 + $0x328] sm:$0xf]
        %v1777 = vld [vmem:[%s197 + $0x368] sm:$0xf]
        %v1778 = vld [vmem:[%s197 + $0x3a8] sm:$0xf]
        %v1779 = vld [vmem:[%s197 + $0x3e8] sm:$0xf]
        %v1780 = vld [vmem:[%s197 + $0x428] sm:$0xf]
        %v1781 = vld [vmem:[%s197 + $0x468] sm:$0xf]
        %v1782 = vld [vmem:[%s197 + $0x4a8] sm:$0xf]
        %v1783 = vld [vmem:[%s197 + $0x4e8] sm:$0xf]
        %v1784 = vld [vmem:[%s197 + $0x528] sm:$0xf]
        %v1785 = vld [vmem:[%s197 + $0x568] sm:$0xf]
        %v1786 = vld [vmem:[%s1] sm:$0xf]
        %1788 = vset.pattern.permute.xlu0 0
        %1789 = vperm.xlu0 %1788, %v1786
        %v1790 = vpop.permute.xlu0 %1789
        %v1794 = vunpack.c.l.s4 1983009808
        %v1795 = vunpack.c.0.s8 %v1794
        %v1796 = vlaneseq
        %v1797 = vshrl.u32 %v1796, 7
        %v1798 = vsub.s32 %v1795, %v1797
        %v1799 = vrot.slane %v1763, %v1798
        %v1800 = vcombine.high %v1799, %v1799
        %v1824 = vunpack.c.l.b16 %v1764
        %v1825 = vunpack.c.l.b16 %v1765
        %v1826 = vunpack.c.l.b16 %v1766
        %v1827 = vunpack.c.l.b16 %v1767
        %v1828 = vunpack.c.l.b16 %v1768
        %v1829 = vunpack.c.l.b16 %v1769
        %v1830 = vunpack.c.l.b16 %v1770
        %v1831 = vunpack.c.l.b16 %v1771
        %v1832 = vunpack.c.l.b16 %v1772
        %v1833 = vunpack.c.l.b16 %v1773
        %v1834 = vunpack.c.l.b16 %v1774
        %v1835 = vunpack.c.l.b16 %v1775
        %v1836 = vunpack.c.l.b16 %v1776
        %v1837 = vunpack.c.l.b16 %v1777
        %v1838 = vunpack.c.l.b16 %v1778
        %v1839 = vunpack.c.l.b16 %v1779
        %v1840 = vunpack.c.l.b16 %v1780
        %v1841 = vunpack.c.l.b16 %v1781
        %v1842 = vunpack.c.l.b16 %v1782
        %v1843 = vunpack.c.l.b16 %v1783
        %v1844 = vunpack.c.l.b16 %v1784
        %v1845 = vunpack.c.l.b16 %v1785
        %v1846 = vpack.c.b16 %v1825, %v1824
        %v1847 = vpack.c.b16 %v1827, %v1826
        %v1848 = vpack.c.b16 %v1829, %v1828
        %v1849 = vpack.c.b16 %v1831, %v1830
        %v1850 = vpack.c.b16 %v1833, %v1832
        %v1851 = vpack.c.b16 %v1835, %v1834
        %v1852 = vpack.c.b16 %v1837, %v1836
        %v1853 = vpack.c.b16 %v1839, %v1838
        %v1854 = vpack.c.b16 %v1841, %v1840
        %v1855 = vpack.c.b16 %v1843, %v1842
        %v1856 = vpack.c.b16 %v1845, %v1844
        %v1869 = vsel %vm328, %v1800, 0
        %1871 = vmatprep.subr.bf16.mxu0 0
        %1872 = vmatpush1.bf16.msra.mxu0 %v1846
        %1873 = vmatprep.subr.bf16.mxu0 0
        %1874 = vmatpush1.bf16.msra.mxu0 %v1847
        %1875 = vmatprep.subr.bf16.mxu0 0
        %1876 = vmatpush1.bf16.msra.mxu0 %v1848
        %1877 = vmatprep.subr.bf16.mxu0 0
        %1878 = vmatpush1.bf16.msra.mxu0 %v1849
        %1879 = vmatprep.subr.bf16.mxu0 0
        %1880 = vmatpush1.bf16.msra.mxu0 %v1850
        %1881 = vmatprep.subr.bf16.mxu0 0
        %1882 = vmatpush1.bf16.msra.mxu0 %v1851
        %1883 = vmatprep.subr.bf16.mxu0 0
        %1884 = vmatpush1.bf16.msra.mxu0 %v1852
        %1885 = vmatprep.subr.bf16.mxu0 0
        %1886 = vmatpush1.bf16.msra.mxu0 %v1853
        %1887 = vmatprep.subr.bf16.mxu0 0
        %1888 = vmatpush1.bf16.msra.mxu0 %v1854
        %1889 = vmatprep.subr.bf16.mxu0 0
        %1890 = vmatpush1.bf16.msra.mxu0 %v1855
        %1891 = vmatprep.subr.bf16.mxu0 0
        %1892 = vmatpush1.bf16.msra.mxu0 %v1856
        %1893 = vmatprep.subr.bf16.mxu0 0
        %1894 = vmatpush1.bf16.msra.mxu0 0
        %1895 = vmatprep.subr.bf16.mxu0 0
        %1896 = vmatpush1.bf16.msra.mxu0 0
        %1897 = vmatprep.subr.bf16.mxu0 0
        %1898 = vmatpush1.bf16.msra.mxu0 0
        %1899 = vmatprep.subr.bf16.mxu0 0
        %1900 = vmatpush1.bf16.msra.mxu0 0
        %1901 = vmatprep.subr.bf16.mxu0 0
        %1902 = vmatpush1.bf16.msra.mxu0 0
        %1903 = vmatprep.mubr.bf16.mxu0 %v1869
        %1904 = vmatmul.mubr.bf16.gmra.mrb[0].mxu0 %v1799
        %v1905 = vpop.f32.mrb[0].mxu0
        %v1906 = vadd.f32 %v1790, %v1905
        %v1907 = vpop.f32.mrb[0].mxu0
        %v1908 = vpop.f32.mrb[0].mxu0
        %v1909 = vpop.f32.mrb[0].mxu0
        %1910 = vdwg.mxu0
        %vm1911 = vcmp.ge.f32.partialorder %v1906, 0.0
        %v1912 = vmul.f32 %v1906, 0.01
        %v1913 = vsel %vm1911, %v1906, %v1912
        %v1914 = vpack.c.bf16 %v1913, %v1913
        %s1915 = scalar_lea.vmem %s219, 20 [#allocation7]
        %1916 = vst [vmem:[%s1915] sm:$0x3] %v1914
        %v1917 = vld [vmem:[#allocation2] sm:$0xf]
        %v1918 = vld [vmem:[%s197 + $0x2c] sm:$0xf]
        %v1919 = vld [vmem:[%s197 + $0x6c] sm:$0xf]
        %v1920 = vld [vmem:[%s197 + $0xac] sm:$0xf]
        %v1921 = vld [vmem:[%s197 + $0xec] sm:$0xf]
        %v1922 = vld [vmem:[%s197 + $0x12c] sm:$0xf]
        %v1923 = vld [vmem:[%s197 + $0x16c] sm:$0xf]
        %v1924 = vld [vmem:[%s197 + $0x1ac] sm:$0xf]
        %v1925 = vld [vmem:[%s197 + $0x1ec] sm:$0xf]
        %v1926 = vld [vmem:[%s197 + $0x22c] sm:$0xf]
        %v1927 = vld [vmem:[%s197 + $0x26c] sm:$0xf]
        %v1928 = vld [vmem:[%s197 + $0x2ac] sm:$0xf]
        %v1929 = vld [vmem:[%s197 + $0x2ec] sm:$0xf]
        %v1930 = vld [vmem:[%s197 + $0x32c] sm:$0xf]
        %v1931 = vld [vmem:[%s197 + $0x36c] sm:$0xf]
        %v1932 = vld [vmem:[%s197 + $0x3ac] sm:$0xf]
        %v1933 = vld [vmem:[%s197 + $0x3ec] sm:$0xf]
        %v1934 = vld [vmem:[%s197 + $0x42c] sm:$0xf]
        %v1935 = vld [vmem:[%s197 + $0x46c] sm:$0xf]
        %v1936 = vld [vmem:[%s197 + $0x4ac] sm:$0xf]
        %v1937 = vld [vmem:[%s197 + $0x4ec] sm:$0xf]
        %v1938 = vld [vmem:[%s197 + $0x52c] sm:$0xf]
        %v1939 = vld [vmem:[%s197 + $0x56c] sm:$0xf]
        %v1940 = vld [vmem:[%s1] sm:$0xf]
        %1942 = vset.pattern.permute.xlu0 0
        %1943 = vperm.xlu0 %1942, %v1940
        %v1944 = vpop.permute.xlu0 %1943
        %v1948 = vunpack.c.l.s4 1983009808
        %v1949 = vunpack.c.0.s8 %v1948
        %v1950 = vlaneseq
        %v1951 = vshrl.u32 %v1950, 7
        %v1952 = vsub.s32 %v1949, %v1951
        %v1953 = vrot.slane %v1917, %v1952
        %v1954 = vcombine.high %v1953, %v1953
        %v1978 = vunpack.c.l.b16 %v1918
        %v1979 = vunpack.c.l.b16 %v1919
        %v1980 = vunpack.c.l.b16 %v1920
        %v1981 = vunpack.c.l.b16 %v1921
        %v1982 = vunpack.c.l.b16 %v1922
        %v1983 = vunpack.c.l.b16 %v1923
        %v1984 = vunpack.c.l.b16 %v1924
        %v1985 = vunpack.c.l.b16 %v1925
        %v1986 = vunpack.c.l.b16 %v1926
        %v1987 = vunpack.c.l.b16 %v1927
        %v1988 = vunpack.c.l.b16 %v1928
        %v1989 = vunpack.c.l.b16 %v1929
        %v1990 = vunpack.c.l.b16 %v1930
        %v1991 = vunpack.c.l.b16 %v1931
        %v1992 = vunpack.c.l.b16 %v1932
        %v1993 = vunpack.c.l.b16 %v1933
        %v1994 = vunpack.c.l.b16 %v1934
        %v1995 = vunpack.c.l.b16 %v1935
        %v1996 = vunpack.c.l.b16 %v1936
        %v1997 = vunpack.c.l.b16 %v1937
        %v1998 = vunpack.c.l.b16 %v1938
        %v1999 = vunpack.c.l.b16 %v1939
        %v2000 = vpack.c.b16 %v1979, %v1978
        %v2001 = vpack.c.b16 %v1981, %v1980
        %v2002 = vpack.c.b16 %v1983, %v1982
        %v2003 = vpack.c.b16 %v1985, %v1984
        %v2004 = vpack.c.b16 %v1987, %v1986
        %v2005 = vpack.c.b16 %v1989, %v1988
        %v2006 = vpack.c.b16 %v1991, %v1990
        %v2007 = vpack.c.b16 %v1993, %v1992
        %v2008 = vpack.c.b16 %v1995, %v1994
        %v2009 = vpack.c.b16 %v1997, %v1996
        %v2010 = vpack.c.b16 %v1999, %v1998
        %v2023 = vsel %vm328, %v1954, 0
        %2025 = vmatprep.subr.bf16.mxu0 0
        %2026 = vmatpush1.bf16.msra.mxu0 %v2000
        %2027 = vmatprep.subr.bf16.mxu0 0
        %2028 = vmatpush1.bf16.msra.mxu0 %v2001
        %2029 = vmatprep.subr.bf16.mxu0 0
        %2030 = vmatpush1.bf16.msra.mxu0 %v2002
        %2031 = vmatprep.subr.bf16.mxu0 0
        %2032 = vmatpush1.bf16.msra.mxu0 %v2003
        %2033 = vmatprep.subr.bf16.mxu0 0
        %2034 = vmatpush1.bf16.msra.mxu0 %v2004
        %2035 = vmatprep.subr.bf16.mxu0 0
        %2036 = vmatpush1.bf16.msra.mxu0 %v2005
        %2037 = vmatprep.subr.bf16.mxu0 0
        %2038 = vmatpush1.bf16.msra.mxu0 %v2006
        %2039 = vmatprep.subr.bf16.mxu0 0
        %2040 = vmatpush1.bf16.msra.mxu0 %v2007
        %2041 = vmatprep.subr.bf16.mxu0 0
        %2042 = vmatpush1.bf16.msra.mxu0 %v2008
        %2043 = vmatprep.subr.bf16.mxu0 0
        %2044 = vmatpush1.bf16.msra.mxu0 %v2009
        %2045 = vmatprep.subr.bf16.mxu0 0
        %2046 = vmatpush1.bf16.msra.mxu0 %v2010
        %2047 = vmatprep.subr.bf16.mxu0 0
        %2048 = vmatpush1.bf16.msra.mxu0 0
        %2049 = vmatprep.subr.bf16.mxu0 0
        %2050 = vmatpush1.bf16.msra.mxu0 0
        %2051 = vmatprep.subr.bf16.mxu0 0
        %2052 = vmatpush1.bf16.msra.mxu0 0
        %2053 = vmatprep.subr.bf16.mxu0 0
        %2054 = vmatpush1.bf16.msra.mxu0 0
        %2055 = vmatprep.subr.bf16.mxu0 0
        %2056 = vmatpush1.bf16.msra.mxu0 0
        %2057 = vmatprep.mubr.bf16.mxu0 %v2023
        %2058 = vmatmul.mubr.bf16.gmra.mrb[0].mxu0 %v1953
        %v2059 = vpop.f32.mrb[0].mxu0
        %v2060 = vadd.f32 %v1944, %v2059
        %v2061 = vpop.f32.mrb[0].mxu0
        %v2062 = vpop.f32.mrb[0].mxu0
        %v2063 = vpop.f32.mrb[0].mxu0
        %2064 = vdwg.mxu0
        %vm2065 = vcmp.ge.f32.partialorder %v2060, 0.0
        %v2066 = vmul.f32 %v2060, 0.01
        %v2067 = vsel %vm2065, %v2060, %v2066
        %v2068 = vpack.c.bf16 %v2067, %v2067
        %s2069 = scalar_lea.vmem %s219, 22 [#allocation7]
        %2070 = vst [vmem:[%s2069] sm:$0x3] %v2068
        %v2071 = vld [vmem:[#allocation2] sm:$0xf]
        %v2072 = vld [vmem:[%s197 + $0x30] sm:$0xf]
        %v2073 = vld [vmem:[%s197 + $0x70] sm:$0xf]
        %v2074 = vld [vmem:[%s197 + $0xb0] sm:$0xf]
        %v2075 = vld [vmem:[%s197 + $0xf0] sm:$0xf]
        %v2076 = vld [vmem:[%s197 + $0x130] sm:$0xf]
        %v2077 = vld [vmem:[%s197 + $0x170] sm:$0xf]
        %v2078 = vld [vmem:[%s197 + $0x1b0] sm:$0xf]
        %v2079 = vld [vmem:[%s197 + $0x1f0] sm:$0xf]
        %v2080 = vld [vmem:[%s197 + $0x230] sm:$0xf]
        %v2081 = vld [vmem:[%s197 + $0x270] sm:$0xf]
        %v2082 = vld [vmem:[%s197 + $0x2b0] sm:$0xf]
        %v2083 = vld [vmem:[%s197 + $0x2f0] sm:$0xf]
        %v2084 = vld [vmem:[%s197 + $0x330] sm:$0xf]
        %v2085 = vld [vmem:[%s197 + $0x370] sm:$0xf]
        %v2086 = vld [vmem:[%s197 + $0x3b0] sm:$0xf]
        %v2087 = vld [vmem:[%s197 + $0x3f0] sm:$0xf]
        %v2088 = vld [vmem:[%s197 + $0x430] sm:$0xf]
        %v2089 = vld [vmem:[%s197 + $0x470] sm:$0xf]
        %v2090 = vld [vmem:[%s197 + $0x4b0] sm:$0xf]
        %v2091 = vld [vmem:[%s197 + $0x4f0] sm:$0xf]
        %v2092 = vld [vmem:[%s197 + $0x530] sm:$0xf]
        %v2093 = vld [vmem:[%s197 + $0x570] sm:$0xf]
        %v2094 = vld [vmem:[%s1] sm:$0xf]
        %2096 = vset.pattern.permute.xlu0 0
        %2097 = vperm.xlu0 %2096, %v2094
        %v2098 = vpop.permute.xlu0 %2097
        %v2102 = vunpack.c.l.s4 1983009808
        %v2103 = vunpack.c.0.s8 %v2102
        %v2104 = vlaneseq
        %v2105 = vshrl.u32 %v2104, 7
        %v2106 = vsub.s32 %v2103, %v2105
        %v2107 = vrot.slane %v2071, %v2106
        %v2108 = vcombine.high %v2107, %v2107
        %v2132 = vunpack.c.l.b16 %v2072
        %v2133 = vunpack.c.l.b16 %v2073
        %v2134 = vunpack.c.l.b16 %v2074
        %v2135 = vunpack.c.l.b16 %v2075
        %v2136 = vunpack.c.l.b16 %v2076
        %v2137 = vunpack.c.l.b16 %v2077
        %v2138 = vunpack.c.l.b16 %v2078
        %v2139 = vunpack.c.l.b16 %v2079
        %v2140 = vunpack.c.l.b16 %v2080
        %v2141 = vunpack.c.l.b16 %v2081
        %v2142 = vunpack.c.l.b16 %v2082
        %v2143 = vunpack.c.l.b16 %v2083
        %v2144 = vunpack.c.l.b16 %v2084
        %v2145 = vunpack.c.l.b16 %v2085
        %v2146 = vunpack.c.l.b16 %v2086
        %v2147 = vunpack.c.l.b16 %v2087
        %v2148 = vunpack.c.l.b16 %v2088
        %v2149 = vunpack.c.l.b16 %v2089
        %v2150 = vunpack.c.l.b16 %v2090
        %v2151 = vunpack.c.l.b16 %v2091
        %v2152 = vunpack.c.l.b16 %v2092
        %v2153 = vunpack.c.l.b16 %v2093
        %v2154 = vpack.c.b16 %v2133, %v2132
        %v2155 = vpack.c.b16 %v2135, %v2134
        %v2156 = vpack.c.b16 %v2137, %v2136
        %v2157 = vpack.c.b16 %v2139, %v2138
        %v2158 = vpack.c.b16 %v2141, %v2140
        %v2159 = vpack.c.b16 %v2143, %v2142
        %v2160 = vpack.c.b16 %v2145, %v2144
        %v2161 = vpack.c.b16 %v2147, %v2146
        %v2162 = vpack.c.b16 %v2149, %v2148
        %v2163 = vpack.c.b16 %v2151, %v2150
        %v2164 = vpack.c.b16 %v2153, %v2152
        %v2177 = vsel %vm328, %v2108, 0
        %2179 = vmatprep.subr.bf16.mxu0 0
        %2180 = vmatpush1.bf16.msra.mxu0 %v2154
        %2181 = vmatprep.subr.bf16.mxu0 0
        %2182 = vmatpush1.bf16.msra.mxu0 %v2155
        %2183 = vmatprep.subr.bf16.mxu0 0
        %2184 = vmatpush1.bf16.msra.mxu0 %v2156
        %2185 = vmatprep.subr.bf16.mxu0 0
        %2186 = vmatpush1.bf16.msra.mxu0 %v2157
        %2187 = vmatprep.subr.bf16.mxu0 0
        %2188 = vmatpush1.bf16.msra.mxu0 %v2158
        %2189 = vmatprep.subr.bf16.mxu0 0
        %2190 = vmatpush1.bf16.msra.mxu0 %v2159
        %2191 = vmatprep.subr.bf16.mxu0 0
        %2192 = vmatpush1.bf16.msra.mxu0 %v2160
        %2193 = vmatprep.subr.bf16.mxu0 0
        %2194 = vmatpush1.bf16.msra.mxu0 %v2161
        %2195 = vmatprep.subr.bf16.mxu0 0
        %2196 = vmatpush1.bf16.msra.mxu0 %v2162
        %2197 = vmatprep.subr.bf16.mxu0 0
        %2198 = vmatpush1.bf16.msra.mxu0 %v2163
        %2199 = vmatprep.subr.bf16.mxu0 0
        %2200 = vmatpush1.bf16.msra.mxu0 %v2164
        %2201 = vmatprep.subr.bf16.mxu0 0
        %2202 = vmatpush1.bf16.msra.mxu0 0
        %2203 = vmatprep.subr.bf16.mxu0 0
        %2204 = vmatpush1.bf16.msra.mxu0 0
        %2205 = vmatprep.subr.bf16.mxu0 0
        %2206 = vmatpush1.bf16.msra.mxu0 0
        %2207 = vmatprep.subr.bf16.mxu0 0
        %2208 = vmatpush1.bf16.msra.mxu0 0
        %2209 = vmatprep.subr.bf16.mxu0 0
        %2210 = vmatpush1.bf16.msra.mxu0 0
        %2211 = vmatprep.mubr.bf16.mxu0 %v2177
        %2212 = vmatmul.mubr.bf16.gmra.mrb[0].mxu0 %v2107
        %v2213 = vpop.f32.mrb[0].mxu0
        %v2214 = vadd.f32 %v2098, %v2213
        %v2215 = vpop.f32.mrb[0].mxu0
        %v2216 = vpop.f32.mrb[0].mxu0
        %v2217 = vpop.f32.mrb[0].mxu0
        %2218 = vdwg.mxu0
        %vm2219 = vcmp.ge.f32.partialorder %v2214, 0.0
        %v2220 = vmul.f32 %v2214, 0.01
        %v2221 = vsel %vm2219, %v2214, %v2220
        %v2222 = vpack.c.bf16 %v2221, %v2221
        %s2223 = scalar_lea.vmem %s219, 24 [#allocation7]
        %2224 = vst [vmem:[%s2223] sm:$0x3] %v2222
        %v2225 = vld [vmem:[#allocation2] sm:$0xf]
        %v2226 = vld [vmem:[%s197 + $0x34] sm:$0xf]
        %v2227 = vld [vmem:[%s197 + $0x74] sm:$0xf]
        %v2228 = vld [vmem:[%s197 + $0xb4] sm:$0xf]
        %v2229 = vld [vmem:[%s197 + $0xf4] sm:$0xf]
        %v2230 = vld [vmem:[%s197 + $0x134] sm:$0xf]
        %v2231 = vld [vmem:[%s197 + $0x174] sm:$0xf]
        %v2232 = vld [vmem:[%s197 + $0x1b4] sm:$0xf]
        %v2233 = vld [vmem:[%s197 + $0x1f4] sm:$0xf]
        %v2234 = vld [vmem:[%s197 + $0x234] sm:$0xf]
        %v2235 = vld [vmem:[%s197 + $0x274] sm:$0xf]
        %v2236 = vld [vmem:[%s197 + $0x2b4] sm:$0xf]
        %v2237 = vld [vmem:[%s197 + $0x2f4] sm:$0xf]
        %v2238 = vld [vmem:[%s197 + $0x334] sm:$0xf]
        %v2239 = vld [vmem:[%s197 + $0x374] sm:$0xf]
        %v2240 = vld [vmem:[%s197 + $0x3b4] sm:$0xf]
        %v2241 = vld [vmem:[%s197 + $0x3f4] sm:$0xf]
        %v2242 = vld [vmem:[%s197 + $0x434] sm:$0xf]
        %v2243 = vld [vmem:[%s197 + $0x474] sm:$0xf]
        %v2244 = vld [vmem:[%s197 + $0x4b4] sm:$0xf]
        %v2245 = vld [vmem:[%s197 + $0x4f4] sm:$0xf]
        %v2246 = vld [vmem:[%s197 + $0x534] sm:$0xf]
        %v2247 = vld [vmem:[%s197 + $0x574] sm:$0xf]
        %v2248 = vld [vmem:[%s1] sm:$0xf]
        %2250 = vset.pattern.permute.xlu0 0
        %2251 = vperm.xlu0 %2250, %v2248
        %v2252 = vpop.permute.xlu0 %2251
        %v2256 = vunpack.c.l.s4 1983009808
        %v2257 = vunpack.c.0.s8 %v2256
        %v2258 = vlaneseq
        %v2259 = vshrl.u32 %v2258, 7
        %v2260 = vsub.s32 %v2257, %v2259
        %v2261 = vrot.slane %v2225, %v2260
        %v2262 = vcombine.high %v2261, %v2261
        %v2286 = vunpack.c.l.b16 %v2226
        %v2287 = vunpack.c.l.b16 %v2227
        %v2288 = vunpack.c.l.b16 %v2228
        %v2289 = vunpack.c.l.b16 %v2229
        %v2290 = vunpack.c.l.b16 %v2230
        %v2291 = vunpack.c.l.b16 %v2231
        %v2292 = vunpack.c.l.b16 %v2232
        %v2293 = vunpack.c.l.b16 %v2233
        %v2294 = vunpack.c.l.b16 %v2234
        %v2295 = vunpack.c.l.b16 %v2235
        %v2296 = vunpack.c.l.b16 %v2236
        %v2297 = vunpack.c.l.b16 %v2237
        %v2298 = vunpack.c.l.b16 %v2238
        %v2299 = vunpack.c.l.b16 %v2239
        %v2300 = vunpack.c.l.b16 %v2240
        %v2301 = vunpack.c.l.b16 %v2241
        %v2302 = vunpack.c.l.b16 %v2242
        %v2303 = vunpack.c.l.b16 %v2243
        %v2304 = vunpack.c.l.b16 %v2244
        %v2305 = vunpack.c.l.b16 %v2245
        %v2306 = vunpack.c.l.b16 %v2246
        %v2307 = vunpack.c.l.b16 %v2247
        %v2308 = vpack.c.b16 %v2287, %v2286
        %v2309 = vpack.c.b16 %v2289, %v2288
        %v2310 = vpack.c.b16 %v2291, %v2290
        %v2311 = vpack.c.b16 %v2293, %v2292
        %v2312 = vpack.c.b16 %v2295, %v2294
        %v2313 = vpack.c.b16 %v2297, %v2296
        %v2314 = vpack.c.b16 %v2299, %v2298
        %v2315 = vpack.c.b16 %v2301, %v2300
        %v2316 = vpack.c.b16 %v2303, %v2302
        %v2317 = vpack.c.b16 %v2305, %v2304
        %v2318 = vpack.c.b16 %v2307, %v2306
        %v2331 = vsel %vm328, %v2262, 0
        %2333 = vmatprep.subr.bf16.mxu0 0
        %2334 = vmatpush1.bf16.msra.mxu0 %v2308
        %2335 = vmatprep.subr.bf16.mxu0 0
        %2336 = vmatpush1.bf16.msra.mxu0 %v2309
        %2337 = vmatprep.subr.bf16.mxu0 0
        %2338 = vmatpush1.bf16.msra.mxu0 %v2310
        %2339 = vmatprep.subr.bf16.mxu0 0
        %2340 = vmatpush1.bf16.msra.mxu0 %v2311
        %2341 = vmatprep.subr.bf16.mxu0 0
        %2342 = vmatpush1.bf16.msra.mxu0 %v2312
        %2343 = vmatprep.subr.bf16.mxu0 0
        %2344 = vmatpush1.bf16.msra.mxu0 %v2313
        %2345 = vmatprep.subr.bf16.mxu0 0
        %2346 = vmatpush1.bf16.msra.mxu0 %v2314
        %2347 = vmatprep.subr.bf16.mxu0 0
        %2348 = vmatpush1.bf16.msra.mxu0 %v2315
        %2349 = vmatprep.subr.bf16.mxu0 0
        %2350 = vmatpush1.bf16.msra.mxu0 %v2316
        %2351 = vmatprep.subr.bf16.mxu0 0
        %2352 = vmatpush1.bf16.msra.mxu0 %v2317
        %2353 = vmatprep.subr.bf16.mxu0 0
        %2354 = vmatpush1.bf16.msra.mxu0 %v2318
        %2355 = vmatprep.subr.bf16.mxu0 0
        %2356 = vmatpush1.bf16.msra.mxu0 0
        %2357 = vmatprep.subr.bf16.mxu0 0
        %2358 = vmatpush1.bf16.msra.mxu0 0
        %2359 = vmatprep.subr.bf16.mxu0 0
        %2360 = vmatpush1.bf16.msra.mxu0 0
        %2361 = vmatprep.subr.bf16.mxu0 0
        %2362 = vmatpush1.bf16.msra.mxu0 0
        %2363 = vmatprep.subr.bf16.mxu0 0
        %2364 = vmatpush1.bf16.msra.mxu0 0
        %2365 = vmatprep.mubr.bf16.mxu0 %v2331
        %2366 = vmatmul.mubr.bf16.gmra.mrb[0].mxu0 %v2261
        %v2367 = vpop.f32.mrb[0].mxu0
        %v2368 = vadd.f32 %v2252, %v2367
        %v2369 = vpop.f32.mrb[0].mxu0
        %v2370 = vpop.f32.mrb[0].mxu0
        %v2371 = vpop.f32.mrb[0].mxu0
        %2372 = vdwg.mxu0
        %vm2373 = vcmp.ge.f32.partialorder %v2368, 0.0
        %v2374 = vmul.f32 %v2368, 0.01
        %v2375 = vsel %vm2373, %v2368, %v2374
        %v2376 = vpack.c.bf16 %v2375, %v2375
        %s2377 = scalar_lea.vmem %s219, 26 [#allocation7]
        %2378 = vst [vmem:[%s2377] sm:$0x3] %v2376
        %v2379 = vld [vmem:[#allocation2] sm:$0xf]
        %v2380 = vld [vmem:[%s197 + $0x38] sm:$0xf]
        %v2381 = vld [vmem:[%s197 + $0x78] sm:$0xf]
        %v2382 = vld [vmem:[%s197 + $0xb8] sm:$0xf]
        %v2383 = vld [vmem:[%s197 + $0xf8] sm:$0xf]
        %v2384 = vld [vmem:[%s197 + $0x138] sm:$0xf]
        %v2385 = vld [vmem:[%s197 + $0x178] sm:$0xf]
        %v2386 = vld [vmem:[%s197 + $0x1b8] sm:$0xf]
        %v2387 = vld [vmem:[%s197 + $0x1f8] sm:$0xf]
        %v2388 = vld [vmem:[%s197 + $0x238] sm:$0xf]
        %v2389 = vld [vmem:[%s197 + $0x278] sm:$0xf]
        %v2390 = vld [vmem:[%s197 + $0x2b8] sm:$0xf]
        %v2391 = vld [vmem:[%s197 + $0x2f8] sm:$0xf]
        %v2392 = vld [vmem:[%s197 + $0x338] sm:$0xf]
        %v2393 = vld [vmem:[%s197 + $0x378] sm:$0xf]
        %v2394 = vld [vmem:[%s197 + $0x3b8] sm:$0xf]
        %v2395 = vld [vmem:[%s197 + $0x3f8] sm:$0xf]
        %v2396 = vld [vmem:[%s197 + $0x438] sm:$0xf]
        %v2397 = vld [vmem:[%s197 + $0x478] sm:$0xf]
        %v2398 = vld [vmem:[%s197 + $0x4b8] sm:$0xf]
        %v2399 = vld [vmem:[%s197 + $0x4f8] sm:$0xf]
        %v2400 = vld [vmem:[%s197 + $0x538] sm:$0xf]
        %v2401 = vld [vmem:[%s197 + $0x578] sm:$0xf]
        %v2402 = vld [vmem:[%s1] sm:$0xf]
        %2404 = vset.pattern.permute.xlu0 0
        %2405 = vperm.xlu0 %2404, %v2402
        %v2406 = vpop.permute.xlu0 %2405
        %v2410 = vunpack.c.l.s4 1983009808
        %v2411 = vunpack.c.0.s8 %v2410
        %v2412 = vlaneseq
        %v2413 = vshrl.u32 %v2412, 7
        %v2414 = vsub.s32 %v2411, %v2413
        %v2415 = vrot.slane %v2379, %v2414
        %v2416 = vcombine.high %v2415, %v2415
        %v2440 = vunpack.c.l.b16 %v2380
        %v2441 = vunpack.c.l.b16 %v2381
        %v2442 = vunpack.c.l.b16 %v2382
        %v2443 = vunpack.c.l.b16 %v2383
        %v2444 = vunpack.c.l.b16 %v2384
        %v2445 = vunpack.c.l.b16 %v2385
        %v2446 = vunpack.c.l.b16 %v2386
        %v2447 = vunpack.c.l.b16 %v2387
        %v2448 = vunpack.c.l.b16 %v2388
        %v2449 = vunpack.c.l.b16 %v2389
        %v2450 = vunpack.c.l.b16 %v2390
        %v2451 = vunpack.c.l.b16 %v2391
        %v2452 = vunpack.c.l.b16 %v2392
        %v2453 = vunpack.c.l.b16 %v2393
        %v2454 = vunpack.c.l.b16 %v2394
        %v2455 = vunpack.c.l.b16 %v2395
        %v2456 = vunpack.c.l.b16 %v2396
        %v2457 = vunpack.c.l.b16 %v2397
        %v2458 = vunpack.c.l.b16 %v2398
        %v2459 = vunpack.c.l.b16 %v2399
        %v2460 = vunpack.c.l.b16 %v2400
        %v2461 = vunpack.c.l.b16 %v2401
        %v2462 = vpack.c.b16 %v2441, %v2440
        %v2463 = vpack.c.b16 %v2443, %v2442
        %v2464 = vpack.c.b16 %v2445, %v2444
        %v2465 = vpack.c.b16 %v2447, %v2446
        %v2466 = vpack.c.b16 %v2449, %v2448
        %v2467 = vpack.c.b16 %v2451, %v2450
        %v2468 = vpack.c.b16 %v2453, %v2452
        %v2469 = vpack.c.b16 %v2455, %v2454
        %v2470 = vpack.c.b16 %v2457, %v2456
        %v2471 = vpack.c.b16 %v2459, %v2458
        %v2472 = vpack.c.b16 %v2461, %v2460
        %v2485 = vsel %vm328, %v2416, 0
        %2487 = vmatprep.subr.bf16.mxu0 0
        %2488 = vmatpush1.bf16.msra.mxu0 %v2462
        %2489 = vmatprep.subr.bf16.mxu0 0
        %2490 = vmatpush1.bf16.msra.mxu0 %v2463
        %2491 = vmatprep.subr.bf16.mxu0 0
        %2492 = vmatpush1.bf16.msra.mxu0 %v2464
        %2493 = vmatprep.subr.bf16.mxu0 0
        %2494 = vmatpush1.bf16.msra.mxu0 %v2465
        %2495 = vmatprep.subr.bf16.mxu0 0
        %2496 = vmatpush1.bf16.msra.mxu0 %v2466
        %2497 = vmatprep.subr.bf16.mxu0 0
        %2498 = vmatpush1.bf16.msra.mxu0 %v2467
        %2499 = vmatprep.subr.bf16.mxu0 0
        %2500 = vmatpush1.bf16.msra.mxu0 %v2468
        %2501 = vmatprep.subr.bf16.mxu0 0
        %2502 = vmatpush1.bf16.msra.mxu0 %v2469
        %2503 = vmatprep.subr.bf16.mxu0 0
        %2504 = vmatpush1.bf16.msra.mxu0 %v2470
        %2505 = vmatprep.subr.bf16.mxu0 0
        %2506 = vmatpush1.bf16.msra.mxu0 %v2471
        %2507 = vmatprep.subr.bf16.mxu0 0
        %2508 = vmatpush1.bf16.msra.mxu0 %v2472
        %2509 = vmatprep.subr.bf16.mxu0 0
        %2510 = vmatpush1.bf16.msra.mxu0 0
        %2511 = vmatprep.subr.bf16.mxu0 0
        %2512 = vmatpush1.bf16.msra.mxu0 0
        %2513 = vmatprep.subr.bf16.mxu0 0
        %2514 = vmatpush1.bf16.msra.mxu0 0
        %2515 = vmatprep.subr.bf16.mxu0 0
        %2516 = vmatpush1.bf16.msra.mxu0 0
        %2517 = vmatprep.subr.bf16.mxu0 0
        %2518 = vmatpush1.bf16.msra.mxu0 0
        %2519 = vmatprep.mubr.bf16.mxu0 %v2485
        %2520 = vmatmul.mubr.bf16.gmra.mrb[0].mxu0 %v2415
        %v2521 = vpop.f32.mrb[0].mxu0
        %v2522 = vadd.f32 %v2406, %v2521
        %v2523 = vpop.f32.mrb[0].mxu0
        %v2524 = vpop.f32.mrb[0].mxu0
        %v2525 = vpop.f32.mrb[0].mxu0
        %2526 = vdwg.mxu0
        %vm2527 = vcmp.ge.f32.partialorder %v2522, 0.0
        %v2528 = vmul.f32 %v2522, 0.01
        %v2529 = vsel %vm2527, %v2522, %v2528
        %v2530 = vpack.c.bf16 %v2529, %v2529
        %s2531 = scalar_lea.vmem %s219, 28 [#allocation7]
        %2532 = vst [vmem:[%s2531] sm:$0x3] %v2530
        %v2533 = vld [vmem:[#allocation2] sm:$0xf]
        %v2534 = vld [vmem:[%s197 + $0x3c] sm:$0xf]
        %v2535 = vld [vmem:[%s197 + $0x7c] sm:$0xf]
        %v2536 = vld [vmem:[%s197 + $0xbc] sm:$0xf]
        %v2537 = vld [vmem:[%s197 + $0xfc] sm:$0xf]
        %v2538 = vld [vmem:[%s197 + $0x13c] sm:$0xf]
        %v2539 = vld [vmem:[%s197 + $0x17c] sm:$0xf]
        %v2540 = vld [vmem:[%s197 + $0x1bc] sm:$0xf]
        %v2541 = vld [vmem:[%s197 + $0x1fc] sm:$0xf]
        %v2542 = vld [vmem:[%s197 + $0x23c] sm:$0xf]
        %v2543 = vld [vmem:[%s197 + $0x27c] sm:$0xf]
        %v2544 = vld [vmem:[%s197 + $0x2bc] sm:$0xf]
        %v2545 = vld [vmem:[%s197 + $0x2fc] sm:$0xf]
        %v2546 = vld [vmem:[%s197 + $0x33c] sm:$0xf]
        %v2547 = vld [vmem:[%s197 + $0x37c] sm:$0xf]
        %v2548 = vld [vmem:[%s197 + $0x3bc] sm:$0xf]
        %v2549 = vld [vmem:[%s197 + $0x3fc] sm:$0xf]
        %v2550 = vld [vmem:[%s197 + $0x43c] sm:$0xf]
        %v2551 = vld [vmem:[%s197 + $0x47c] sm:$0xf]
        %v2552 = vld [vmem:[%s197 + $0x4bc] sm:$0xf]
        %v2553 = vld [vmem:[%s197 + $0x4fc] sm:$0xf]
        %v2554 = vld [vmem:[%s197 + $0x53c] sm:$0xf]
        %v2555 = vld [vmem:[%s197 + $0x57c] sm:$0xf]
        %v2556 = vld [vmem:[%s1] sm:$0xf]
        %2558 = vset.pattern.permute.xlu0 0
        %2559 = vperm.xlu0 %2558, %v2556
        %v2560 = vpop.permute.xlu0 %2559
        %v2564 = vunpack.c.l.s4 1983009808
        %v2565 = vunpack.c.0.s8 %v2564
        %v2566 = vlaneseq
        %v2567 = vshrl.u32 %v2566, 7
        %v2568 = vsub.s32 %v2565, %v2567
        %v2569 = vrot.slane %v2533, %v2568
        %v2570 = vcombine.high %v2569, %v2569
        %v2594 = vunpack.c.l.b16 %v2534
        %v2595 = vunpack.c.l.b16 %v2535
        %v2596 = vunpack.c.l.b16 %v2536
        %v2597 = vunpack.c.l.b16 %v2537
        %v2598 = vunpack.c.l.b16 %v2538
        %v2599 = vunpack.c.l.b16 %v2539
        %v2600 = vunpack.c.l.b16 %v2540
        %v2601 = vunpack.c.l.b16 %v2541
        %v2602 = vunpack.c.l.b16 %v2542
        %v2603 = vunpack.c.l.b16 %v2543
        %v2604 = vunpack.c.l.b16 %v2544
        %v2605 = vunpack.c.l.b16 %v2545
        %v2606 = vunpack.c.l.b16 %v2546
        %v2607 = vunpack.c.l.b16 %v2547
        %v2608 = vunpack.c.l.b16 %v2548
        %v2609 = vunpack.c.l.b16 %v2549
        %v2610 = vunpack.c.l.b16 %v2550
        %v2611 = vunpack.c.l.b16 %v2551
        %v2612 = vunpack.c.l.b16 %v2552
        %v2613 = vunpack.c.l.b16 %v2553
        %v2614 = vunpack.c.l.b16 %v2554
        %v2615 = vunpack.c.l.b16 %v2555
        %v2616 = vpack.c.b16 %v2595, %v2594
        %v2617 = vpack.c.b16 %v2597, %v2596
        %v2618 = vpack.c.b16 %v2599, %v2598
        %v2619 = vpack.c.b16 %v2601, %v2600
        %v2620 = vpack.c.b16 %v2603, %v2602
        %v2621 = vpack.c.b16 %v2605, %v2604
        %v2622 = vpack.c.b16 %v2607, %v2606
        %v2623 = vpack.c.b16 %v2609, %v2608
        %v2624 = vpack.c.b16 %v2611, %v2610
        %v2625 = vpack.c.b16 %v2613, %v2612
        %v2626 = vpack.c.b16 %v2615, %v2614
        %v2639 = vsel %vm328, %v2570, 0
        %2641 = vmatprep.subr.bf16.mxu0 0
        %2642 = vmatpush1.bf16.msra.mxu0 %v2616
        %2643 = vmatprep.subr.bf16.mxu0 0
        %2644 = vmatpush1.bf16.msra.mxu0 %v2617
        %2645 = vmatprep.subr.bf16.mxu0 0
        %2646 = vmatpush1.bf16.msra.mxu0 %v2618
        %2647 = vmatprep.subr.bf16.mxu0 0
        %2648 = vmatpush1.bf16.msra.mxu0 %v2619
        %2649 = vmatprep.subr.bf16.mxu0 0
        %2650 = vmatpush1.bf16.msra.mxu0 %v2620
        %2651 = vmatprep.subr.bf16.mxu0 0
        %2652 = vmatpush1.bf16.msra.mxu0 %v2621
        %2653 = vmatprep.subr.bf16.mxu0 0
        %2654 = vmatpush1.bf16.msra.mxu0 %v2622
        %2655 = vmatprep.subr.bf16.mxu0 0
        %2656 = vmatpush1.bf16.msra.mxu0 %v2623
        %2657 = vmatprep.subr.bf16.mxu0 0
        %2658 = vmatpush1.bf16.msra.mxu0 %v2624
        %2659 = vmatprep.subr.bf16.mxu0 0
        %2660 = vmatpush1.bf16.msra.mxu0 %v2625
        %2661 = vmatprep.subr.bf16.mxu0 0
        %2662 = vmatpush1.bf16.msra.mxu0 %v2626
        %2663 = vmatprep.subr.bf16.mxu0 0
        %2664 = vmatpush1.bf16.msra.mxu0 0
        %2665 = vmatprep.subr.bf16.mxu0 0
        %2666 = vmatpush1.bf16.msra.mxu0 0
        %2667 = vmatprep.subr.bf16.mxu0 0
        %2668 = vmatpush1.bf16.msra.mxu0 0
        %2669 = vmatprep.subr.bf16.mxu0 0
        %2670 = vmatpush1.bf16.msra.mxu0 0
        %2671 = vmatprep.subr.bf16.mxu0 0
        %2672 = vmatpush1.bf16.msra.mxu0 0
        %2673 = vmatprep.mubr.bf16.mxu0 %v2639
        %2674 = vmatmul.mubr.bf16.gmra.mrb[0].mxu0 %v2569
        %v2675 = vpop.f32.mrb[0].mxu0
        %v2676 = vadd.f32 %v2560, %v2675
        %v2677 = vpop.f32.mrb[0].mxu0
        %v2678 = vpop.f32.mrb[0].mxu0
        %v2679 = vpop.f32.mrb[0].mxu0
        %2680 = vdwg.mxu0
        %vm2681 = vcmp.ge.f32.partialorder %v2676, 0.0
        %v2682 = vmul.f32 %v2676, 0.01
        %v2683 = vsel %vm2681, %v2676, %v2682
        %v2684 = vpack.c.bf16 %v2683, %v2683
        %s2685 = scalar_lea.vmem %s219, 30 [#allocation7]
        %2686 = vst [vmem:[%s2685] sm:$0x3] %v2684
        %s2687 = sand.u32 %s113, 1
        %s2688 = scalar_lea.sflag [#allocation4], %s2687
        %s2689 = sand.u32 %s113, 1
        %s2690 = smul.addr %s2689, 32
        %s2691 = scalar_lea.vmem [#allocation7], %s2690
        // Predicated region
        $region41: #{tpu_custom_call.1} parent=31 // pred_check
          %p2692 = pneg %p123
        $region42: #{tpu_custom_call.1} parent=31 // pred_check_branch
          %2694 = sbr.rel (%p2692) target = $region44
        $region43: #{tpu_custom_call.1} parent=31 // pred_region
          %s2695 = smul.u32 16, %s26
          %s2697 = ssub.s32 512, 512
          %2698 = vsyncadd %s2688, %s2697
          %s2699 = smul.addr %s25, 16
          %s2700 = sadd.s32 %s2695, %s2699
          %s2701 = smul.addr %s2700, 32
          %s2702 = scalar_lea.hbm %s3, %s2701
          %s2703 = sshll.u32 %s2691, 4
          %s2704 = int_to_ptr.vmem [resolvable:$true] %s2703
          %2709 = dma.vmem_to_hbm [thread:$0]  %s2704, 512, %s2702, %s2688, 32, 32, 2
        $region44: #{tpu_custom_call.1} parent=31 // pred_fallthru
          _
      $region32: #{tpu_custom_call.1} parent=5 // pred_fallthru
        _
      %p2710 = scmp.le.s32.totalorder 2, %s16
      // Predicated region
      $region45: #{tpu_custom_call.1} parent=5 // pred_check
        %p2711 = pneg %p2710
      $region46: #{tpu_custom_call.1} parent=5 // pred_check_branch
        %2713 = sbr.rel (%p2711) target = $region48
      $region47: #{tpu_custom_call.1} parent=5 // pred_region
        %s2714 = ssub.s32 %s16, 2
        // Predicated region
        $region49: #{tpu_custom_call.1} parent=47 // pred_check
          %p2715 = pneg %p129
        $region50: #{tpu_custom_call.1} parent=47 // pred_check_branch
          %2717 = sbr.rel (%p2715) target = $region52
        $region51: #{tpu_custom_call.1} parent=47 // pred_region
          %s2718 = sand.u32 %s114, 1
          %s2719 = scalar_lea.sflag [#allocation4], %s2718
          %s2720 = sand.u32 %s114, 1
          %s2721 = smul.addr %s2720, 32
          %s2722 = scalar_lea.vmem [#allocation7], %s2721
          %2723 = dma.done %s2719, 512
        $region52: #{tpu_custom_call.1} parent=47 // pred_fallthru
          _
      $region48: #{tpu_custom_call.1} parent=5 // pred_fallthru
        _
    $region6: #{tpu_custom_call.1} parent=1 // loop_footer
      %s20 = sadd.s32 1, %s16
    $region7: #{tpu_custom_call.1} parent=1 // loop_footer_branch
      %15 = sbr.rel target = $region3
    $region8: #{tpu_custom_call.1} parent=1 // loop_exit
      _
    %2724 = vsyncpa [#allocation3], 1
    %s2725 = scalar_lea.sflag [#allocation3], 1
    %2726 = vsyncpa %s2725, 1
    %2727 = vsyncpa [#allocation6], 1
    %s2728 = scalar_lea.sflag [#allocation6], 1
    %2729 = vsyncpa %s2728, 1
    %2730 = vsyncpa [#allocation4], 1
    %s2731 = scalar_lea.sflag [#allocation4], 1
    %2732 = vsyncpa %s2731, 1

</llo_original>
